<compile_context>
chip_gen: v6e
topology: v6e:2x2x1
jax: 0.10.0
libtpu: 0.0.40
codegen_flags: <defaults>
</compile_context>

<pallas_src>
import numpy as np
import jax
import jax.numpy as jnp
from jax.experimental import pallas as pl
from jax.experimental.pallas import tpu as pltpu

# ----- shapes fixed by the module -------------------------------------------
B, T, E, H = 16, 7, 512, 64
C, IH, IW = 3, 8, 8                    # small per-frame image for the stand-in net
CHW = C * IH * IW
CLS_IN, CLS_HID, CLS_OUT = T * H + E, 200, 4     # 960, 200, 4
OUT_PAD = 128                          # lane-dense padded classifier output width


# ----- fused kernel: backbone + Conv1d + LSTM + classifier --------------------
def fused_kernel(x_ref, wnet_ref, bnet_ref,          # backbone
                 wconv_ref, bconv_ref,               # conv scalars (SMEM)
                 wih_ref, whh_ref, blstm_ref,        # LSTM
                 w1l_ref, w1c_ref, b1_ref,           # classifier layer 1 (split)
                 w2_ref, b2_ref,                     # classifier layer 2 (padded)
                 out_ref,
                 feats_sc, gx_sc):
    # --- backbone stand-in: (T*B, CHW) @ (CHW, E) + b_net, time-major rows ---
    # TODO(synk): real `self.net` backbone is unspecified (net=None in __init__);
    # a flatten + Linear(C*H*W -> 512) stand-in is used instead.
    feats_sc[...] = (
        jnp.dot(x_ref[...], wnet_ref[...], preferred_element_type=jnp.float32)
        + bnet_ref[...]
    )                                                           # (T*B, E)

    # --- hoisted LSTM input projection: one (T*B,E) @ (E,4H) matmul ----------
    gx_sc[...] = (
        jnp.dot(feats_sc[...], wih_ref[...], preferred_element_type=jnp.float32)
        + blstm_ref[...]
    )                                                           # (T*B, 4H)

    # --- Conv1d(in=7, out=1, k=1): scalar-weighted sum of (16,512) tiles -----
    conv = wconv_ref[0] * feats_sc[pl.ds(0, B), :]
    for t in range(1, T):
        conv = conv + wconv_ref[t] * feats_sc[pl.ds(t * B, B), :]
    conv = conv + bconv_ref[0]                                  # (B, E)

    # --- classifier hidden: conv contribution once, LSTM added in-loop -------
    hid = (jnp.dot(conv, w1c_ref[...], preferred_element_type=jnp.float32)
           + b1_ref[...])                                       # (B, 200)

    # --- LSTM recurrence (PyTorch gate order [i, f, g, o], h0 = c0 = 0) ------
    h = jnp.zeros((B, H), jnp.float32)
    c = jnp.zeros((B, H), jnp.float32)
    Whh = whh_ref[...]                                          # (H, 4H)
    for t in range(T):                                          # static unroll, T=7
        gates = gx_sc[pl.ds(t * B, B), :] + jnp.dot(
            h, Whh, preferred_element_type=jnp.float32)         # (B, 4H)
        sig = jax.nn.sigmoid(gates)        # full-width EUP transcendental
        th = jnp.tanh(gates)               # full-width EUP transcendental
        i_g = sig[:, 0 * H:1 * H]
        f_g = sig[:, 1 * H:2 * H]
        g_g = th[:, 2 * H:3 * H]
        o_g = sig[:, 3 * H:4 * H]
        c = f_g * c + i_g * g_g
        h = o_g * jnp.tanh(c)
        # in-loop classifier accumulation: h_t @ W1[t*H:(t+1)*H, :]
        hid = hid + jnp.dot(h, w1l_ref[t], preferred_element_type=jnp.float32)

    # --- classifier output, lane-dense (B, 128) padded store -----------------
    out_ref[...] = (
        jnp.dot(hid, w2_ref[...], preferred_element_type=jnp.float32) + b2_ref[...]
    )


def lstm_conv_forward(x, p):
    """x: (B, T, C, IH, IW) float32  ->  (B, 4) float32 logits."""
    # time-major flat slab so every per-timestep tile is contiguous & 8-aligned
    x_tb = jnp.transpose(x, (1, 0, 2, 3, 4)).reshape(T * B, CHW)

    # one-time wrapper-side parameter plumbing (pure layout, no math)
    w1_lstm = p["w1_t"][: T * H, :].reshape(T, H, CLS_HID)          # (7, 64, 200)
    w1_conv = p["w1_t"][T * H:, :]                                  # (512, 200)
    w2_pad = jnp.zeros((CLS_HID, OUT_PAD), jnp.float32).at[:, :CLS_OUT].set(p["w2_t"])
    b2_pad = jnp.zeros((1, OUT_PAD), jnp.float32).at[:, :CLS_OUT].set(p["b2"])

    vmem = pl.BlockSpec(memory_space=pltpu.MemorySpace.VMEM)
    smem = pl.BlockSpec(memory_space=pltpu.MemorySpace.SMEM)

    out_pad = pl.pallas_call(
        fused_kernel,
        out_shape=jax.ShapeDtypeStruct((B, OUT_PAD), jnp.float32),
        in_specs=[vmem, vmem, vmem,        # x_tb, w_net, b_net
                  smem, smem,              # w_conv (7,), b_conv (1,)
                  vmem, vmem, vmem,        # w_ih_t, w_hh_t, b_lstm
                  vmem, vmem, vmem,        # w1_lstm, w1_conv, b1
                  vmem, vmem],             # w2_pad, b2_pad
        out_specs=vmem,
        scratch_shapes=[pltpu.VMEM((T * B, E), jnp.float32),        # feats
                        pltpu.VMEM((T * B, 4 * H), jnp.float32)],   # gates_x
    )(x_tb, p["w_net"], p["b_net"], p["w_conv"], p["b_conv"],
      p["w_ih_t"], p["w_hh_t"], p["b_lstm"],
      w1_lstm, w1_conv, p["b1"], w2_pad, b2_pad)

    return out_pad[:, :CLS_OUT]


# ----- pure-JAX reference (for correctness check) -----------------------------
def reference(x, p):
    hi = jax.lax.Precision.HIGHEST
    feats = jnp.dot(x.reshape(B * T, CHW), p["w_net"], precision=hi) + p["b_net"]
    F = feats.reshape(B, T, E)
    conv = jnp.sum(F * p["w_conv"][None, :, None], axis=1) + p["b_conv"][0]
    h = jnp.zeros((B, H), jnp.float32)
    c = jnp.zeros((B, H), jnp.float32)
    outs = []
    for t in range(T):
        g = (jnp.dot(F[:, t, :], p["w_ih_t"], precision=hi)
             + jnp.dot(h, p["w_hh_t"], precision=hi) + p["b_lstm"])
        i_g = jax.nn.sigmoid(g[:, :H]); f_g = jax.nn.sigmoid(g[:, H:2 * H])
        g_g = jnp.tanh(g[:, 2 * H:3 * H]); o_g = jax.nn.sigmoid(g[:, 3 * H:])
        c = f_g * c + i_g * g_g
        h = o_g * jnp.tanh(c)
        outs.append(h)
    cls_in = jnp.concatenate(outs + [conv], axis=1)
    hid = jnp.dot(cls_in, p["w1_t"], precision=hi) + p["b1"]
    return jnp.dot(hid, p["w2_t"], precision=hi) + p["b2"]


# ----- deterministic parameter init -------------------------------------------
def make_params(key):
    ks = jax.random.split(key, 11)
    def n(k, shape, scale):
        return (jax.random.normal(k, shape, jnp.float32) * scale).astype(jnp.float32)
    return {
        "w_net":  n(ks[0], (CHW, E), 1.0 / np.sqrt(CHW)),
        "b_net":  n(ks[1], (1, E), 0.01),
        "w_conv": n(ks[2], (T,), 1.0 / np.sqrt(T)),          # Conv1d(7->1,k=1) weights
        "b_conv": n(ks[3], (1,), 0.01),
        "w_ih_t": n(ks[4], (E, 4 * H), 1.0 / np.sqrt(H)),
        "w_hh_t": n(ks[5], (H, 4 * H), 1.0 / np.sqrt(H)),
        "b_lstm": n(ks[6], (1, 4 * H), 0.01),                # b_ih + b_hh folded
        "w1_t":   n(ks[7], (CLS_IN, CLS_HID), 1.0 / np.sqrt(CLS_IN)),
        "b1":     n(ks[8], (1, CLS_HID), 0.01),
        "w2_t":   n(ks[9], (CLS_HID, CLS_OUT), 1.0 / np.sqrt(CLS_HID)),
        "b2":     n(ks[10], (1, CLS_OUT), 0.01),
    }


if __name__ == "__main__":
    key = jax.random.PRNGKey(0)
    k_x, k_p = jax.random.split(key)
    x = jax.random.normal(k_x, (B, T, C, IH, IW), jnp.float32)   # (16,7,3,8,8)
    p = make_params(k_p)

    out = jax.block_until_ready(lstm_conv_forward(x, p))         # single fused kernel
    assert out.shape == (B, CLS_OUT)

    ref = jax.block_until_ready(reference(x, p))
    np.testing.assert_allclose(np.asarray(out), np.asarray(ref), rtol=2e-3, atol=2e-3)
    print("KERNEL_OK")
</pallas_src>

<mosaic_0001>
module attributes {stable_mosaic.version = 11 : i64} {
  func.func @fused_kernel(%arg0: memref<112x192xf32, #tpu.memory_space<vmem>>, %arg1: memref<192x512xf32, #tpu.memory_space<vmem>>, %arg2: memref<1x512xf32, #tpu.memory_space<vmem>>, %arg3: memref<7xf32, #tpu.memory_space<smem>>, %arg4: memref<1xf32, #tpu.memory_space<smem>>, %arg5: memref<512x256xf32, #tpu.memory_space<vmem>>, %arg6: memref<64x256xf32, #tpu.memory_space<vmem>>, %arg7: memref<1x256xf32, #tpu.memory_space<vmem>>, %arg8: memref<7x64x200xf32, #tpu.memory_space<vmem>>, %arg9: memref<512x200xf32, #tpu.memory_space<vmem>>, %arg10: memref<1x200xf32, #tpu.memory_space<vmem>>, %arg11: memref<200x128xf32, #tpu.memory_space<vmem>>, %arg12: memref<1x128xf32, #tpu.memory_space<vmem>>, %arg13: memref<16x128xf32, #tpu.memory_space<vmem>>, %arg14: memref<112x512xf32, #tpu.memory_space<vmem>>, %arg15: memref<112x256xf32, #tpu.memory_space<vmem>>) attributes {dimension_semantics = [], scalar_prefetch = 0 : i64, scratch_operands = 2 : i64, tpu.core_type = #tpu.core_type<tc>} {
    %c0 = arith.constant 0 : index
    %c0_0 = arith.constant 0 : index
    %0 = vector.load %arg0[%c0, %c0_0] : memref<112x192xf32, #tpu.memory_space<vmem>>, vector<112x192xf32>
    %c0_1 = arith.constant 0 : index
    %c0_2 = arith.constant 0 : index
    %1 = vector.load %arg1[%c0_1, %c0_2] : memref<192x512xf32, #tpu.memory_space<vmem>>, vector<192x512xf32>
    %cst = arith.constant dense<0.000000e+00> : vector<112x512xf32>
    %2 = tpu.matmul %0, %1, %cst {dimension_numbers = #tpu.dot_dimension_numbers<[1], [0], [0], [1], [0, 0, 1, 1], [], []>} : vector<112x192xf32>, vector<192x512xf32>, vector<112x512xf32> -> vector<112x512xf32>
    %c0_3 = arith.constant 0 : index
    %c0_4 = arith.constant 0 : index
    %3 = vector.load %arg2[%c0_3, %c0_4] : memref<1x512xf32, #tpu.memory_space<vmem>>, vector<1x512xf32>
    %4 = vector.broadcast %3 : vector<1x512xf32> to vector<112x512xf32>
    %5 = arith.addf %2, %4 : vector<112x512xf32>
    %c0_5 = arith.constant 0 : index
    %c0_6 = arith.constant 0 : index
    %6 = vector.load %arg14[%c0_5, %c0_6] : memref<112x512xf32, #tpu.memory_space<vmem>>, vector<112x512xf32>
    tpu.vector_store %arg14[%c0_5, %c0_6], %5 {strides = array<i32>} : memref<112x512xf32, #tpu.memory_space<vmem>>, vector<112x512xf32>,
    %c0_7 = arith.constant 0 : index
    %c0_8 = arith.constant 0 : index
    %7 = vector.load %arg14[%c0_7, %c0_8] : memref<112x512xf32, #tpu.memory_space<vmem>>, vector<112x512xf32>
    %c0_9 = arith.constant 0 : index
    %c0_10 = arith.constant 0 : index
    %8 = vector.load %arg5[%c0_9, %c0_10] : memref<512x256xf32, #tpu.memory_space<vmem>>, vector<512x256xf32>
    %cst_11 = arith.constant dense<0.000000e+00> : vector<112x256xf32>
    %9 = tpu.matmul %7, %8, %cst_11 {dimension_numbers = #tpu.dot_dimension_numbers<[1], [0], [0], [1], [0, 0, 1, 1], [], []>} : vector<112x512xf32>, vector<512x256xf32>, vector<112x256xf32> -> vector<112x256xf32>
    %c0_12 = arith.constant 0 : index
    %c0_13 = arith.constant 0 : index
    %10 = vector.load %arg7[%c0_12, %c0_13] : memref<1x256xf32, #tpu.memory_space<vmem>>, vector<1x256xf32>
    %11 = vector.broadcast %10 : vector<1x256xf32> to vector<112x256xf32>
    %12 = arith.addf %9, %11 : vector<112x256xf32>
    %c0_14 = arith.constant 0 : index
    %c0_15 = arith.constant 0 : index
    %13 = vector.load %arg15[%c0_14, %c0_15] : memref<112x256xf32, #tpu.memory_space<vmem>>, vector<112x256xf32>
    tpu.vector_store %arg15[%c0_14, %c0_15], %12 {strides = array<i32>} : memref<112x256xf32, #tpu.memory_space<vmem>>, vector<112x256xf32>,
    %c0_16 = arith.constant 0 : index
    %14 = memref.load %arg3[%c0_16] : memref<7xf32, #tpu.memory_space<smem>>
    %c0_17 = arith.constant 0 : index
    %c0_18 = arith.constant 0 : index
    %15 = vector.load %arg14[%c0_17, %c0_18] : memref<112x512xf32, #tpu.memory_space<vmem>>, vector<16x512xf32>
    %16 = vector.broadcast %14 : f32 to vector<16x512xf32>
    %17 = arith.mulf %16, %15 : vector<16x512xf32>
    %c1 = arith.constant 1 : index
    %18 = memref.load %arg3[%c1] : memref<7xf32, #tpu.memory_space<smem>>
    %c16 = arith.constant 16 : index
    %c0_19 = arith.constant 0 : index
    %19 = vector.load %arg14[%c16, %c0_19] : memref<112x512xf32, #tpu.memory_space<vmem>>, vector<16x512xf32>
    %20 = vector.broadcast %18 : f32 to vector<16x512xf32>
    %21 = arith.mulf %20, %19 : vector<16x512xf32>
    %22 = arith.addf %17, %21 : vector<16x512xf32>
    %c2 = arith.constant 2 : index
    %23 = memref.load %arg3[%c2] : memref<7xf32, #tpu.memory_space<smem>>
    %c32 = arith.constant 32 : index
    %c0_20 = arith.constant 0 : index
    %24 = vector.load %arg14[%c32, %c0_20] : memref<112x512xf32, #tpu.memory_space<vmem>>, vector<16x512xf32>
    %25 = vector.broadcast %23 : f32 to vector<16x512xf32>
    %26 = arith.mulf %25, %24 : vector<16x512xf32>
    %27 = arith.addf %22, %26 : vector<16x512xf32>
    %c3 = arith.constant 3 : index
    %28 = memref.load %arg3[%c3] : memref<7xf32, #tpu.memory_space<smem>>
    %c48 = arith.constant 48 : index
    %c0_21 = arith.constant 0 : index
    %29 = vector.load %arg14[%c48, %c0_21] : memref<112x512xf32, #tpu.memory_space<vmem>>, vector<16x512xf32>
    %30 = vector.broadcast %28 : f32 to vector<16x512xf32>
    %31 = arith.mulf %30, %29 : vector<16x512xf32>
    %32 = arith.addf %27, %31 : vector<16x512xf32>
    %c4 = arith.constant 4 : index
    %33 = memref.load %arg3[%c4] : memref<7xf32, #tpu.memory_space<smem>>
    %c64 = arith.constant 64 : index
    %c0_22 = arith.constant 0 : index
    %34 = vector.load %arg14[%c64, %c0_22] : memref<112x512xf32, #tpu.memory_space<vmem>>, vector<16x512xf32>
    %35 = vector.broadcast %33 : f32 to vector<16x512xf32>
    %36 = arith.mulf %35, %34 : vector<16x512xf32>
    %37 = arith.addf %32, %36 : vector<16x512xf32>
    %c5 = arith.constant 5 : index
    %38 = memref.load %arg3[%c5] : memref<7xf32, #tpu.memory_space<smem>>
    %c80 = arith.constant 80 : index
    %c0_23 = arith.constant 0 : index
    %39 = vector.load %arg14[%c80, %c0_23] : memref<112x512xf32, #tpu.memory_space<vmem>>, vector<16x512xf32>
    %40 = vector.broadcast %38 : f32 to vector<16x512xf32>
    %41 = arith.mulf %40, %39 : vector<16x512xf32>
    %42 = arith.addf %37, %41 : vector<16x512xf32>
    %c6 = arith.constant 6 : index
    %43 = memref.load %arg3[%c6] : memref<7xf32, #tpu.memory_space<smem>>
    %c96 = arith.constant 96 : index
    %c0_24 = arith.constant 0 : index
    %44 = vector.load %arg14[%c96, %c0_24] : memref<112x512xf32, #tpu.memory_space<vmem>>, vector<16x512xf32>
    %45 = vector.broadcast %43 : f32 to vector<16x512xf32>
    %46 = arith.mulf %45, %44 : vector<16x512xf32>
    %47 = arith.addf %42, %46 : vector<16x512xf32>
    %c0_25 = arith.constant 0 : index
    %48 = memref.load %arg4[%c0_25] : memref<1xf32, #tpu.memory_space<smem>>
    %49 = vector.broadcast %48 : f32 to vector<16x512xf32>
    %50 = arith.addf %47, %49 : vector<16x512xf32>
    %c0_26 = arith.constant 0 : index
    %c0_27 = arith.constant 0 : index
    %51 = vector.load %arg9[%c0_26, %c0_27] : memref<512x200xf32, #tpu.memory_space<vmem>>, vector<512x200xf32>
    %cst_28 = arith.constant dense<0.000000e+00> : vector<16x200xf32>
    %52 = tpu.matmul %50, %51, %cst_28 {dimension_numbers = #tpu.dot_dimension_numbers<[1], [0], [0], [1], [0, 0, 1, 1], [], []>} : vector<16x512xf32>, vector<512x200xf32>, vector<16x200xf32> -> vector<16x200xf32>
    %c0_29 = arith.constant 0 : index
    %c0_30 = arith.constant 0 : index
    %53 = vector.load %arg10[%c0_29, %c0_30] : memref<1x200xf32, #tpu.memory_space<vmem>>, vector<1x200xf32>
    %54 = vector.broadcast %53 : vector<1x200xf32> to vector<16x200xf32>
    %55 = arith.addf %52, %54 : vector<16x200xf32>
    %cst_31 = arith.constant 0.000000e+00 : f32
    %56 = vector.broadcast %cst_31 : f32 to vector<16x64xf32>
    %cst_32 = arith.constant 0.000000e+00 : f32
    %57 = vector.broadcast %cst_32 : f32 to vector<16x64xf32>
    %c0_33 = arith.constant 0 : index
    %c0_34 = arith.constant 0 : index
    %58 = vector.load %arg6[%c0_33, %c0_34] : memref<64x256xf32, #tpu.memory_space<vmem>>, vector<64x256xf32>
    %c0_35 = arith.constant 0 : index
    %c0_36 = arith.constant 0 : index
    %59 = vector.load %arg15[%c0_35, %c0_36] : memref<112x256xf32, #tpu.memory_space<vmem>>, vector<16x256xf32>
    %cst_37 = arith.constant dense<0.000000e+00> : vector<16x256xf32>
    %60 = tpu.matmul %56, %58, %cst_37 {dimension_numbers = #tpu.dot_dimension_numbers<[1], [0], [0], [1], [0, 0, 1, 1], [], []>} : vector<16x64xf32>, vector<64x256xf32>, vector<16x256xf32> -> vector<16x256xf32>
    %61 = arith.addf %59, %60 : vector<16x256xf32>
    %62 = arith.negf %61 : vector<16x256xf32>
    %63 = math.exp %62 : vector<16x256xf32>
    %cst_38 = arith.constant 1.000000e+00 : f32
    %64 = vector.broadcast %cst_38 : f32 to vector<16x256xf32>
    %65 = arith.addf %64, %63 : vector<16x256xf32>
    %66 = arith.divf %64, %65 : vector<16x256xf32>
    %67 = math.tanh %61 : vector<16x256xf32>
    %68 = vector.extract_strided_slice %66 {offsets = [0, 0], sizes = [16, 64], strides = [1, 1]} : vector<16x256xf32> to vector<16x64xf32>
    %69 = vector.extract_strided_slice %66 {offsets = [0, 64], sizes = [16, 64], strides = [1, 1]} : vector<16x256xf32> to vector<16x64xf32>
    %70 = vector.extract_strided_slice %67 {offsets = [0, 128], sizes = [16, 64], strides = [1, 1]} : vector<16x256xf32> to vector<16x64xf32>
    %71 = vector.extract_strided_slice %66 {offsets = [0, 192], sizes = [16, 64], strides = [1, 1]} : vector<16x256xf32> to vector<16x64xf32>
    %72 = arith.mulf %69, %57 : vector<16x64xf32>
    %73 = arith.mulf %68, %70 : vector<16x64xf32>
    %74 = arith.addf %72, %73 : vector<16x64xf32>
    %75 = math.tanh %74 : vector<16x64xf32>
    %76 = arith.mulf %71, %75 : vector<16x64xf32>
    %c0_39 = arith.constant 0 : index
    %c0_40 = arith.constant 0 : index
    %c0_41 = arith.constant 0 : index
    %77 = vector.load %arg8[%c0_39, %c0_40, %c0_41] : memref<7x64x200xf32, #tpu.memory_space<vmem>>, vector<1x64x200xf32>
    %78 = vector.shape_cast %77 : vector<1x64x200xf32> to vector<64x200xf32>
    %cst_42 = arith.constant dense<0.000000e+00> : vector<16x200xf32>
    %79 = tpu.matmul %76, %78, %cst_42 {dimension_numbers = #tpu.dot_dimension_numbers<[1], [0], [0], [1], [0, 0, 1, 1], [], []>} : vector<16x64xf32>, vector<64x200xf32>, vector<16x200xf32> -> vector<16x200xf32>
    %80 = arith.addf %55, %79 : vector<16x200xf32>
    %c16_43 = arith.constant 16 : index
    %c0_44 = arith.constant 0 : index
    %81 = vector.load %arg15[%c16_43, %c0_44] : memref<112x256xf32, #tpu.memory_space<vmem>>, vector<16x256xf32>
    %cst_45 = arith.constant dense<0.000000e+00> : vector<16x256xf32>
    %82 = tpu.matmul %76, %58, %cst_45 {dimension_numbers = #tpu.dot_dimension_numbers<[1], [0], [0], [1], [0, 0, 1, 1], [], []>} : vector<16x64xf32>, vector<64x256xf32>, vector<16x256xf32> -> vector<16x256xf32>
    %83 = arith.addf %81, %82 : vector<16x256xf32>
    %84 = arith.negf %83 : vector<16x256xf32>
    %85 = math.exp %84 : vector<16x256xf32>
    %cst_46 = arith.constant 1.000000e+00 : f32
    %86 = vector.broadcast %cst_46 : f32 to vector<16x256xf32>
    %87 = arith.addf %86, %85 : vector<16x256xf32>
    %88 = arith.divf %86, %87 : vector<16x256xf32>
    %89 = math.tanh %83 : vector<16x256xf32>
    %90 = vector.extract_strided_slice %88 {offsets = [0, 0], sizes = [16, 64], strides = [1, 1]} : vector<16x256xf32> to vector<16x64xf32>
    %91 = vector.extract_strided_slice %88 {offsets = [0, 64], sizes = [16, 64], strides = [1, 1]} : vector<16x256xf32> to vector<16x64xf32>
    %92 = vector.extract_strided_slice %89 {offsets = [0, 128], sizes = [16, 64], strides = [1, 1]} : vector<16x256xf32> to vector<16x64xf32>
    %93 = vector.extract_strided_slice %88 {offsets = [0, 192], sizes = [16, 64], strides = [1, 1]} : vector<16x256xf32> to vector<16x64xf32>
    %94 = arith.mulf %91, %74 : vector<16x64xf32>
    %95 = arith.mulf %90, %92 : vector<16x64xf32>
    %96 = arith.addf %94, %95 : vector<16x64xf32>
    %97 = math.tanh %96 : vector<16x64xf32>
    %98 = arith.mulf %93, %97 : vector<16x64xf32>
    %c1_47 = arith.constant 1 : index
    %c0_48 = arith.constant 0 : index
    %c0_49 = arith.constant 0 : index
    %99 = vector.load %arg8[%c1_47, %c0_48, %c0_49] : memref<7x64x200xf32, #tpu.memory_space<vmem>>, vector<1x64x200xf32>
    %100 = vector.shape_cast %99 : vector<1x64x200xf32> to vector<64x200xf32>
    %cst_50 = arith.constant dense<0.000000e+00> : vector<16x200xf32>
    %101 = tpu.matmul %98, %100, %cst_50 {dimension_numbers = #tpu.dot_dimension_numbers<[1], [0], [0], [1], [0, 0, 1, 1], [], []>} : vector<16x64xf32>, vector<64x200xf32>, vector<16x200xf32> -> vector<16x200xf32>
    %102 = arith.addf %80, %101 : vector<16x200xf32>
    %c32_51 = arith.constant 32 : index
    %c0_52 = arith.constant 0 : index
    %103 = vector.load %arg15[%c32_51, %c0_52] : memref<112x256xf32, #tpu.memory_space<vmem>>, vector<16x256xf32>
    %cst_53 = arith.constant dense<0.000000e+00> : vector<16x256xf32>
    %104 = tpu.matmul %98, %58, %cst_53 {dimension_numbers = #tpu.dot_dimension_numbers<[1], [0], [0], [1], [0, 0, 1, 1], [], []>} : vector<16x64xf32>, vector<64x256xf32>, vector<16x256xf32> -> vector<16x256xf32>
    %105 = arith.addf %103, %104 : vector<16x256xf32>
    %106 = arith.negf %105 : vector<16x256xf32>
    %107 = math.exp %106 : vector<16x256xf32>
    %cst_54 = arith.constant 1.000000e+00 : f32
    %108 = vector.broadcast %cst_54 : f32 to vector<16x256xf32>
    %109 = arith.addf %108, %107 : vector<16x256xf32>
    %110 = arith.divf %108, %109 : vector<16x256xf32>
    %111 = math.tanh %105 : vector<16x256xf32>
    %112 = vector.extract_strided_slice %110 {offsets = [0, 0], sizes = [16, 64], strides = [1, 1]} : vector<16x256xf32> to vector<16x64xf32>
    %113 = vector.extract_strided_slice %110 {offsets = [0, 64], sizes = [16, 64], strides = [1, 1]} : vector<16x256xf32> to vector<16x64xf32>
    %114 = vector.extract_strided_slice %111 {offsets = [0, 128], sizes = [16, 64], strides = [1, 1]} : vector<16x256xf32> to vector<16x64xf32>
    %115 = vector.extract_strided_slice %110 {offsets = [0, 192], sizes = [16, 64], strides = [1, 1]} : vector<16x256xf32> to vector<16x64xf32>
    %116 = arith.mulf %113, %96 : vector<16x64xf32>
    %117 = arith.mulf %112, %114 : vector<16x64xf32>
    %118 = arith.addf %116, %117 : vector<16x64xf32>
    %119 = math.tanh %118 : vector<16x64xf32>
    %120 = arith.mulf %115, %119 : vector<16x64xf32>
    %c2_55 = arith.constant 2 : index
    %c0_56 = arith.constant 0 : index
    %c0_57 = arith.constant 0 : index
    %121 = vector.load %arg8[%c2_55, %c0_56, %c0_57] : memref<7x64x200xf32, #tpu.memory_space<vmem>>, vector<1x64x200xf32>
    %122 = vector.shape_cast %121 : vector<1x64x200xf32> to vector<64x200xf32>
    %cst_58 = arith.constant dense<0.000000e+00> : vector<16x200xf32>
    %123 = tpu.matmul %120, %122, %cst_58 {dimension_numbers = #tpu.dot_dimension_numbers<[1], [0], [0], [1], [0, 0, 1, 1], [], []>} : vector<16x64xf32>, vector<64x200xf32>, vector<16x200xf32> -> vector<16x200xf32>
    %124 = arith.addf %102, %123 : vector<16x200xf32>
    %c48_59 = arith.constant 48 : index
    %c0_60 = arith.constant 0 : index
    %125 = vector.load %arg15[%c48_59, %c0_60] : memref<112x256xf32, #tpu.memory_space<vmem>>, vector<16x256xf32>
    %cst_61 = arith.constant dense<0.000000e+00> : vector<16x256xf32>
    %126 = tpu.matmul %120, %58, %cst_61 {dimension_numbers = #tpu.dot_dimension_numbers<[1], [0], [0], [1], [0, 0, 1, 1], [], []>} : vector<16x64xf32>, vector<64x256xf32>, vector<16x256xf32> -> vector<16x256xf32>
    %127 = arith.addf %125, %126 : vector<16x256xf32>
    %128 = arith.negf %127 : vector<16x256xf32>
    %129 = math.exp %128 : vector<16x256xf32>
    %cst_62 = arith.constant 1.000000e+00 : f32
    %130 = vector.broadcast %cst_62 : f32 to vector<16x256xf32>
    %131 = arith.addf %130, %129 : vector<16x256xf32>
    %132 = arith.divf %130, %131 : vector<16x256xf32>
    %133 = math.tanh %127 : vector<16x256xf32>
    %134 = vector.extract_strided_slice %132 {offsets = [0, 0], sizes = [16, 64], strides = [1, 1]} : vector<16x256xf32> to vector<16x64xf32>
    %135 = vector.extract_strided_slice %132 {offsets = [0, 64], sizes = [16, 64], strides = [1, 1]} : vector<16x256xf32> to vector<16x64xf32>
    %136 = vector.extract_strided_slice %133 {offsets = [0, 128], sizes = [16, 64], strides = [1, 1]} : vector<16x256xf32> to vector<16x64xf32>
    %137 = vector.extract_strided_slice %132 {offsets = [0, 192], sizes = [16, 64], strides = [1, 1]} : vector<16x256xf32> to vector<16x64xf32>
    %138 = arith.mulf %135, %118 : vector<16x64xf32>
    %139 = arith.mulf %134, %136 : vector<16x64xf32>
    %140 = arith.addf %138, %139 : vector<16x64xf32>
    %141 = math.tanh %140 : vector<16x64xf32>
    %142 = arith.mulf %137, %141 : vector<16x64xf32>
    %c3_63 = arith.constant 3 : index
    %c0_64 = arith.constant 0 : index
    %c0_65 = arith.constant 0 : index
    %143 = vector.load %arg8[%c3_63, %c0_64, %c0_65] : memref<7x64x200xf32, #tpu.memory_space<vmem>>, vector<1x64x200xf32>
    %144 = vector.shape_cast %143 : vector<1x64x200xf32> to vector<64x200xf32>
    %cst_66 = arith.constant dense<0.000000e+00> : vector<16x200xf32>
    %145 = tpu.matmul %142, %144, %cst_66 {dimension_numbers = #tpu.dot_dimension_numbers<[1], [0], [0], [1], [0, 0, 1, 1], [], []>} : vector<16x64xf32>, vector<64x200xf32>, vector<16x200xf32> -> vector<16x200xf32>
    %146 = arith.addf %124, %145 : vector<16x200xf32>
    %c64_67 = arith.constant 64 : index
    %c0_68 = arith.constant 0 : index
    %147 = vector.load %arg15[%c64_67, %c0_68] : memref<112x256xf32, #tpu.memory_space<vmem>>, vector<16x256xf32>
    %cst_69 = arith.constant dense<0.000000e+00> : vector<16x256xf32>
    %148 = tpu.matmul %142, %58, %cst_69 {dimension_numbers = #tpu.dot_dimension_numbers<[1], [0], [0], [1], [0, 0, 1, 1], [], []>} : vector<16x64xf32>, vector<64x256xf32>, vector<16x256xf32> -> vector<16x256xf32>
    %149 = arith.addf %147, %148 : vector<16x256xf32>
    %150 = arith.negf %149 : vector<16x256xf32>
    %151 = math.exp %150 : vector<16x256xf32>
    %cst_70 = arith.constant 1.000000e+00 : f32
    %152 = vector.broadcast %cst_70 : f32 to vector<16x256xf32>
    %153 = arith.addf %152, %151 : vector<16x256xf32>
    %154 = arith.divf %152, %153 : vector<16x256xf32>
    %155 = math.tanh %149 : vector<16x256xf32>
    %156 = vector.extract_strided_slice %154 {offsets = [0, 0], sizes = [16, 64], strides = [1, 1]} : vector<16x256xf32> to vector<16x64xf32>
    %157 = vector.extract_strided_slice %154 {offsets = [0, 64], sizes = [16, 64], strides = [1, 1]} : vector<16x256xf32> to vector<16x64xf32>
    %158 = vector.extract_strided_slice %155 {offsets = [0, 128], sizes = [16, 64], strides = [1, 1]} : vector<16x256xf32> to vector<16x64xf32>
    %159 = vector.extract_strided_slice %154 {offsets = [0, 192], sizes = [16, 64], strides = [1, 1]} : vector<16x256xf32> to vector<16x64xf32>
    %160 = arith.mulf %157, %140 : vector<16x64xf32>
    %161 = arith.mulf %156, %158 : vector<16x64xf32>
    %162 = arith.addf %160, %161 : vector<16x64xf32>
    %163 = math.tanh %162 : vector<16x64xf32>
    %164 = arith.mulf %159, %163 : vector<16x64xf32>
    %c4_71 = arith.constant 4 : index
    %c0_72 = arith.constant 0 : index
    %c0_73 = arith.constant 0 : index
    %165 = vector.load %arg8[%c4_71, %c0_72, %c0_73] : memref<7x64x200xf32, #tpu.memory_space<vmem>>, vector<1x64x200xf32>
    %166 = vector.shape_cast %165 : vector<1x64x200xf32> to vector<64x200xf32>
    %cst_74 = arith.constant dense<0.000000e+00> : vector<16x200xf32>
    %167 = tpu.matmul %164, %166, %cst_74 {dimension_numbers = #tpu.dot_dimension_numbers<[1], [0], [0], [1], [0, 0, 1, 1], [], []>} : vector<16x64xf32>, vector<64x200xf32>, vector<16x200xf32> -> vector<16x200xf32>
    %168 = arith.addf %146, %167 : vector<16x200xf32>
    %c80_75 = arith.constant 80 : index
    %c0_76 = arith.constant 0 : index
    %169 = vector.load %arg15[%c80_75, %c0_76] : memref<112x256xf32, #tpu.memory_space<vmem>>, vector<16x256xf32>
    %cst_77 = arith.constant dense<0.000000e+00> : vector<16x256xf32>
    %170 = tpu.matmul %164, %58, %cst_77 {dimension_numbers = #tpu.dot_dimension_numbers<[1], [0], [0], [1], [0, 0, 1, 1], [], []>} : vector<16x64xf32>, vector<64x256xf32>, vector<16x256xf32> -> vector<16x256xf32>
    %171 = arith.addf %169, %170 : vector<16x256xf32>
    %172 = arith.negf %171 : vector<16x256xf32>
    %173 = math.exp %172 : vector<16x256xf32>
    %cst_78 = arith.constant 1.000000e+00 : f32
    %174 = vector.broadcast %cst_78 : f32 to vector<16x256xf32>
    %175 = arith.addf %174, %173 : vector<16x256xf32>
    %176 = arith.divf %174, %175 : vector<16x256xf32>
    %177 = math.tanh %171 : vector<16x256xf32>
    %178 = vector.extract_strided_slice %176 {offsets = [0, 0], sizes = [16, 64], strides = [1, 1]} : vector<16x256xf32> to vector<16x64xf32>
    %179 = vector.extract_strided_slice %176 {offsets = [0, 64], sizes = [16, 64], strides = [1, 1]} : vector<16x256xf32> to vector<16x64xf32>
    %180 = vector.extract_strided_slice %177 {offsets = [0, 128], sizes = [16, 64], strides = [1, 1]} : vector<16x256xf32> to vector<16x64xf32>
    %181 = vector.extract_strided_slice %176 {offsets = [0, 192], sizes = [16, 64], strides = [1, 1]} : vector<16x256xf32> to vector<16x64xf32>
    %182 = arith.mulf %179, %162 : vector<16x64xf32>
    %183 = arith.mulf %178, %180 : vector<16x64xf32>
    %184 = arith.addf %182, %183 : vector<16x64xf32>
    %185 = math.tanh %184 : vector<16x64xf32>
    %186 = arith.mulf %181, %185 : vector<16x64xf32>
    %c5_79 = arith.constant 5 : index
    %c0_80 = arith.constant 0 : index
    %c0_81 = arith.constant 0 : index
    %187 = vector.load %arg8[%c5_79, %c0_80, %c0_81] : memref<7x64x200xf32, #tpu.memory_space<vmem>>, vector<1x64x200xf32>
    %188 = vector.shape_cast %187 : vector<1x64x200xf32> to vector<64x200xf32>
    %cst_82 = arith.constant dense<0.000000e+00> : vector<16x200xf32>
    %189 = tpu.matmul %186, %188, %cst_82 {dimension_numbers = #tpu.dot_dimension_numbers<[1], [0], [0], [1], [0, 0, 1, 1], [], []>} : vector<16x64xf32>, vector<64x200xf32>, vector<16x200xf32> -> vector<16x200xf32>
    %190 = arith.addf %168, %189 : vector<16x200xf32>
    %c96_83 = arith.constant 96 : index
    %c0_84 = arith.constant 0 : index
    %191 = vector.load %arg15[%c96_83, %c0_84] : memref<112x256xf32, #tpu.memory_space<vmem>>, vector<16x256xf32>
    %cst_85 = arith.constant dense<0.000000e+00> : vector<16x256xf32>
    %192 = tpu.matmul %186, %58, %cst_85 {dimension_numbers = #tpu.dot_dimension_numbers<[1], [0], [0], [1], [0, 0, 1, 1], [], []>} : vector<16x64xf32>, vector<64x256xf32>, vector<16x256xf32> -> vector<16x256xf32>
    %193 = arith.addf %191, %192 : vector<16x256xf32>
    %194 = arith.negf %193 : vector<16x256xf32>
    %195 = math.exp %194 : vector<16x256xf32>
    %cst_86 = arith.constant 1.000000e+00 : f32
    %196 = vector.broadcast %cst_86 : f32 to vector<16x256xf32>
    %197 = arith.addf %196, %195 : vector<16x256xf32>
    %198 = arith.divf %196, %197 : vector<16x256xf32>
    %199 = math.tanh %193 : vector<16x256xf32>
    %200 = vector.extract_strided_slice %198 {offsets = [0, 0], sizes = [16, 64], strides = [1, 1]} : vector<16x256xf32> to vector<16x64xf32>
    %201 = vector.extract_strided_slice %198 {offsets = [0, 64], sizes = [16, 64], strides = [1, 1]} : vector<16x256xf32> to vector<16x64xf32>
    %202 = vector.extract_strided_slice %199 {offsets = [0, 128], sizes = [16, 64], strides = [1, 1]} : vector<16x256xf32> to vector<16x64xf32>
    %203 = vector.extract_strided_slice %198 {offsets = [0, 192], sizes = [16, 64], strides = [1, 1]} : vector<16x256xf32> to vector<16x64xf32>
    %204 = arith.mulf %201, %184 : vector<16x64xf32>
    %205 = arith.mulf %200, %202 : vector<16x64xf32>
    %206 = arith.addf %204, %205 : vector<16x64xf32>
    %207 = math.tanh %206 : vector<16x64xf32>
    %208 = arith.mulf %203, %207 : vector<16x64xf32>
    %c6_87 = arith.constant 6 : index
    %c0_88 = arith.constant 0 : index
    %c0_89 = arith.constant 0 : index
    %209 = vector.load %arg8[%c6_87, %c0_88, %c0_89] : memref<7x64x200xf32, #tpu.memory_space<vmem>>, vector<1x64x200xf32>
    %210 = vector.shape_cast %209 : vector<1x64x200xf32> to vector<64x200xf32>
    %cst_90 = arith.constant dense<0.000000e+00> : vector<16x200xf32>
    %211 = tpu.matmul %208, %210, %cst_90 {dimension_numbers = #tpu.dot_dimension_numbers<[1], [0], [0], [1], [0, 0, 1, 1], [], []>} : vector<16x64xf32>, vector<64x200xf32>, vector<16x200xf32> -> vector<16x200xf32>
    %212 = arith.addf %190, %211 : vector<16x200xf32>
    %c0_91 = arith.constant 0 : index
    %c0_92 = arith.constant 0 : index
    %213 = vector.load %arg11[%c0_91, %c0_92] : memref<200x128xf32, #tpu.memory_space<vmem>>, vector<200x128xf32>
    %cst_93 = arith.constant dense<0.000000e+00> : vector<16x128xf32>
    %214 = tpu.matmul %212, %213, %cst_93 {dimension_numbers = #tpu.dot_dimension_numbers<[1], [0], [0], [1], [0, 0, 1, 1], [], []>} : vector<16x200xf32>, vector<200x128xf32>, vector<16x128xf32> -> vector<16x128xf32>
    %c0_94 = arith.constant 0 : index
    %c0_95 = arith.constant 0 : index
    %215 = vector.load %arg12[%c0_94, %c0_95] : memref<1x128xf32, #tpu.memory_space<vmem>>, vector<1x128xf32>
    %216 = vector.broadcast %215 : vector<1x128xf32> to vector<16x128xf32>
    %217 = arith.addf %214, %216 : vector<16x128xf32>
    %c0_96 = arith.constant 0 : index
    %c0_97 = arith.constant 0 : index
    %218 = vector.load %arg13[%c0_96, %c0_97] : memref<16x128xf32, #tpu.memory_space<vmem>>, vector<16x128xf32>
    tpu.vector_store %arg13[%c0_96, %c0_97], %217 {strides = array<i32>} : memref<16x128xf32, #tpu.memory_space<vmem>>, vector<16x128xf32>,
    return
  }
}

</mosaic_0001>

<llo_original>
// kernel: tpu_custom_call.1
$region0: #{tpu_custom_call.1}
  #allocation0 [shape = 'u32[]', space=smem, size = 0x4, offset = 0x4, fixed_abs, tag = 'smem constant byte address 0x4 - core index']
  #allocation1 [shape = 'u32[144,128]{1,0:T(1,128)}', space=vmem, size = 0x12000, scoped, tag = 'internal scratch']
  #allocation2 [shape = 'f32[112,512]{1,0:T(8,128)}', space=vmem, size = 0x38000, scoped, tag = 'scratch operand']
  #allocation3 [shape = 'f32[112,256]{1,0:T(8,128)}', space=vmem, size = 0x1c000, scoped, tag = 'scratch operand']
  #allocation4 [shape = 'f32[1]{0:T(128)S(6)}', space=smem, size = 0x200, scoped, tag = 'scoped memory for tpu_custom_call.1']
  %s0 = inlined_call_operand.vmem [shape: f32[112,192], index: 0, kind: input, shape index: {}]
  %s1 = inlined_call_operand.hbm [shape: f32[192,512], index: 1, kind: input, shape index: {}]
  %s2 = inlined_call_operand.vmem [shape: f32[1,512], index: 2, kind: input, shape index: {}]
  %s3 = inlined_call_operand.vmem [shape: f32[7], index: 3, kind: input, shape index: {}]
  %s4 = inlined_call_operand.<no memory space> [shape: f32[1], index: 4, kind: input, shape index: {}]
  %s5 = inlined_call_operand.vmem [shape: f32[512,256], index: 5, kind: input, shape index: {}]
  %s6 = inlined_call_operand.hbm [shape: f32[64,256], index: 6, kind: input, shape index: {}]
  %s7 = inlined_call_operand.vmem [shape: f32[1,256], index: 7, kind: input, shape index: {}]
  %s8 = inlined_call_operand.vmem [shape: f32[7,64,200], index: 8, kind: input, shape index: {}]
  %s9 = inlined_call_operand.vmem [shape: f32[512,200], index: 9, kind: input, shape index: {}]
  %s10 = inlined_call_operand.vmem [shape: f32[1,200], index: 10, kind: input, shape index: {}]
  %s11 = inlined_call_operand.vmem [shape: f32[200,128], index: 11, kind: input, shape index: {}]
  %s12 = inlined_call_operand.vmem [shape: f32[1,128], index: 12, kind: input, shape index: {}]
  %s13 = inlined_call_operand.hbm [shape: f32[16,128], index: 13, kind: output, shape index: {}]
  %s14 = sld [smem:[#allocation0]]
  $region74: #{tpu_custom_call.1} parent=0
    _
  %s16 = ssub.s32 1, %s14
  %s17 = scalar_select 0, %s16, %s14
  %18 = sst [smem:[#allocation4]] %s4
  $region1: #{tpu_custom_call.1} parent=0
    #allocation5 [shape = 'u8[393216]{0}', space=vmem, size = 0x60000, scoped, tag = 'input window, operand 1, single buffered']
    #allocation6 [shape = 's32[1]{0}', space=sflag, size = 0x4, scoped, tag = 'scoped memory for tpu_custom_call.1']
    #allocation7 [shape = 's32[1]{0}', space=sflag, size = 0x4, scoped, tag = 'scoped memory for tpu_custom_call.1']
    #allocation8 [shape = 's32[1]{0}', space=sflag, size = 0x4, scoped, tag = 'scoped memory for tpu_custom_call.1']
    #allocation9 [shape = 'u8[512]{0}', space=smem, size = 0x200, scoped, tag = 'input window, operand 3, single buffered']
    #allocation10 [shape = 'u8[65536]{0}', space=vmem, size = 0x10000, scoped, tag = 'input window, operand 6, single buffered']
    #allocation11 [shape = 's32[1]{0}', space=sflag, size = 0x4, scoped, tag = 'scoped memory for tpu_custom_call.1']
    #allocation12 [shape = 'u8[8192]{0}', space=vmem, size = 0x2000, scoped, tag = 'output window, operand 0, single buffered']
    %19 = vsyncpa [#allocation6], 0
    %20 = vsyncpa [#allocation8], 0
    %21 = vsyncpa [#allocation11], 0
    %22 = vsyncpa [#allocation7], 0
    // Predicated region
    $region2: #{tpu_custom_call.1} parent=1 // pred_check
      _
    $region3: #{tpu_custom_call.1} parent=1 // pred_check_branch
      %24 = sbr.rel (0) target = $region5
    $region4: #{tpu_custom_call.1} parent=1 // pred_region
      _
    $region5: #{tpu_custom_call.1} parent=1 // pred_fallthru
      _
    // Predicated region
    $region6: #{tpu_custom_call.1} parent=1 // pred_check
      _
    $region7: #{tpu_custom_call.1} parent=1 // pred_check_branch
      %26 = sbr.rel (0) target = $region9
    $region8: #{tpu_custom_call.1} parent=1 // pred_region
      %s28 = ssub.s32 12288, 12288
      %29 = vsyncadd [#allocation6], %s28
      %s30 = sshll.u32 [#allocation5], 4
      %s31 = int_to_ptr.vmem [resolvable:$true] %s30
      %36 = dma.hbm_to_vmem [thread:$0]  %s1, 12288, %s31, [#allocation6], 512, 512, 32
    $region9: #{tpu_custom_call.1} parent=1 // pred_fallthru
      _
    // Predicated region
    $region10: #{tpu_custom_call.1} parent=1 // pred_check
      _
    $region11: #{tpu_custom_call.1} parent=1 // pred_check_branch
      %38 = sbr.rel (0) target = $region13
    $region12: #{tpu_custom_call.1} parent=1 // pred_region
      _
    $region13: #{tpu_custom_call.1} parent=1 // pred_fallthru
      _
    // Predicated region
    $region14: #{tpu_custom_call.1} parent=1 // pred_check
      _
    $region15: #{tpu_custom_call.1} parent=1 // pred_check_branch
      %40 = sbr.rel (0) target = $region17
    $region16: #{tpu_custom_call.1} parent=1 // pred_region
      %s42 = ssub.s32 16, 16
      %43 = vsyncadd [#allocation8], %s42
      %s45 = sshll.u32 %s3, 4
      %s46 = int_to_ptr.vmem [resolvable:$true] %s45
      %48 = dma.vmem_to_smem %s46, 16, [#allocation9], [#allocation8]
    $region17: #{tpu_custom_call.1} parent=1 // pred_fallthru
      _
    // Predicated region
    $region18: #{tpu_custom_call.1} parent=1 // pred_check
      _
    $region19: #{tpu_custom_call.1} parent=1 // pred_check_branch
      %50 = sbr.rel (0) target = $region21
    $region20: #{tpu_custom_call.1} parent=1 // pred_region
      _
    $region21: #{tpu_custom_call.1} parent=1 // pred_fallthru
      _
    // Predicated region
    $region22: #{tpu_custom_call.1} parent=1 // pred_check
      _
    $region23: #{tpu_custom_call.1} parent=1 // pred_check_branch
      %52 = sbr.rel (0) target = $region25
    $region24: #{tpu_custom_call.1} parent=1 // pred_region
      _
    $region25: #{tpu_custom_call.1} parent=1 // pred_fallthru
      _
    // Predicated region
    $region26: #{tpu_custom_call.1} parent=1 // pred_check
      _
    $region27: #{tpu_custom_call.1} parent=1 // pred_check_branch
      %54 = sbr.rel (0) target = $region29
    $region28: #{tpu_custom_call.1} parent=1 // pred_region
      %s56 = ssub.s32 2048, 2048
      %57 = vsyncadd [#allocation11], %s56
      %s58 = sshll.u32 [#allocation10], 4
      %s59 = int_to_ptr.vmem [resolvable:$true] %s58
      %64 = dma.hbm_to_vmem [thread:$0]  %s6, 2048, %s59, [#allocation11], 256, 256, 16
    $region29: #{tpu_custom_call.1} parent=1 // pred_fallthru
      _
    // Predicated region
    $region30: #{tpu_custom_call.1} parent=1 // pred_check
      _
    $region31: #{tpu_custom_call.1} parent=1 // pred_check_branch
      %66 = sbr.rel (0) target = $region33
    $region32: #{tpu_custom_call.1} parent=1 // pred_region
      _
    $region33: #{tpu_custom_call.1} parent=1 // pred_fallthru
      _
    // Predicated region
    $region34: #{tpu_custom_call.1} parent=1 // pred_check
      _
    $region35: #{tpu_custom_call.1} parent=1 // pred_check_branch
      %68 = sbr.rel (0) target = $region37
    $region36: #{tpu_custom_call.1} parent=1 // pred_region
      _
    $region37: #{tpu_custom_call.1} parent=1 // pred_fallthru
      _
    // Predicated region
    $region38: #{tpu_custom_call.1} parent=1 // pred_check
      _
    $region39: #{tpu_custom_call.1} parent=1 // pred_check_branch
      %70 = sbr.rel (0) target = $region41
    $region40: #{tpu_custom_call.1} parent=1 // pred_region
      _
    $region41: #{tpu_custom_call.1} parent=1 // pred_fallthru
      _
    // Predicated region
    $region42: #{tpu_custom_call.1} parent=1 // pred_check
      _
    $region43: #{tpu_custom_call.1} parent=1 // pred_check_branch
      %72 = sbr.rel (0) target = $region45
    $region44: #{tpu_custom_call.1} parent=1 // pred_region
      _
    $region45: #{tpu_custom_call.1} parent=1 // pred_fallthru
      _
    // Predicated region
    $region46: #{tpu_custom_call.1} parent=1 // pred_check
      _
    $region47: #{tpu_custom_call.1} parent=1 // pred_check_branch
      %74 = sbr.rel (0) target = $region49
    $region48: #{tpu_custom_call.1} parent=1 // pred_region
      _
    $region49: #{tpu_custom_call.1} parent=1 // pred_fallthru
      _
    // Predicated region
    $region50: #{tpu_custom_call.1} parent=1 // pred_check
      _
    $region51: #{tpu_custom_call.1} parent=1 // pred_check_branch
      %76 = sbr.rel (0) target = $region53
    $region52: #{tpu_custom_call.1} parent=1 // pred_region
      _
    $region53: #{tpu_custom_call.1} parent=1 // pred_fallthru
      _
    // Predicated region
    $region54: #{tpu_custom_call.1} parent=1 // pred_check
      _
    $region55: #{tpu_custom_call.1} parent=1 // pred_check_branch
      %78 = sbr.rel (0) target = $region57
    $region56: #{tpu_custom_call.1} parent=1 // pred_region
      %79 = dma.done [#allocation6], 12288
    $region57: #{tpu_custom_call.1} parent=1 // pred_fallthru
      _
    // Predicated region
    $region58: #{tpu_custom_call.1} parent=1 // pred_check
      _
    $region59: #{tpu_custom_call.1} parent=1 // pred_check_branch
      %81 = sbr.rel (0) target = $region61
    $region60: #{tpu_custom_call.1} parent=1 // pred_region
      %82 = dma.done [#allocation8], 16
    $region61: #{tpu_custom_call.1} parent=1 // pred_fallthru
      _
    // Predicated region
    $region62: #{tpu_custom_call.1} parent=1 // pred_check
      _
    $region63: #{tpu_custom_call.1} parent=1 // pred_check_branch
      %84 = sbr.rel (0) target = $region65
    $region64: #{tpu_custom_call.1} parent=1 // pred_region
      %85 = dma.done [#allocation11], 2048
    $region65: #{tpu_custom_call.1} parent=1 // pred_fallthru
      _
    %86 = sfence
    %v87 = vld [vmem:[%s0] sm:$0xff]
    %v88 = vld [vmem:[%s0 + $0x8] sm:$0xff]
    %v89 = vld [vmem:[%s0 + $0x10] sm:$0xff]
    %v90 = vld [vmem:[%s0 + $0x18] sm:$0xff]
    %v91 = vld [vmem:[%s0 + $0x20] sm:$0xff]
    %v92 = vld [vmem:[%s0 + $0x28] sm:$0xff]
    %v93 = vld [vmem:[%s0 + $0x30] sm:$0xff]
    %v94 = vld [vmem:[%s0 + $0x38] sm:$0xff]
    %v95 = vld [vmem:[%s0 + $0x40] sm:$0xff]
    %v96 = vld [vmem:[%s0 + $0x48] sm:$0xff]
    %v97 = vld [vmem:[%s0 + $0x50] sm:$0xff]
    %v98 = vld [vmem:[%s0 + $0x58] sm:$0xff]
    %v99 = vld [vmem:[%s0 + $0x60] sm:$0xff]
    %v100 = vld [vmem:[%s0 + $0x68] sm:$0xff]
    %v101 = vld [vmem:[%s0 + $0x70] sm:$0xff]
    %v102 = vld [vmem:[%s0 + $0x78] sm:$0xff]
    %v103 = vld [vmem:[%s0 + $0x80] sm:$0xff]
    %v104 = vld [vmem:[%s0 + $0x88] sm:$0xff]
    %v105 = vld [vmem:[%s0 + $0x90] sm:$0xff]
    %v106 = vld [vmem:[%s0 + $0x98] sm:$0xff]
    %v107 = vld [vmem:[%s0 + $0xa0] sm:$0xff]
    %v108 = vld [vmem:[%s0 + $0xa8] sm:$0xff]
    %v109 = vld [vmem:[%s0 + $0xb0] sm:$0xff]
    %v110 = vld [vmem:[%s0 + $0xb8] sm:$0xff]
    %v111 = vld [vmem:[%s0 + $0xc0] sm:$0xff]
    %v112 = vld [vmem:[%s0 + $0xc8] sm:$0xff]
    %v113 = vld [vmem:[%s0 + $0xd0] sm:$0xff]
    %v114 = vld [vmem:[%s0 + $0xd8] sm:$0xff]
    %v115 = vld [vmem:[#allocation5] sm:$0xff]
    %v116 = vld [vmem:[#allocation5 + $0x8] sm:$0xff]
    %v117 = vld [vmem:[#allocation5 + $0x10] sm:$0xff]
    %v118 = vld [vmem:[#allocation5 + $0x18] sm:$0xff]
    %v119 = vld [vmem:[#allocation5 + $0x20] sm:$0xff]
    %v120 = vld [vmem:[#allocation5 + $0x28] sm:$0xff]
    %v121 = vld [vmem:[#allocation5 + $0x30] sm:$0xff]
    %v122 = vld [vmem:[#allocation5 + $0x38] sm:$0xff]
    %v123 = vld [vmem:[#allocation5 + $0x40] sm:$0xff]
    %v124 = vld [vmem:[#allocation5 + $0x48] sm:$0xff]
    %v125 = vld [vmem:[#allocation5 + $0x50] sm:$0xff]
    %v126 = vld [vmem:[#allocation5 + $0x58] sm:$0xff]
    %v127 = vld [vmem:[#allocation5 + $0x60] sm:$0xff]
    %v128 = vld [vmem:[#allocation5 + $0x68] sm:$0xff]
    %v129 = vld [vmem:[#allocation5 + $0x70] sm:$0xff]
    %v130 = vld [vmem:[#allocation5 + $0x78] sm:$0xff]
    %v131 = vld [vmem:[#allocation5 + $0x80] sm:$0xff]
    %v132 = vld [vmem:[#allocation5 + $0x88] sm:$0xff]
    %v133 = vld [vmem:[#allocation5 + $0x90] sm:$0xff]
    %v134 = vld [vmem:[#allocation5 + $0x98] sm:$0xff]
    %v135 = vld [vmem:[#allocation5 + $0xa0] sm:$0xff]
    %v136 = vld [vmem:[#allocation5 + $0xa8] sm:$0xff]
    %v137 = vld [vmem:[#allocation5 + $0xb0] sm:$0xff]
    %v138 = vld [vmem:[#allocation5 + $0xb8] sm:$0xff]
    %v139 = vld [vmem:[#allocation5 + $0xc0] sm:$0xff]
    %v140 = vld [vmem:[#allocation5 + $0xc8] sm:$0xff]
    %v141 = vld [vmem:[#allocation5 + $0xd0] sm:$0xff]
    %v142 = vld [vmem:[#allocation5 + $0xd8] sm:$0xff]
    %v143 = vld [vmem:[#allocation5 + $0xe0] sm:$0xff]
    %v144 = vld [vmem:[#allocation5 + $0xe8] sm:$0xff]
    %v145 = vld [vmem:[#allocation5 + $0xf0] sm:$0xff]
    %v146 = vld [vmem:[#allocation5 + $0xf8] sm:$0xff]
    %v147 = vld [vmem:[#allocation5 + $0x100] sm:$0xff]
    %v148 = vld [vmem:[#allocation5 + $0x108] sm:$0xff]
    %v149 = vld [vmem:[#allocation5 + $0x110] sm:$0xff]
    %v150 = vld [vmem:[#allocation5 + $0x118] sm:$0xff]
    %v151 = vld [vmem:[#allocation5 + $0x120] sm:$0xff]
    %v152 = vld [vmem:[#allocation5 + $0x128] sm:$0xff]
    %v153 = vld [vmem:[#allocation5 + $0x130] sm:$0xff]
    %v154 = vld [vmem:[#allocation5 + $0x138] sm:$0xff]
    %v155 = vld [vmem:[#allocation5 + $0x140] sm:$0xff]
    %v156 = vld [vmem:[#allocation5 + $0x148] sm:$0xff]
    %v157 = vld [vmem:[#allocation5 + $0x150] sm:$0xff]
    %v158 = vld [vmem:[#allocation5 + $0x158] sm:$0xff]
    %v159 = vld [vmem:[#allocation5 + $0x160] sm:$0xff]
    %v160 = vld [vmem:[#allocation5 + $0x168] sm:$0xff]
    %v161 = vld [vmem:[#allocation5 + $0x170] sm:$0xff]
    %v162 = vld [vmem:[#allocation5 + $0x178] sm:$0xff]
    %v163 = vld [vmem:[#allocation5 + $0x180] sm:$0xff]
    %v164 = vld [vmem:[#allocation5 + $0x188] sm:$0xff]
    %v165 = vld [vmem:[#allocation5 + $0x190] sm:$0xff]
    %v166 = vld [vmem:[#allocation5 + $0x198] sm:$0xff]
    %v167 = vld [vmem:[#allocation5 + $0x1a0] sm:$0xff]
    %v168 = vld [vmem:[#allocation5 + $0x1a8] sm:$0xff]
    %v169 = vld [vmem:[#allocation5 + $0x1b0] sm:$0xff]
    %v170 = vld [vmem:[#allocation5 + $0x1b8] sm:$0xff]
    %v171 = vld [vmem:[#allocation5 + $0x1c0] sm:$0xff]
    %v172 = vld [vmem:[#allocation5 + $0x1c8] sm:$0xff]
    %v173 = vld [vmem:[#allocation5 + $0x1d0] sm:$0xff]
    %v174 = vld [vmem:[#allocation5 + $0x1d8] sm:$0xff]
    %v175 = vld [vmem:[#allocation5 + $0x1e0] sm:$0xff]
    %v176 = vld [vmem:[#allocation5 + $0x1e8] sm:$0xff]
    %v177 = vld [vmem:[#allocation5 + $0x1f0] sm:$0xff]
    %v178 = vld [vmem:[#allocation5 + $0x1f8] sm:$0xff]
    %v179 = vld [vmem:[#allocation5 + $0x200] sm:$0xff]
    %v180 = vld [vmem:[#allocation5 + $0x208] sm:$0xff]
    %v181 = vld [vmem:[#allocation5 + $0x210] sm:$0xff]
    %v182 = vld [vmem:[#allocation5 + $0x218] sm:$0xff]
    %v183 = vld [vmem:[#allocation5 + $0x220] sm:$0xff]
    %v184 = vld [vmem:[#allocation5 + $0x228] sm:$0xff]
    %v185 = vld [vmem:[#allocation5 + $0x230] sm:$0xff]
    %v186 = vld [vmem:[#allocation5 + $0x238] sm:$0xff]
    %v187 = vld [vmem:[#allocation5 + $0x240] sm:$0xff]
    %v188 = vld [vmem:[#allocation5 + $0x248] sm:$0xff]
    %v189 = vld [vmem:[#allocation5 + $0x250] sm:$0xff]
    %v190 = vld [vmem:[#allocation5 + $0x258] sm:$0xff]
    %v191 = vld [vmem:[#allocation5 + $0x260] sm:$0xff]
    %v192 = vld [vmem:[#allocation5 + $0x268] sm:$0xff]
    %v193 = vld [vmem:[#allocation5 + $0x270] sm:$0xff]
    %v194 = vld [vmem:[#allocation5 + $0x278] sm:$0xff]
    %v195 = vld [vmem:[#allocation5 + $0x280] sm:$0xff]
    %v196 = vld [vmem:[#allocation5 + $0x288] sm:$0xff]
    %v197 = vld [vmem:[#allocation5 + $0x290] sm:$0xff]
    %v198 = vld [vmem:[#allocation5 + $0x298] sm:$0xff]
    %v199 = vld [vmem:[#allocation5 + $0x2a0] sm:$0xff]
    %v200 = vld [vmem:[#allocation5 + $0x2a8] sm:$0xff]
    %v201 = vld [vmem:[#allocation5 + $0x2b0] sm:$0xff]
    %v202 = vld [vmem:[#allocation5 + $0x2b8] sm:$0xff]
    %v203 = vld [vmem:[#allocation5 + $0x2c0] sm:$0xff]
    %v204 = vld [vmem:[#allocation5 + $0x2c8] sm:$0xff]
    %v205 = vld [vmem:[#allocation5 + $0x2d0] sm:$0xff]
    %v206 = vld [vmem:[#allocation5 + $0x2d8] sm:$0xff]
    %v207 = vld [vmem:[#allocation5 + $0x2e0] sm:$0xff]
    %v208 = vld [vmem:[#allocation5 + $0x2e8] sm:$0xff]
    %v209 = vld [vmem:[#allocation5 + $0x2f0] sm:$0xff]
    %v210 = vld [vmem:[#allocation5 + $0x2f8] sm:$0xff]
    %v211 = vld [vmem:[%s2] sm:$0xf]
    %v213 = vlaneseq
    %v214 = vshrl.u32 %v213, 7
    %v215 = vsub.s32 0, %v214
    %v216 = vrot.slane %v211, %v215
    %v217 = vlaneseq
    %v218 = vshrl.u32 %v217, 7
    %v219 = vsub.s32 1, %v218
    %v220 = vrot.slane %v211, %v219
    %v221 = vlaneseq
    %v222 = vshrl.u32 %v221, 7
    %v223 = vsub.s32 2, %v222
    %v224 = vrot.slane %v211, %v223
    %v225 = vlaneseq
    %v226 = vshrl.u32 %v225, 7
    %v227 = vsub.s32 3, %v226
    %v228 = vrot.slane %v211, %v227
    %vm233 = vcmask 523264
    %v235 = vsel %vm233, %v88, 0
    %v238 = vsel %vm233, %v90, 0
    %v241 = vsel %vm233, %v92, 0
    %v244 = vsel %vm233, %v94, 0
    %v247 = vsel %vm233, %v96, 0
    %v250 = vsel %vm233, %v98, 0
    %v253 = vsel %vm233, %v100, 0
    %v256 = vsel %vm233, %v102, 0
    %v259 = vsel %vm233, %v104, 0
    %v262 = vsel %vm233, %v106, 0
    %v265 = vsel %vm233, %v108, 0
    %v268 = vsel %vm233, %v110, 0
    %v271 = vsel %vm233, %v112, 0
    %v274 = vsel %vm233, %v114, 0
    %276 = vmatprep.subr.mxu0 %v176
    %277 = vmatpush1.msra.mxu0 %v175
    %278 = vmatprep.subr.mxu0 %v172
    %279 = vmatpush1.msra.mxu0 %v171
    %280 = vmatprep.subr.mxu0 %v168
    %281 = vmatpush1.msra.mxu0 %v167
    %282 = vmatprep.subr.mxu0 %v164
    %283 = vmatpush1.msra.mxu0 %v163
    %284 = vmatprep.subr.mxu0 %v160
    %285 = vmatpush1.msra.mxu0 %v159
    %286 = vmatprep.subr.mxu0 %v156
    %287 = vmatpush1.msra.mxu0 %v155
    %288 = vmatprep.subr.mxu0 %v152
    %289 = vmatpush1.msra.mxu0 %v151
    %290 = vmatprep.subr.mxu0 %v148
    %291 = vmatpush1.msra.mxu0 %v147
    %292 = vmatprep.subr.mxu0 %v144
    %293 = vmatpush1.msra.mxu0 %v143
    %294 = vmatprep.subr.mxu0 %v140
    %295 = vmatpush1.msra.mxu0 %v139
    %296 = vmatprep.subr.mxu0 %v136
    %297 = vmatpush1.msra.mxu0 %v135
    %298 = vmatprep.subr.mxu0 %v132
    %299 = vmatpush1.msra.mxu0 %v131
    %300 = vmatprep.subr.mxu0 %v128
    %301 = vmatpush1.msra.mxu0 %v127
    %302 = vmatprep.subr.mxu0 %v124
    %303 = vmatpush1.msra.mxu0 %v123
    %304 = vmatprep.subr.mxu0 %v120
    %305 = vmatpush1.msra.mxu0 %v119
    %306 = vmatprep.subr.mxu0 %v116
    %307 = vmatpush1.msra.mxu0 %v115
    %308 = vmatprep.subr.mxu0 0.0
    %309 = vmatpush2.msra.mxu0 0.0
    %310 = vmatprep.subr.mxu0 0.0
    %311 = vmatpush2.msra.mxu0 0.0
    %312 = vmatprep.subr.mxu0 0.0
    %313 = vmatpush2.msra.mxu0 0.0
    %314 = vmatprep.subr.mxu0 0.0
    %315 = vmatpush2.msra.mxu0 0.0
    %316 = vmatprep.subr.mxu0 0.0
    %317 = vmatpush2.msra.mxu0 0.0
    %318 = vmatprep.subr.mxu0 0.0
    %319 = vmatpush2.msra.mxu0 0.0
    %320 = vmatprep.subr.mxu0 0.0
    %321 = vmatpush2.msra.mxu0 0.0
    %322 = vmatprep.subr.mxu0 0.0
    %323 = vmatpush2.msra.mxu0 0.0
    %324 = vmatprep.subr.mxu0 %v208
    %325 = vmatpush2.msra.mxu0 %v207
    %326 = vmatprep.subr.mxu0 %v204
    %327 = vmatpush2.msra.mxu0 %v203
    %328 = vmatprep.subr.mxu0 %v200
    %329 = vmatpush2.msra.mxu0 %v199
    %330 = vmatprep.subr.mxu0 %v196
    %331 = vmatpush2.msra.mxu0 %v195
    %332 = vmatprep.subr.mxu0 %v192
    %333 = vmatpush2.msra.mxu0 %v191
    %334 = vmatprep.subr.mxu0 %v188
    %335 = vmatpush2.msra.mxu0 %v187
    %336 = vmatprep.subr.mxu0 %v184
    %337 = vmatpush2.msra.mxu0 %v183
    %338 = vmatprep.subr.mxu0 %v180
    %339 = vmatpush2.msra.mxu0 %v179
    %340 = vmatprep.mubr.f32.mxu0 %v235
    %341 = vmatmul.mubr.f32.gmra.mxu0 %v87
    %v342 = vpop.f32.mrf.mxu0
    %v343 = vadd.f32 %v216, %v342
    %v344 = vpop.f32.mrf.mxu0
    %v345 = vadd.f32 %v220, %v344
    %346 = vmatprep.mubr.f32.mxu0 %v238
    %347 = vmatmul.mubr.f32.gmra.mxu0 %v89
    %v348 = vpop.f32.mrf.mxu0
    %v349 = vadd.f32 %v216, %v348
    %v350 = vpop.f32.mrf.mxu0
    %v351 = vadd.f32 %v220, %v350
    %352 = vmatprep.mubr.f32.mxu0 %v241
    %353 = vmatmul.mubr.f32.gmra.mxu0 %v91
    %v354 = vpop.f32.mrf.mxu0
    %v355 = vadd.f32 %v216, %v354
    %v356 = vpop.f32.mrf.mxu0
    %v357 = vadd.f32 %v220, %v356
    %358 = vmatprep.mubr.f32.mxu0 %v244
    %359 = vmatmul.mubr.f32.gmra.mxu0 %v93
    %v360 = vpop.f32.mrf.mxu0
    %v361 = vadd.f32 %v216, %v360
    %v362 = vpop.f32.mrf.mxu0
    %v363 = vadd.f32 %v220, %v362
    %364 = vmatprep.mubr.f32.mxu0 %v247
    %365 = vmatmul.mubr.f32.gmra.mxu0 %v95
    %v366 = vpop.f32.mrf.mxu0
    %v367 = vadd.f32 %v216, %v366
    %v368 = vpop.f32.mrf.mxu0
    %v369 = vadd.f32 %v220, %v368
    %370 = vmatprep.mubr.f32.mxu0 %v250
    %371 = vmatmul.mubr.f32.gmra.mxu0 %v97
    %v372 = vpop.f32.mrf.mxu0
    %v373 = vadd.f32 %v216, %v372
    %v374 = vpop.f32.mrf.mxu0
    %v375 = vadd.f32 %v220, %v374
    %376 = vmatprep.mubr.f32.mxu0 %v253
    %377 = vmatmul.mubr.f32.gmra.mxu0 %v99
    %v378 = vpop.f32.mrf.mxu0
    %v379 = vadd.f32 %v216, %v378
    %v380 = vpop.f32.mrf.mxu0
    %v381 = vadd.f32 %v220, %v380
    %382 = vmatprep.mubr.f32.mxu0 %v256
    %383 = vmatmul.mubr.f32.gmra.mxu0 %v101
    %v384 = vpop.f32.mrf.mxu0
    %v385 = vadd.f32 %v216, %v384
    %v386 = vpop.f32.mrf.mxu0
    %v387 = vadd.f32 %v220, %v386
    %388 = vmatprep.mubr.f32.mxu0 %v259
    %389 = vmatmul.mubr.f32.gmra.mxu0 %v103
    %v390 = vpop.f32.mrf.mxu0
    %v391 = vadd.f32 %v216, %v390
    %v392 = vpop.f32.mrf.mxu0
    %v393 = vadd.f32 %v220, %v392
    %394 = vmatprep.mubr.f32.mxu0 %v262
    %395 = vmatmul.mubr.f32.gmra.mxu0 %v105
    %v396 = vpop.f32.mrf.mxu0
    %v397 = vadd.f32 %v216, %v396
    %v398 = vpop.f32.mrf.mxu0
    %v399 = vadd.f32 %v220, %v398
    %400 = vmatprep.mubr.f32.mxu0 %v265
    %401 = vmatmul.mubr.f32.gmra.mxu0 %v107
    %v402 = vpop.f32.mrf.mxu0
    %v403 = vadd.f32 %v216, %v402
    %v404 = vpop.f32.mrf.mxu0
    %v405 = vadd.f32 %v220, %v404
    %406 = vmatprep.mubr.f32.mxu0 %v268
    %407 = vmatmul.mubr.f32.gmra.mxu0 %v109
    %v408 = vpop.f32.mrf.mxu0
    %v409 = vadd.f32 %v216, %v408
    %v410 = vpop.f32.mrf.mxu0
    %v411 = vadd.f32 %v220, %v410
    %412 = vmatprep.mubr.f32.mxu0 %v271
    %413 = vmatmul.mubr.f32.gmra.mxu0 %v111
    %v414 = vpop.f32.mrf.mxu0
    %v415 = vadd.f32 %v216, %v414
    %v416 = vpop.f32.mrf.mxu0
    %v417 = vadd.f32 %v220, %v416
    %418 = vmatprep.mubr.f32.mxu0 %v274
    %419 = vmatmul.mubr.f32.gmra.mxu0 %v113
    %v420 = vpop.f32.mrf.mxu0
    %v421 = vadd.f32 %v216, %v420
    %v422 = vpop.f32.mrf.mxu0
    %v423 = vadd.f32 %v220, %v422
    %424 = vdwg.mxu0
    %425 = vmatprep.subr.mxu0 %v178
    %426 = vmatpush1.msra.mxu0 %v177
    %427 = vmatprep.subr.mxu0 %v174
    %428 = vmatpush1.msra.mxu0 %v173
    %429 = vmatprep.subr.mxu0 %v170
    %430 = vmatpush1.msra.mxu0 %v169
    %431 = vmatprep.subr.mxu0 %v166
    %432 = vmatpush1.msra.mxu0 %v165
    %433 = vmatprep.subr.mxu0 %v162
    %434 = vmatpush1.msra.mxu0 %v161
    %435 = vmatprep.subr.mxu0 %v158
    %436 = vmatpush1.msra.mxu0 %v157
    %437 = vmatprep.subr.mxu0 %v154
    %438 = vmatpush1.msra.mxu0 %v153
    %439 = vmatprep.subr.mxu0 %v150
    %440 = vmatpush1.msra.mxu0 %v149
    %441 = vmatprep.subr.mxu0 %v146
    %442 = vmatpush1.msra.mxu0 %v145
    %443 = vmatprep.subr.mxu0 %v142
    %444 = vmatpush1.msra.mxu0 %v141
    %445 = vmatprep.subr.mxu0 %v138
    %446 = vmatpush1.msra.mxu0 %v137
    %447 = vmatprep.subr.mxu0 %v134
    %448 = vmatpush1.msra.mxu0 %v133
    %449 = vmatprep.subr.mxu0 %v130
    %450 = vmatpush1.msra.mxu0 %v129
    %451 = vmatprep.subr.mxu0 %v126
    %452 = vmatpush1.msra.mxu0 %v125
    %453 = vmatprep.subr.mxu0 %v122
    %454 = vmatpush1.msra.mxu0 %v121
    %455 = vmatprep.subr.mxu0 %v118
    %456 = vmatpush1.msra.mxu0 %v117
    %457 = vmatprep.subr.mxu0 0.0
    %458 = vmatpush2.msra.mxu0 0.0
    %459 = vmatprep.subr.mxu0 0.0
    %460 = vmatpush2.msra.mxu0 0.0
    %461 = vmatprep.subr.mxu0 0.0
    %462 = vmatpush2.msra.mxu0 0.0
    %463 = vmatprep.subr.mxu0 0.0
    %464 = vmatpush2.msra.mxu0 0.0
    %465 = vmatprep.subr.mxu0 0.0
    %466 = vmatpush2.msra.mxu0 0.0
    %467 = vmatprep.subr.mxu0 0.0
    %468 = vmatpush2.msra.mxu0 0.0
    %469 = vmatprep.subr.mxu0 0.0
    %470 = vmatpush2.msra.mxu0 0.0
    %471 = vmatprep.subr.mxu0 0.0
    %472 = vmatpush2.msra.mxu0 0.0
    %473 = vmatprep.subr.mxu0 %v210
    %474 = vmatpush2.msra.mxu0 %v209
    %475 = vmatprep.subr.mxu0 %v206
    %476 = vmatpush2.msra.mxu0 %v205
    %477 = vmatprep.subr.mxu0 %v202
    %478 = vmatpush2.msra.mxu0 %v201
    %479 = vmatprep.subr.mxu0 %v198
    %480 = vmatpush2.msra.mxu0 %v197
    %481 = vmatprep.subr.mxu0 %v194
    %482 = vmatpush2.msra.mxu0 %v193
    %483 = vmatprep.subr.mxu0 %v190
    %484 = vmatpush2.msra.mxu0 %v189
    %485 = vmatprep.subr.mxu0 %v186
    %486 = vmatpush2.msra.mxu0 %v185
    %487 = vmatprep.subr.mxu0 %v182
    %488 = vmatpush2.msra.mxu0 %v181
    %489 = vmatprep.mubr.f32.mxu0 %v235
    %490 = vmatmul.mubr.f32.gmra.mxu0 %v87
    %v491 = vpop.f32.mrf.mxu0
    %v492 = vadd.f32 %v224, %v491
    %v493 = vpop.f32.mrf.mxu0
    %v494 = vadd.f32 %v228, %v493
    %495 = vmatprep.mubr.f32.mxu0 %v238
    %496 = vmatmul.mubr.f32.gmra.mxu0 %v89
    %v497 = vpop.f32.mrf.mxu0
    %v498 = vadd.f32 %v224, %v497
    %v499 = vpop.f32.mrf.mxu0
    %v500 = vadd.f32 %v228, %v499
    %501 = vmatprep.mubr.f32.mxu0 %v241
    %502 = vmatmul.mubr.f32.gmra.mxu0 %v91
    %v503 = vpop.f32.mrf.mxu0
    %v504 = vadd.f32 %v224, %v503
    %v505 = vpop.f32.mrf.mxu0
    %v506 = vadd.f32 %v228, %v505
    %507 = vmatprep.mubr.f32.mxu0 %v244
    %508 = vmatmul.mubr.f32.gmra.mxu0 %v93
    %v509 = vpop.f32.mrf.mxu0
    %v510 = vadd.f32 %v224, %v509
    %v511 = vpop.f32.mrf.mxu0
    %v512 = vadd.f32 %v228, %v511
    %513 = vmatprep.mubr.f32.mxu0 %v247
    %514 = vmatmul.mubr.f32.gmra.mxu0 %v95
    %v515 = vpop.f32.mrf.mxu0
    %v516 = vadd.f32 %v224, %v515
    %v517 = vpop.f32.mrf.mxu0
    %v518 = vadd.f32 %v228, %v517
    %519 = vmatprep.mubr.f32.mxu0 %v250
    %520 = vmatmul.mubr.f32.gmra.mxu0 %v97
    %v521 = vpop.f32.mrf.mxu0
    %v522 = vadd.f32 %v224, %v521
    %v523 = vpop.f32.mrf.mxu0
    %v524 = vadd.f32 %v228, %v523
    %525 = vmatprep.mubr.f32.mxu0 %v253
    %526 = vmatmul.mubr.f32.gmra.mxu0 %v99
    %v527 = vpop.f32.mrf.mxu0
    %v528 = vadd.f32 %v224, %v527
    %v529 = vpop.f32.mrf.mxu0
    %v530 = vadd.f32 %v228, %v529
    %531 = vmatprep.mubr.f32.mxu0 %v256
    %532 = vmatmul.mubr.f32.gmra.mxu0 %v101
    %v533 = vpop.f32.mrf.mxu0
    %v534 = vadd.f32 %v224, %v533
    %v535 = vpop.f32.mrf.mxu0
    %v536 = vadd.f32 %v228, %v535
    %537 = vmatprep.mubr.f32.mxu0 %v259
    %538 = vmatmul.mubr.f32.gmra.mxu0 %v103
    %v539 = vpop.f32.mrf.mxu0
    %v540 = vadd.f32 %v224, %v539
    %v541 = vpop.f32.mrf.mxu0
    %v542 = vadd.f32 %v228, %v541
    %543 = vmatprep.mubr.f32.mxu0 %v262
    %544 = vmatmul.mubr.f32.gmra.mxu0 %v105
    %v545 = vpop.f32.mrf.mxu0
    %v546 = vadd.f32 %v224, %v545
    %v547 = vpop.f32.mrf.mxu0
    %v548 = vadd.f32 %v228, %v547
    %549 = vmatprep.mubr.f32.mxu0 %v265
    %550 = vmatmul.mubr.f32.gmra.mxu0 %v107
    %v551 = vpop.f32.mrf.mxu0
    %v552 = vadd.f32 %v224, %v551
    %v553 = vpop.f32.mrf.mxu0
    %v554 = vadd.f32 %v228, %v553
    %555 = vmatprep.mubr.f32.mxu0 %v268
    %556 = vmatmul.mubr.f32.gmra.mxu0 %v109
    %v557 = vpop.f32.mrf.mxu0
    %v558 = vadd.f32 %v224, %v557
    %v559 = vpop.f32.mrf.mxu0
    %v560 = vadd.f32 %v228, %v559
    %561 = vmatprep.mubr.f32.mxu0 %v271
    %562 = vmatmul.mubr.f32.gmra.mxu0 %v111
    %v563 = vpop.f32.mrf.mxu0
    %v564 = vadd.f32 %v224, %v563
    %v565 = vpop.f32.mrf.mxu0
    %v566 = vadd.f32 %v228, %v565
    %567 = vmatprep.mubr.f32.mxu0 %v274
    %568 = vmatmul.mubr.f32.gmra.mxu0 %v113
    %v569 = vpop.f32.mrf.mxu0
    %v570 = vadd.f32 %v224, %v569
    %v571 = vpop.f32.mrf.mxu0
    %v572 = vadd.f32 %v228, %v571
    %573 = vdwg.mxu0
    %574 = vst [vmem:[#allocation2] sm:$0xff] %v343
    %575 = vst [vmem:[#allocation2 + $0x8] sm:$0xff] %v345
    %576 = vst [vmem:[#allocation2 + $0x10] sm:$0xff] %v492
    %577 = vst [vmem:[#allocation2 + $0x18] sm:$0xff] %v494
    %578 = vst [vmem:[#allocation2 + $0x20] sm:$0xff] %v349
    %579 = vst [vmem:[#allocation2 + $0x28] sm:$0xff] %v351
    %580 = vst [vmem:[#allocation2 + $0x30] sm:$0xff] %v498
    %581 = vst [vmem:[#allocation2 + $0x38] sm:$0xff] %v500
    %582 = vst [vmem:[#allocation2 + $0x40] sm:$0xff] %v355
    %583 = vst [vmem:[#allocation2 + $0x48] sm:$0xff] %v357
    %584 = vst [vmem:[#allocation2 + $0x50] sm:$0xff] %v504
    %585 = vst [vmem:[#allocation2 + $0x58] sm:$0xff] %v506
    %586 = vst [vmem:[#allocation2 + $0x60] sm:$0xff] %v361
    %587 = vst [vmem:[#allocation2 + $0x68] sm:$0xff] %v363
    %588 = vst [vmem:[#allocation2 + $0x70] sm:$0xff] %v510
    %589 = vst [vmem:[#allocation2 + $0x78] sm:$0xff] %v512
    %590 = vst [vmem:[#allocation2 + $0x80] sm:$0xff] %v367
    %591 = vst [vmem:[#allocation2 + $0x88] sm:$0xff] %v369
    %592 = vst [vmem:[#allocation2 + $0x90] sm:$0xff] %v516
    %593 = vst [vmem:[#allocation2 + $0x98] sm:$0xff] %v518
    %594 = vst [vmem:[#allocation2 + $0xa0] sm:$0xff] %v373
    %595 = vst [vmem:[#allocation2 + $0xa8] sm:$0xff] %v375
    %596 = vst [vmem:[#allocation2 + $0xb0] sm:$0xff] %v522
    %597 = vst [vmem:[#allocation2 + $0xb8] sm:$0xff] %v524
    %598 = vst [vmem:[#allocation2 + $0xc0] sm:$0xff] %v379
    %599 = vst [vmem:[#allocation2 + $0xc8] sm:$0xff] %v381
    %600 = vst [vmem:[#allocation2 + $0xd0] sm:$0xff] %v528
    %601 = vst [vmem:[#allocation2 + $0xd8] sm:$0xff] %v530
    %602 = vst [vmem:[#allocation2 + $0xe0] sm:$0xff] %v385
    %603 = vst [vmem:[#allocation2 + $0xe8] sm:$0xff] %v387
    %604 = vst [vmem:[#allocation2 + $0xf0] sm:$0xff] %v534
    %605 = vst [vmem:[#allocation2 + $0xf8] sm:$0xff] %v536
    %606 = vst [vmem:[#allocation2 + $0x100] sm:$0xff] %v391
    %607 = vst [vmem:[#allocation2 + $0x108] sm:$0xff] %v393
    %608 = vst [vmem:[#allocation2 + $0x110] sm:$0xff] %v540
    %609 = vst [vmem:[#allocation2 + $0x118] sm:$0xff] %v542
    %610 = vst [vmem:[#allocation2 + $0x120] sm:$0xff] %v397
    %611 = vst [vmem:[#allocation2 + $0x128] sm:$0xff] %v399
    %612 = vst [vmem:[#allocation2 + $0x130] sm:$0xff] %v546
    %613 = vst [vmem:[#allocation2 + $0x138] sm:$0xff] %v548
    %614 = vst [vmem:[#allocation2 + $0x140] sm:$0xff] %v403
    %615 = vst [vmem:[#allocation2 + $0x148] sm:$0xff] %v405
    %616 = vst [vmem:[#allocation2 + $0x150] sm:$0xff] %v552
    %617 = vst [vmem:[#allocation2 + $0x158] sm:$0xff] %v554
    %618 = vst [vmem:[#allocation2 + $0x160] sm:$0xff] %v409
    %619 = vst [vmem:[#allocation2 + $0x168] sm:$0xff] %v411
    %620 = vst [vmem:[#allocation2 + $0x170] sm:$0xff] %v558
    %621 = vst [vmem:[#allocation2 + $0x178] sm:$0xff] %v560
    %622 = vst [vmem:[#allocation2 + $0x180] sm:$0xff] %v415
    %623 = vst [vmem:[#allocation2 + $0x188] sm:$0xff] %v417
    %624 = vst [vmem:[#allocation2 + $0x190] sm:$0xff] %v564
    %625 = vst [vmem:[#allocation2 + $0x198] sm:$0xff] %v566
    %626 = vst [vmem:[#allocation2 + $0x1a0] sm:$0xff] %v421
    %627 = vst [vmem:[#allocation2 + $0x1a8] sm:$0xff] %v423
    %628 = vst [vmem:[#allocation2 + $0x1b0] sm:$0xff] %v570
    %629 = vst [vmem:[#allocation2 + $0x1b8] sm:$0xff] %v572
    %v630 = vld [vmem:[#allocation2] sm:$0xff]
    %v631 = vld [vmem:[#allocation2 + $0x8] sm:$0xff]
    %v632 = vld [vmem:[#allocation2 + $0x10] sm:$0xff]
    %v633 = vld [vmem:[#allocation2 + $0x18] sm:$0xff]
    %v634 = vld [vmem:[#allocation2 + $0x20] sm:$0xff]
    %v635 = vld [vmem:[#allocation2 + $0x28] sm:$0xff]
    %v636 = vld [vmem:[#allocation2 + $0x30] sm:$0xff]
    %v637 = vld [vmem:[#allocation2 + $0x38] sm:$0xff]
    %v638 = vld [vmem:[#allocation2 + $0x40] sm:$0xff]
    %v639 = vld [vmem:[#allocation2 + $0x48] sm:$0xff]
    %v640 = vld [vmem:[#allocation2 + $0x50] sm:$0xff]
    %v641 = vld [vmem:[#allocation2 + $0x58] sm:$0xff]
    %v642 = vld [vmem:[#allocation2 + $0x60] sm:$0xff]
    %v643 = vld [vmem:[#allocation2 + $0x68] sm:$0xff]
    %v644 = vld [vmem:[#allocation2 + $0x70] sm:$0xff]
    %v645 = vld [vmem:[#allocation2 + $0x78] sm:$0xff]
    %v646 = vld [vmem:[#allocation2 + $0x80] sm:$0xff]
    %v647 = vld [vmem:[#allocation2 + $0x88] sm:$0xff]
    %v648 = vld [vmem:[#allocation2 + $0x90] sm:$0xff]
    %v649 = vld [vmem:[#allocation2 + $0x98] sm:$0xff]
    %v650 = vld [vmem:[#allocation2 + $0xa0] sm:$0xff]
    %v651 = vld [vmem:[#allocation2 + $0xa8] sm:$0xff]
    %v652 = vld [vmem:[#allocation2 + $0xb0] sm:$0xff]
    %v653 = vld [vmem:[#allocation2 + $0xb8] sm:$0xff]
    %v654 = vld [vmem:[#allocation2 + $0xc0] sm:$0xff]
    %v655 = vld [vmem:[#allocation2 + $0xc8] sm:$0xff]
    %v656 = vld [vmem:[#allocation2 + $0xd0] sm:$0xff]
    %v657 = vld [vmem:[#allocation2 + $0xd8] sm:$0xff]
    %v658 = vld [vmem:[#allocation2 + $0xe0] sm:$0xff]
    %v659 = vld [vmem:[#allocation2 + $0xe8] sm:$0xff]
    %v660 = vld [vmem:[#allocation2 + $0xf0] sm:$0xff]
    %v661 = vld [vmem:[#allocation2 + $0xf8] sm:$0xff]
    %v662 = vld [vmem:[#allocation2 + $0x100] sm:$0xff]
    %v663 = vld [vmem:[#allocation2 + $0x108] sm:$0xff]
    %v664 = vld [vmem:[#allocation2 + $0x110] sm:$0xff]
    %v665 = vld [vmem:[#allocation2 + $0x118] sm:$0xff]
    %v666 = vld [vmem:[#allocation2 + $0x120] sm:$0xff]
    %v667 = vld [vmem:[#allocation2 + $0x128] sm:$0xff]
    %v668 = vld [vmem:[#allocation2 + $0x130] sm:$0xff]
    %v669 = vld [vmem:[#allocation2 + $0x138] sm:$0xff]
    %v670 = vld [vmem:[#allocation2 + $0x140] sm:$0xff]
    %v671 = vld [vmem:[#allocation2 + $0x148] sm:$0xff]
    %v672 = vld [vmem:[#allocation2 + $0x150] sm:$0xff]
    %v673 = vld [vmem:[#allocation2 + $0x158] sm:$0xff]
    %v674 = vld [vmem:[#allocation2 + $0x160] sm:$0xff]
    %v675 = vld [vmem:[#allocation2 + $0x168] sm:$0xff]
    %v676 = vld [vmem:[#allocation2 + $0x170] sm:$0xff]
    %v677 = vld [vmem:[#allocation2 + $0x178] sm:$0xff]
    %v678 = vld [vmem:[#allocation2 + $0x180] sm:$0xff]
    %v679 = vld [vmem:[#allocation2 + $0x188] sm:$0xff]
    %v680 = vld [vmem:[#allocation2 + $0x190] sm:$0xff]
    %v681 = vld [vmem:[#allocation2 + $0x198] sm:$0xff]
    %v682 = vld [vmem:[#allocation2 + $0x1a0] sm:$0xff]
    %v683 = vld [vmem:[#allocation2 + $0x1a8] sm:$0xff]
    %v684 = vld [vmem:[#allocation2 + $0x1b0] sm:$0xff]
    %v685 = vld [vmem:[#allocation2 + $0x1b8] sm:$0xff]
    %v686 = vld [vmem:[%s5] sm:$0xff]
    %v687 = vld [vmem:[%s5 + $0x8] sm:$0xff]
    %v688 = vld [vmem:[%s5 + $0x10] sm:$0xff]
    %v689 = vld [vmem:[%s5 + $0x18] sm:$0xff]
    %v690 = vld [vmem:[%s5 + $0x20] sm:$0xff]
    %v691 = vld [vmem:[%s5 + $0x28] sm:$0xff]
    %v692 = vld [vmem:[%s5 + $0x30] sm:$0xff]
    %v693 = vld [vmem:[%s5 + $0x38] sm:$0xff]
    %v694 = vld [vmem:[%s5 + $0x40] sm:$0xff]
    %v695 = vld [vmem:[%s5 + $0x48] sm:$0xff]
    %v696 = vld [vmem:[%s5 + $0x50] sm:$0xff]
    %v697 = vld [vmem:[%s5 + $0x58] sm:$0xff]
    %v698 = vld [vmem:[%s5 + $0x60] sm:$0xff]
    %v699 = vld [vmem:[%s5 + $0x68] sm:$0xff]
    %v700 = vld [vmem:[%s5 + $0x70] sm:$0xff]
    %v701 = vld [vmem:[%s5 + $0x78] sm:$0xff]
    %v702 = vld [vmem:[%s5 + $0x80] sm:$0xff]
    %v703 = vld [vmem:[%s5 + $0x88] sm:$0xff]
    %v704 = vld [vmem:[%s5 + $0x90] sm:$0xff]
    %v705 = vld [vmem:[%s5 + $0x98] sm:$0xff]
    %v706 = vld [vmem:[%s5 + $0xa0] sm:$0xff]
    %v707 = vld [vmem:[%s5 + $0xa8] sm:$0xff]
    %v708 = vld [vmem:[%s5 + $0xb0] sm:$0xff]
    %v709 = vld [vmem:[%s5 + $0xb8] sm:$0xff]
    %v710 = vld [vmem:[%s5 + $0xc0] sm:$0xff]
    %v711 = vld [vmem:[%s5 + $0xc8] sm:$0xff]
    %v712 = vld [vmem:[%s5 + $0xd0] sm:$0xff]
    %v713 = vld [vmem:[%s5 + $0xd8] sm:$0xff]
    %v714 = vld [vmem:[%s5 + $0xe0] sm:$0xff]
    %v715 = vld [vmem:[%s5 + $0xe8] sm:$0xff]
    %v716 = vld [vmem:[%s5 + $0xf0] sm:$0xff]
    %v717 = vld [vmem:[%s5 + $0xf8] sm:$0xff]
    %v718 = vld [vmem:[%s5 + $0x100] sm:$0xff]
    %v719 = vld [vmem:[%s5 + $0x108] sm:$0xff]
    %v720 = vld [vmem:[%s5 + $0x110] sm:$0xff]
    %v721 = vld [vmem:[%s5 + $0x118] sm:$0xff]
    %v722 = vld [vmem:[%s5 + $0x120] sm:$0xff]
    %v723 = vld [vmem:[%s5 + $0x128] sm:$0xff]
    %v724 = vld [vmem:[%s5 + $0x130] sm:$0xff]
    %v725 = vld [vmem:[%s5 + $0x138] sm:$0xff]
    %v726 = vld [vmem:[%s5 + $0x140] sm:$0xff]
    %v727 = vld [vmem:[%s5 + $0x148] sm:$0xff]
    %v728 = vld [vmem:[%s5 + $0x150] sm:$0xff]
    %v729 = vld [vmem:[%s5 + $0x158] sm:$0xff]
    %v730 = vld [vmem:[%s5 + $0x160] sm:$0xff]
    %v731 = vld [vmem:[%s5 + $0x168] sm:$0xff]
    %v732 = vld [vmem:[%s5 + $0x170] sm:$0xff]
    %v733 = vld [vmem:[%s5 + $0x178] sm:$0xff]
    %v734 = vld [vmem:[%s5 + $0x180] sm:$0xff]
    %v735 = vld [vmem:[%s5 + $0x188] sm:$0xff]
    %v736 = vld [vmem:[%s5 + $0x190] sm:$0xff]
    %v737 = vld [vmem:[%s5 + $0x198] sm:$0xff]
    %v738 = vld [vmem:[%s5 + $0x1a0] sm:$0xff]
    %v739 = vld [vmem:[%s5 + $0x1a8] sm:$0xff]
    %v740 = vld [vmem:[%s5 + $0x1b0] sm:$0xff]
    %v741 = vld [vmem:[%s5 + $0x1b8] sm:$0xff]
    %v742 = vld [vmem:[%s5 + $0x1c0] sm:$0xff]
    %v743 = vld [vmem:[%s5 + $0x1c8] sm:$0xff]
    %v744 = vld [vmem:[%s5 + $0x1d0] sm:$0xff]
    %v745 = vld [vmem:[%s5 + $0x1d8] sm:$0xff]
    %v746 = vld [vmem:[%s5 + $0x1e0] sm:$0xff]
    %v747 = vld [vmem:[%s5 + $0x1e8] sm:$0xff]
    %v748 = vld [vmem:[%s5 + $0x1f0] sm:$0xff]
    %v749 = vld [vmem:[%s5 + $0x1f8] sm:$0xff]
    %v750 = vld [vmem:[%s5 + $0x200] sm:$0xff]
    %v751 = vld [vmem:[%s5 + $0x208] sm:$0xff]
    %v752 = vld [vmem:[%s5 + $0x210] sm:$0xff]
    %v753 = vld [vmem:[%s5 + $0x218] sm:$0xff]
    %v754 = vld [vmem:[%s5 + $0x220] sm:$0xff]
    %v755 = vld [vmem:[%s5 + $0x228] sm:$0xff]
    %v756 = vld [vmem:[%s5 + $0x230] sm:$0xff]
    %v757 = vld [vmem:[%s5 + $0x238] sm:$0xff]
    %v758 = vld [vmem:[%s5 + $0x240] sm:$0xff]
    %v759 = vld [vmem:[%s5 + $0x248] sm:$0xff]
    %v760 = vld [vmem:[%s5 + $0x250] sm:$0xff]
    %v761 = vld [vmem:[%s5 + $0x258] sm:$0xff]
    %v762 = vld [vmem:[%s5 + $0x260] sm:$0xff]
    %v763 = vld [vmem:[%s5 + $0x268] sm:$0xff]
    %v764 = vld [vmem:[%s5 + $0x270] sm:$0xff]
    %v765 = vld [vmem:[%s5 + $0x278] sm:$0xff]
    %v766 = vld [vmem:[%s5 + $0x280] sm:$0xff]
    %v767 = vld [vmem:[%s5 + $0x288] sm:$0xff]
    %v768 = vld [vmem:[%s5 + $0x290] sm:$0xff]
    %v769 = vld [vmem:[%s5 + $0x298] sm:$0xff]
    %v770 = vld [vmem:[%s5 + $0x2a0] sm:$0xff]
    %v771 = vld [vmem:[%s5 + $0x2a8] sm:$0xff]
    %v772 = vld [vmem:[%s5 + $0x2b0] sm:$0xff]
    %v773 = vld [vmem:[%s5 + $0x2b8] sm:$0xff]
    %v774 = vld [vmem:[%s5 + $0x2c0] sm:$0xff]
    %v775 = vld [vmem:[%s5 + $0x2c8] sm:$0xff]
    %v776 = vld [vmem:[%s5 + $0x2d0] sm:$0xff]
    %v777 = vld [vmem:[%s5 + $0x2d8] sm:$0xff]
    %v778 = vld [vmem:[%s5 + $0x2e0] sm:$0xff]
    %v779 = vld [vmem:[%s5 + $0x2e8] sm:$0xff]
    %v780 = vld [vmem:[%s5 + $0x2f0] sm:$0xff]
    %v781 = vld [vmem:[%s5 + $0x2f8] sm:$0xff]
    %v782 = vld [vmem:[%s5 + $0x300] sm:$0xff]
    %v783 = vld [vmem:[%s5 + $0x308] sm:$0xff]
    %v784 = vld [vmem:[%s5 + $0x310] sm:$0xff]
    %v785 = vld [vmem:[%s5 + $0x318] sm:$0xff]
    %v786 = vld [vmem:[%s5 + $0x320] sm:$0xff]
    %v787 = vld [vmem:[%s5 + $0x328] sm:$0xff]
    %v788 = vld [vmem:[%s5 + $0x330] sm:$0xff]
    %v789 = vld [vmem:[%s5 + $0x338] sm:$0xff]
    %v790 = vld [vmem:[%s5 + $0x340] sm:$0xff]
    %v791 = vld [vmem:[%s5 + $0x348] sm:$0xff]
    %v792 = vld [vmem:[%s5 + $0x350] sm:$0xff]
    %v793 = vld [vmem:[%s5 + $0x358] sm:$0xff]
    %v794 = vld [vmem:[%s5 + $0x360] sm:$0xff]
    %v795 = vld [vmem:[%s5 + $0x368] sm:$0xff]
    %v796 = vld [vmem:[%s5 + $0x370] sm:$0xff]
    %v797 = vld [vmem:[%s5 + $0x378] sm:$0xff]
    %v798 = vld [vmem:[%s5 + $0x380] sm:$0xff]
    %v799 = vld [vmem:[%s5 + $0x388] sm:$0xff]
    %v800 = vld [vmem:[%s5 + $0x390] sm:$0xff]
    %v801 = vld [vmem:[%s5 + $0x398] sm:$0xff]
    %v802 = vld [vmem:[%s5 + $0x3a0] sm:$0xff]
    %v803 = vld [vmem:[%s5 + $0x3a8] sm:$0xff]
    %v804 = vld [vmem:[%s5 + $0x3b0] sm:$0xff]
    %v805 = vld [vmem:[%s5 + $0x3b8] sm:$0xff]
    %v806 = vld [vmem:[%s5 + $0x3c0] sm:$0xff]
    %v807 = vld [vmem:[%s5 + $0x3c8] sm:$0xff]
    %v808 = vld [vmem:[%s5 + $0x3d0] sm:$0xff]
    %v809 = vld [vmem:[%s5 + $0x3d8] sm:$0xff]
    %v810 = vld [vmem:[%s5 + $0x3e0] sm:$0xff]
    %v811 = vld [vmem:[%s5 + $0x3e8] sm:$0xff]
    %v812 = vld [vmem:[%s5 + $0x3f0] sm:$0xff]
    %v813 = vld [vmem:[%s5 + $0x3f8] sm:$0xff]
    %v814 = vld [vmem:[%s7] sm:$0x3]
    %v816 = vlaneseq
    %v817 = vshrl.u32 %v816, 7
    %v818 = vsub.s32 0, %v817
    %v819 = vrot.slane %v814, %v818
    %v820 = vlaneseq
    %v821 = vshrl.u32 %v820, 7
    %v822 = vsub.s32 1, %v821
    %v823 = vrot.slane %v814, %v822
    %826 = vmatprep.subr.mxu0 %v717
    %827 = vmatpush1.msra.mxu0 %v716
    %828 = vmatprep.subr.mxu0 %v715
    %829 = vmatpush1.msra.mxu0 %v714
    %830 = vmatprep.subr.mxu0 %v713
    %831 = vmatpush1.msra.mxu0 %v712
    %832 = vmatprep.subr.mxu0 %v711
    %833 = vmatpush1.msra.mxu0 %v710
    %834 = vmatprep.subr.mxu0 %v709
    %835 = vmatpush1.msra.mxu0 %v708
    %836 = vmatprep.subr.mxu0 %v707
    %837 = vmatpush1.msra.mxu0 %v706
    %838 = vmatprep.subr.mxu0 %v705
    %839 = vmatpush1.msra.mxu0 %v704
    %840 = vmatprep.subr.mxu0 %v703
    %841 = vmatpush1.msra.mxu0 %v702
    %842 = vmatprep.subr.mxu0 %v701
    %843 = vmatpush1.msra.mxu0 %v700
    %844 = vmatprep.subr.mxu0 %v699
    %845 = vmatpush1.msra.mxu0 %v698
    %846 = vmatprep.subr.mxu0 %v697
    %847 = vmatpush1.msra.mxu0 %v696
    %848 = vmatprep.subr.mxu0 %v695
    %849 = vmatpush1.msra.mxu0 %v694
    %850 = vmatprep.subr.mxu0 %v693
    %851 = vmatpush1.msra.mxu0 %v692
    %852 = vmatprep.subr.mxu0 %v691
    %853 = vmatpush1.msra.mxu0 %v690
    %854 = vmatprep.subr.mxu0 %v689
    %855 = vmatpush1.msra.mxu0 %v688
    %856 = vmatprep.subr.mxu0 %v687
    %857 = vmatpush1.msra.mxu0 %v686
    %858 = vmatprep.subr.mxu0 %v749
    %859 = vmatpush2.msra.mxu0 %v748
    %860 = vmatprep.subr.mxu0 %v747
    %861 = vmatpush2.msra.mxu0 %v746
    %862 = vmatprep.subr.mxu0 %v745
    %863 = vmatpush2.msra.mxu0 %v744
    %864 = vmatprep.subr.mxu0 %v743
    %865 = vmatpush2.msra.mxu0 %v742
    %866 = vmatprep.subr.mxu0 %v741
    %867 = vmatpush2.msra.mxu0 %v740
    %868 = vmatprep.subr.mxu0 %v739
    %869 = vmatpush2.msra.mxu0 %v738
    %870 = vmatprep.subr.mxu0 %v737
    %871 = vmatpush2.msra.mxu0 %v736
    %872 = vmatprep.subr.mxu0 %v735
    %873 = vmatpush2.msra.mxu0 %v734
    %874 = vmatprep.subr.mxu0 %v733
    %875 = vmatpush2.msra.mxu0 %v732
    %876 = vmatprep.subr.mxu0 %v731
    %877 = vmatpush2.msra.mxu0 %v730
    %878 = vmatprep.subr.mxu0 %v729
    %879 = vmatpush2.msra.mxu0 %v728
    %880 = vmatprep.subr.mxu0 %v727
    %881 = vmatpush2.msra.mxu0 %v726
    %882 = vmatprep.subr.mxu0 %v725
    %883 = vmatpush2.msra.mxu0 %v724
    %884 = vmatprep.subr.mxu0 %v723
    %885 = vmatpush2.msra.mxu0 %v722
    %886 = vmatprep.subr.mxu0 %v721
    %887 = vmatpush2.msra.mxu0 %v720
    %888 = vmatprep.subr.mxu0 %v719
    %889 = vmatpush2.msra.mxu0 %v718
    %890 = vmatprep.mubr.f32.mxu0 %v631
    %891 = vmatmul.mubr.f32.gmra.mxu0 %v630
    %v892 = vpop.f32.mrf.mxu0
    %v893 = vadd.f32 %v819, %v892
    %v894 = vpop.f32.mrf.mxu0
    %v895 = vadd.f32 %v823, %v894
    %896 = vmatprep.mubr.f32.mxu0 %v635
    %897 = vmatmul.mubr.f32.gmra.mxu0 %v634
    %v898 = vpop.f32.mrf.mxu0
    %v899 = vadd.f32 %v819, %v898
    %v900 = vpop.f32.mrf.mxu0
    %v901 = vadd.f32 %v823, %v900
    %902 = vmatprep.mubr.f32.mxu0 %v639
    %903 = vmatmul.mubr.f32.gmra.mxu0 %v638
    %v904 = vpop.f32.mrf.mxu0
    %v905 = vadd.f32 %v819, %v904
    %v906 = vpop.f32.mrf.mxu0
    %v907 = vadd.f32 %v823, %v906
    %908 = vmatprep.mubr.f32.mxu0 %v643
    %909 = vmatmul.mubr.f32.gmra.mxu0 %v642
    %v910 = vpop.f32.mrf.mxu0
    %v911 = vadd.f32 %v819, %v910
    %v912 = vpop.f32.mrf.mxu0
    %v913 = vadd.f32 %v823, %v912
    %914 = vmatprep.mubr.f32.mxu0 %v647
    %915 = vmatmul.mubr.f32.gmra.mxu0 %v646
    %v916 = vpop.f32.mrf.mxu0
    %v917 = vadd.f32 %v819, %v916
    %v918 = vpop.f32.mrf.mxu0
    %v919 = vadd.f32 %v823, %v918
    %920 = vmatprep.mubr.f32.mxu0 %v651
    %921 = vmatmul.mubr.f32.gmra.mxu0 %v650
    %v922 = vpop.f32.mrf.mxu0
    %v923 = vadd.f32 %v819, %v922
    %v924 = vpop.f32.mrf.mxu0
    %v925 = vadd.f32 %v823, %v924
    %926 = vmatprep.mubr.f32.mxu0 %v655
    %927 = vmatmul.mubr.f32.gmra.mxu0 %v654
    %v928 = vpop.f32.mrf.mxu0
    %v929 = vadd.f32 %v819, %v928
    %v930 = vpop.f32.mrf.mxu0
    %v931 = vadd.f32 %v823, %v930
    %932 = vmatprep.mubr.f32.mxu0 %v659
    %933 = vmatmul.mubr.f32.gmra.mxu0 %v658
    %v934 = vpop.f32.mrf.mxu0
    %v935 = vadd.f32 %v819, %v934
    %v936 = vpop.f32.mrf.mxu0
    %v937 = vadd.f32 %v823, %v936
    %938 = vmatprep.mubr.f32.mxu0 %v663
    %939 = vmatmul.mubr.f32.gmra.mxu0 %v662
    %v940 = vpop.f32.mrf.mxu0
    %v941 = vadd.f32 %v819, %v940
    %v942 = vpop.f32.mrf.mxu0
    %v943 = vadd.f32 %v823, %v942
    %944 = vmatprep.mubr.f32.mxu0 %v667
    %945 = vmatmul.mubr.f32.gmra.mxu0 %v666
    %v946 = vpop.f32.mrf.mxu0
    %v947 = vadd.f32 %v819, %v946
    %v948 = vpop.f32.mrf.mxu0
    %v949 = vadd.f32 %v823, %v948
    %950 = vmatprep.mubr.f32.mxu0 %v671
    %951 = vmatmul.mubr.f32.gmra.mxu0 %v670
    %v952 = vpop.f32.mrf.mxu0
    %v953 = vadd.f32 %v819, %v952
    %v954 = vpop.f32.mrf.mxu0
    %v955 = vadd.f32 %v823, %v954
    %956 = vmatprep.mubr.f32.mxu0 %v675
    %957 = vmatmul.mubr.f32.gmra.mxu0 %v674
    %v958 = vpop.f32.mrf.mxu0
    %v959 = vadd.f32 %v819, %v958
    %v960 = vpop.f32.mrf.mxu0
    %v961 = vadd.f32 %v823, %v960
    %962 = vmatprep.mubr.f32.mxu0 %v679
    %963 = vmatmul.mubr.f32.gmra.mxu0 %v678
    %v964 = vpop.f32.mrf.mxu0
    %v965 = vadd.f32 %v819, %v964
    %v966 = vpop.f32.mrf.mxu0
    %v967 = vadd.f32 %v823, %v966
    %968 = vmatprep.mubr.f32.mxu0 %v683
    %969 = vmatmul.mubr.f32.gmra.mxu0 %v682
    %v970 = vpop.f32.mrf.mxu0
    %v971 = vadd.f32 %v819, %v970
    %v972 = vpop.f32.mrf.mxu0
    %v973 = vadd.f32 %v823, %v972
    %974 = vdwg.mxu0
    %975 = vmatprep.subr.mxu0 %v781
    %976 = vmatpush1.msra.mxu0 %v780
    %977 = vmatprep.subr.mxu0 %v779
    %978 = vmatpush1.msra.mxu0 %v778
    %979 = vmatprep.subr.mxu0 %v777
    %980 = vmatpush1.msra.mxu0 %v776
    %981 = vmatprep.subr.mxu0 %v775
    %982 = vmatpush1.msra.mxu0 %v774
    %983 = vmatprep.subr.mxu0 %v773
    %984 = vmatpush1.msra.mxu0 %v772
    %985 = vmatprep.subr.mxu0 %v771
    %986 = vmatpush1.msra.mxu0 %v770
    %987 = vmatprep.subr.mxu0 %v769
    %988 = vmatpush1.msra.mxu0 %v768
    %989 = vmatprep.subr.mxu0 %v767
    %990 = vmatpush1.msra.mxu0 %v766
    %991 = vmatprep.subr.mxu0 %v765
    %992 = vmatpush1.msra.mxu0 %v764
    %993 = vmatprep.subr.mxu0 %v763
    %994 = vmatpush1.msra.mxu0 %v762
    %995 = vmatprep.subr.mxu0 %v761
    %996 = vmatpush1.msra.mxu0 %v760
    %997 = vmatprep.subr.mxu0 %v759
    %998 = vmatpush1.msra.mxu0 %v758
    %999 = vmatprep.subr.mxu0 %v757
    %1000 = vmatpush1.msra.mxu0 %v756
    %1001 = vmatprep.subr.mxu0 %v755
    %1002 = vmatpush1.msra.mxu0 %v754
    %1003 = vmatprep.subr.mxu0 %v753
    %1004 = vmatpush1.msra.mxu0 %v752
    %1005 = vmatprep.subr.mxu0 %v751
    %1006 = vmatpush1.msra.mxu0 %v750
    %1007 = vmatprep.subr.mxu0 %v813
    %1008 = vmatpush2.msra.mxu0 %v812
    %1009 = vmatprep.subr.mxu0 %v811
    %1010 = vmatpush2.msra.mxu0 %v810
    %1011 = vmatprep.subr.mxu0 %v809
    %1012 = vmatpush2.msra.mxu0 %v808
    %1013 = vmatprep.subr.mxu0 %v807
    %1014 = vmatpush2.msra.mxu0 %v806
    %1015 = vmatprep.subr.mxu0 %v805
    %1016 = vmatpush2.msra.mxu0 %v804
    %1017 = vmatprep.subr.mxu0 %v803
    %1018 = vmatpush2.msra.mxu0 %v802
    %1019 = vmatprep.subr.mxu0 %v801
    %1020 = vmatpush2.msra.mxu0 %v800
    %1021 = vmatprep.subr.mxu0 %v799
    %1022 = vmatpush2.msra.mxu0 %v798
    %1023 = vmatprep.subr.mxu0 %v797
    %1024 = vmatpush2.msra.mxu0 %v796
    %1025 = vmatprep.subr.mxu0 %v795
    %1026 = vmatpush2.msra.mxu0 %v794
    %1027 = vmatprep.subr.mxu0 %v793
    %1028 = vmatpush2.msra.mxu0 %v792
    %1029 = vmatprep.subr.mxu0 %v791
    %1030 = vmatpush2.msra.mxu0 %v790
    %1031 = vmatprep.subr.mxu0 %v789
    %1032 = vmatpush2.msra.mxu0 %v788
    %1033 = vmatprep.subr.mxu0 %v787
    %1034 = vmatpush2.msra.mxu0 %v786
    %1035 = vmatprep.subr.mxu0 %v785
    %1036 = vmatpush2.msra.mxu0 %v784
    %1037 = vmatprep.subr.mxu0 %v783
    %1038 = vmatpush2.msra.mxu0 %v782
    %1039 = vmatprep.mubr.f32.mxu0 %v633
    %1040 = vmatmul.mubr.f32.gmra.mxu0 %v632
    %v1041 = vpop.f32.mrf.mxu0
    %v1042 = vadd.f32 %v893, %v1041
    %v1043 = vpop.f32.mrf.mxu0
    %v1044 = vadd.f32 %v895, %v1043
    %1045 = vmatprep.mubr.f32.mxu0 %v637
    %1046 = vmatmul.mubr.f32.gmra.mxu0 %v636
    %v1047 = vpop.f32.mrf.mxu0
    %v1048 = vadd.f32 %v899, %v1047
    %v1049 = vpop.f32.mrf.mxu0
    %v1050 = vadd.f32 %v901, %v1049
    %1051 = vmatprep.mubr.f32.mxu0 %v641
    %1052 = vmatmul.mubr.f32.gmra.mxu0 %v640
    %v1053 = vpop.f32.mrf.mxu0
    %v1054 = vadd.f32 %v905, %v1053
    %v1055 = vpop.f32.mrf.mxu0
    %v1056 = vadd.f32 %v907, %v1055
    %1057 = vmatprep.mubr.f32.mxu0 %v645
    %1058 = vmatmul.mubr.f32.gmra.mxu0 %v644
    %v1059 = vpop.f32.mrf.mxu0
    %v1060 = vadd.f32 %v911, %v1059
    %v1061 = vpop.f32.mrf.mxu0
    %v1062 = vadd.f32 %v913, %v1061
    %1063 = vmatprep.mubr.f32.mxu0 %v649
    %1064 = vmatmul.mubr.f32.gmra.mxu0 %v648
    %v1065 = vpop.f32.mrf.mxu0
    %v1066 = vadd.f32 %v917, %v1065
    %v1067 = vpop.f32.mrf.mxu0
    %v1068 = vadd.f32 %v919, %v1067
    %1069 = vmatprep.mubr.f32.mxu0 %v653
    %1070 = vmatmul.mubr.f32.gmra.mxu0 %v652
    %v1071 = vpop.f32.mrf.mxu0
    %v1072 = vadd.f32 %v923, %v1071
    %v1073 = vpop.f32.mrf.mxu0
    %v1074 = vadd.f32 %v925, %v1073
    %1075 = vmatprep.mubr.f32.mxu0 %v657
    %1076 = vmatmul.mubr.f32.gmra.mxu0 %v656
    %v1077 = vpop.f32.mrf.mxu0
    %v1078 = vadd.f32 %v929, %v1077
    %v1079 = vpop.f32.mrf.mxu0
    %v1080 = vadd.f32 %v931, %v1079
    %1081 = vmatprep.mubr.f32.mxu0 %v661
    %1082 = vmatmul.mubr.f32.gmra.mxu0 %v660
    %v1083 = vpop.f32.mrf.mxu0
    %v1084 = vadd.f32 %v935, %v1083
    %v1085 = vpop.f32.mrf.mxu0
    %v1086 = vadd.f32 %v937, %v1085
    %1087 = vmatprep.mubr.f32.mxu0 %v665
    %1088 = vmatmul.mubr.f32.gmra.mxu0 %v664
    %v1089 = vpop.f32.mrf.mxu0
    %v1090 = vadd.f32 %v941, %v1089
    %v1091 = vpop.f32.mrf.mxu0
    %v1092 = vadd.f32 %v943, %v1091
    %1093 = vmatprep.mubr.f32.mxu0 %v669
    %1094 = vmatmul.mubr.f32.gmra.mxu0 %v668
    %v1095 = vpop.f32.mrf.mxu0
    %v1096 = vadd.f32 %v947, %v1095
    %v1097 = vpop.f32.mrf.mxu0
    %v1098 = vadd.f32 %v949, %v1097
    %1099 = vmatprep.mubr.f32.mxu0 %v673
    %1100 = vmatmul.mubr.f32.gmra.mxu0 %v672
    %v1101 = vpop.f32.mrf.mxu0
    %v1102 = vadd.f32 %v953, %v1101
    %v1103 = vpop.f32.mrf.mxu0
    %v1104 = vadd.f32 %v955, %v1103
    %1105 = vmatprep.mubr.f32.mxu0 %v677
    %1106 = vmatmul.mubr.f32.gmra.mxu0 %v676
    %v1107 = vpop.f32.mrf.mxu0
    %v1108 = vadd.f32 %v959, %v1107
    %v1109 = vpop.f32.mrf.mxu0
    %v1110 = vadd.f32 %v961, %v1109
    %1111 = vmatprep.mubr.f32.mxu0 %v681
    %1112 = vmatmul.mubr.f32.gmra.mxu0 %v680
    %v1113 = vpop.f32.mrf.mxu0
    %v1114 = vadd.f32 %v965, %v1113
    %v1115 = vpop.f32.mrf.mxu0
    %v1116 = vadd.f32 %v967, %v1115
    %1117 = vmatprep.mubr.f32.mxu0 %v685
    %1118 = vmatmul.mubr.f32.gmra.mxu0 %v684
    %v1119 = vpop.f32.mrf.mxu0
    %v1120 = vadd.f32 %v971, %v1119
    %v1121 = vpop.f32.mrf.mxu0
    %v1122 = vadd.f32 %v973, %v1121
    %1123 = vdwg.mxu0
    %1124 = vst [vmem:[#allocation3] sm:$0xff] %v1042
    %1125 = vst [vmem:[#allocation3 + $0x8] sm:$0xff] %v1044
    %1126 = vst [vmem:[#allocation3 + $0x10] sm:$0xff] %v1048
    %1127 = vst [vmem:[#allocation3 + $0x18] sm:$0xff] %v1050
    %1128 = vst [vmem:[#allocation3 + $0x20] sm:$0xff] %v1054
    %1129 = vst [vmem:[#allocation3 + $0x28] sm:$0xff] %v1056
    %1130 = vst [vmem:[#allocation3 + $0x30] sm:$0xff] %v1060
    %1131 = vst [vmem:[#allocation3 + $0x38] sm:$0xff] %v1062
    %1132 = vst [vmem:[#allocation3 + $0x40] sm:$0xff] %v1066
    %1133 = vst [vmem:[#allocation3 + $0x48] sm:$0xff] %v1068
    %1134 = vst [vmem:[#allocation3 + $0x50] sm:$0xff] %v1072
    %1135 = vst [vmem:[#allocation3 + $0x58] sm:$0xff] %v1074
    %1136 = vst [vmem:[#allocation3 + $0x60] sm:$0xff] %v1078
    %1137 = vst [vmem:[#allocation3 + $0x68] sm:$0xff] %v1080
    %1138 = vst [vmem:[#allocation3 + $0x70] sm:$0xff] %v1084
    %1139 = vst [vmem:[#allocation3 + $0x78] sm:$0xff] %v1086
    %1140 = vst [vmem:[#allocation3 + $0x80] sm:$0xff] %v1090
    %1141 = vst [vmem:[#allocation3 + $0x88] sm:$0xff] %v1092
    %1142 = vst [vmem:[#allocation3 + $0x90] sm:$0xff] %v1096
    %1143 = vst [vmem:[#allocation3 + $0x98] sm:$0xff] %v1098
    %1144 = vst [vmem:[#allocation3 + $0xa0] sm:$0xff] %v1102
    %1145 = vst [vmem:[#allocation3 + $0xa8] sm:$0xff] %v1104
    %1146 = vst [vmem:[#allocation3 + $0xb0] sm:$0xff] %v1108
    %1147 = vst [vmem:[#allocation3 + $0xb8] sm:$0xff] %v1110
    %1148 = vst [vmem:[#allocation3 + $0xc0] sm:$0xff] %v1114
    %1149 = vst [vmem:[#allocation3 + $0xc8] sm:$0xff] %v1116
    %1150 = vst [vmem:[#allocation3 + $0xd0] sm:$0xff] %v1120
    %1151 = vst [vmem:[#allocation3 + $0xd8] sm:$0xff] %v1122
    %s1152 = sld [smem:[#allocation9]]
    %v1153 = vld [vmem:[#allocation2] sm:$0xff]
    %v1154 = vld [vmem:[#allocation2 + $0x8] sm:$0xff]
    %v1155 = vld [vmem:[#allocation2 + $0x10] sm:$0xff]
    %v1156 = vld [vmem:[#allocation2 + $0x18] sm:$0xff]
    %v1157 = vld [vmem:[#allocation2 + $0x20] sm:$0xff]
    %v1158 = vld [vmem:[#allocation2 + $0x28] sm:$0xff]
    %v1159 = vld [vmem:[#allocation2 + $0x30] sm:$0xff]
    %v1160 = vld [vmem:[#allocation2 + $0x38] sm:$0xff]
    %v1161 = vstv %s1152
    %v1162 = vmul.f32 %v1161, %v1153
    %v1163 = vmul.f32 %v1161, %v1154
    %v1164 = vmul.f32 %v1161, %v1155
    %v1165 = vmul.f32 %v1161, %v1156
    %v1166 = vmul.f32 %v1161, %v1157
    %v1167 = vmul.f32 %v1161, %v1158
    %v1168 = vmul.f32 %v1161, %v1159
    %v1169 = vmul.f32 %v1161, %v1160
    %s1170 = sld [smem:[#allocation9 + $0x1]]
    %v1171 = vld [vmem:[#allocation2 + $0x40] sm:$0xff]
    %v1172 = vld [vmem:[#allocation2 + $0x48] sm:$0xff]
    %v1173 = vld [vmem:[#allocation2 + $0x50] sm:$0xff]
    %v1174 = vld [vmem:[#allocation2 + $0x58] sm:$0xff]
    %v1175 = vld [vmem:[#allocation2 + $0x60] sm:$0xff]
    %v1176 = vld [vmem:[#allocation2 + $0x68] sm:$0xff]
    %v1177 = vld [vmem:[#allocation2 + $0x70] sm:$0xff]
    %v1178 = vld [vmem:[#allocation2 + $0x78] sm:$0xff]
    %v1179 = vstv %s1170
    %v1180 = vmul.f32 %v1179, %v1171
    %v1181 = vmul.f32 %v1179, %v1172
    %v1182 = vmul.f32 %v1179, %v1173
    %v1183 = vmul.f32 %v1179, %v1174
    %v1184 = vmul.f32 %v1179, %v1175
    %v1185 = vmul.f32 %v1179, %v1176
    %v1186 = vmul.f32 %v1179, %v1177
    %v1187 = vmul.f32 %v1179, %v1178
    %v1188 = vadd.f32 %v1162, %v1180
    %v1189 = vadd.f32 %v1163, %v1181
    %v1190 = vadd.f32 %v1164, %v1182
    %v1191 = vadd.f32 %v1165, %v1183
    %v1192 = vadd.f32 %v1166, %v1184
    %v1193 = vadd.f32 %v1167, %v1185
    %v1194 = vadd.f32 %v1168, %v1186
    %v1195 = vadd.f32 %v1169, %v1187
    %s1196 = sld [smem:[#allocation9 + $0x2]]
    %v1197 = vld [vmem:[#allocation2 + $0x80] sm:$0xff]
    %v1198 = vld [vmem:[#allocation2 + $0x88] sm:$0xff]
    %v1199 = vld [vmem:[#allocation2 + $0x90] sm:$0xff]
    %v1200 = vld [vmem:[#allocation2 + $0x98] sm:$0xff]
    %v1201 = vld [vmem:[#allocation2 + $0xa0] sm:$0xff]
    %v1202 = vld [vmem:[#allocation2 + $0xa8] sm:$0xff]
    %v1203 = vld [vmem:[#allocation2 + $0xb0] sm:$0xff]
    %v1204 = vld [vmem:[#allocation2 + $0xb8] sm:$0xff]
    %v1205 = vstv %s1196
    %v1206 = vmul.f32 %v1205, %v1197
    %v1207 = vmul.f32 %v1205, %v1198
    %v1208 = vmul.f32 %v1205, %v1199
    %v1209 = vmul.f32 %v1205, %v1200
    %v1210 = vmul.f32 %v1205, %v1201
    %v1211 = vmul.f32 %v1205, %v1202
    %v1212 = vmul.f32 %v1205, %v1203
    %v1213 = vmul.f32 %v1205, %v1204
    %v1214 = vadd.f32 %v1188, %v1206
    %v1215 = vadd.f32 %v1189, %v1207
    %v1216 = vadd.f32 %v1190, %v1208
    %v1217 = vadd.f32 %v1191, %v1209
    %v1218 = vadd.f32 %v1192, %v1210
    %v1219 = vadd.f32 %v1193, %v1211
    %v1220 = vadd.f32 %v1194, %v1212
    %v1221 = vadd.f32 %v1195, %v1213
    %s1222 = sld [smem:[#allocation9 + $0x3]]
    %v1223 = vld [vmem:[#allocation2 + $0xc0] sm:$0xff]
    %v1224 = vld [vmem:[#allocation2 + $0xc8] sm:$0xff]
    %v1225 = vld [vmem:[#allocation2 + $0xd0] sm:$0xff]
    %v1226 = vld [vmem:[#allocation2 + $0xd8] sm:$0xff]
    %v1227 = vld [vmem:[#allocation2 + $0xe0] sm:$0xff]
    %v1228 = vld [vmem:[#allocation2 + $0xe8] sm:$0xff]
    %v1229 = vld [vmem:[#allocation2 + $0xf0] sm:$0xff]
    %v1230 = vld [vmem:[#allocation2 + $0xf8] sm:$0xff]
    %v1231 = vstv %s1222
    %v1232 = vmul.f32 %v1231, %v1223
    %v1233 = vmul.f32 %v1231, %v1224
    %v1234 = vmul.f32 %v1231, %v1225
    %v1235 = vmul.f32 %v1231, %v1226
    %v1236 = vmul.f32 %v1231, %v1227
    %v1237 = vmul.f32 %v1231, %v1228
    %v1238 = vmul.f32 %v1231, %v1229
    %v1239 = vmul.f32 %v1231, %v1230
    %v1240 = vadd.f32 %v1214, %v1232
    %v1241 = vadd.f32 %v1215, %v1233
    %v1242 = vadd.f32 %v1216, %v1234
    %v1243 = vadd.f32 %v1217, %v1235
    %v1244 = vadd.f32 %v1218, %v1236
    %v1245 = vadd.f32 %v1219, %v1237
    %v1246 = vadd.f32 %v1220, %v1238
    %v1247 = vadd.f32 %v1221, %v1239
    %s1248 = sld [smem:[#allocation9 + $0x4]]
    %v1249 = vld [vmem:[#allocation2 + $0x100] sm:$0xff]
    %v1250 = vld [vmem:[#allocation2 + $0x108] sm:$0xff]
    %v1251 = vld [vmem:[#allocation2 + $0x110] sm:$0xff]
    %v1252 = vld [vmem:[#allocation2 + $0x118] sm:$0xff]
    %v1253 = vld [vmem:[#allocation2 + $0x120] sm:$0xff]
    %v1254 = vld [vmem:[#allocation2 + $0x128] sm:$0xff]
    %v1255 = vld [vmem:[#allocation2 + $0x130] sm:$0xff]
    %v1256 = vld [vmem:[#allocation2 + $0x138] sm:$0xff]
    %v1257 = vstv %s1248
    %v1258 = vmul.f32 %v1257, %v1249
    %v1259 = vmul.f32 %v1257, %v1250
    %v1260 = vmul.f32 %v1257, %v1251
    %v1261 = vmul.f32 %v1257, %v1252
    %v1262 = vmul.f32 %v1257, %v1253
    %v1263 = vmul.f32 %v1257, %v1254
    %v1264 = vmul.f32 %v1257, %v1255
    %v1265 = vmul.f32 %v1257, %v1256
    %v1266 = vadd.f32 %v1240, %v1258
    %v1267 = vadd.f32 %v1241, %v1259
    %v1268 = vadd.f32 %v1242, %v1260
    %v1269 = vadd.f32 %v1243, %v1261
    %v1270 = vadd.f32 %v1244, %v1262
    %v1271 = vadd.f32 %v1245, %v1263
    %v1272 = vadd.f32 %v1246, %v1264
    %v1273 = vadd.f32 %v1247, %v1265
    %s1274 = sld [smem:[#allocation9 + $0x5]]
    %v1275 = vld [vmem:[#allocation2 + $0x140] sm:$0xff]
    %v1276 = vld [vmem:[#allocation2 + $0x148] sm:$0xff]
    %v1277 = vld [vmem:[#allocation2 + $0x150] sm:$0xff]
    %v1278 = vld [vmem:[#allocation2 + $0x158] sm:$0xff]
    %v1279 = vld [vmem:[#allocation2 + $0x160] sm:$0xff]
    %v1280 = vld [vmem:[#allocation2 + $0x168] sm:$0xff]
    %v1281 = vld [vmem:[#allocation2 + $0x170] sm:$0xff]
    %v1282 = vld [vmem:[#allocation2 + $0x178] sm:$0xff]
    %v1283 = vstv %s1274
    %v1284 = vmul.f32 %v1283, %v1275
    %v1285 = vmul.f32 %v1283, %v1276
    %v1286 = vmul.f32 %v1283, %v1277
    %v1287 = vmul.f32 %v1283, %v1278
    %v1288 = vmul.f32 %v1283, %v1279
    %v1289 = vmul.f32 %v1283, %v1280
    %v1290 = vmul.f32 %v1283, %v1281
    %v1291 = vmul.f32 %v1283, %v1282
    %v1292 = vadd.f32 %v1266, %v1284
    %v1293 = vadd.f32 %v1267, %v1285
    %v1294 = vadd.f32 %v1268, %v1286
    %v1295 = vadd.f32 %v1269, %v1287
    %v1296 = vadd.f32 %v1270, %v1288
    %v1297 = vadd.f32 %v1271, %v1289
    %v1298 = vadd.f32 %v1272, %v1290
    %v1299 = vadd.f32 %v1273, %v1291
    %s1300 = sld [smem:[#allocation9 + $0x6]]
    %v1301 = vld [vmem:[#allocation2 + $0x180] sm:$0xff]
    %v1302 = vld [vmem:[#allocation2 + $0x188] sm:$0xff]
    %v1303 = vld [vmem:[#allocation2 + $0x190] sm:$0xff]
    %v1304 = vld [vmem:[#allocation2 + $0x198] sm:$0xff]
    %v1305 = vld [vmem:[#allocation2 + $0x1a0] sm:$0xff]
    %v1306 = vld [vmem:[#allocation2 + $0x1a8] sm:$0xff]
    %v1307 = vld [vmem:[#allocation2 + $0x1b0] sm:$0xff]
    %v1308 = vld [vmem:[#allocation2 + $0x1b8] sm:$0xff]
    %v1309 = vstv %s1300
    %v1310 = vmul.f32 %v1309, %v1301
    %v1311 = vmul.f32 %v1309, %v1302
    %v1312 = vmul.f32 %v1309, %v1303
    %v1313 = vmul.f32 %v1309, %v1304
    %v1314 = vmul.f32 %v1309, %v1305
    %v1315 = vmul.f32 %v1309, %v1306
    %v1316 = vmul.f32 %v1309, %v1307
    %v1317 = vmul.f32 %v1309, %v1308
    %v1318 = vadd.f32 %v1292, %v1310
    %v1319 = vadd.f32 %v1293, %v1311
    %v1320 = vadd.f32 %v1294, %v1312
    %v1321 = vadd.f32 %v1295, %v1313
    %v1322 = vadd.f32 %v1296, %v1314
    %v1323 = vadd.f32 %v1297, %v1315
    %v1324 = vadd.f32 %v1298, %v1316
    %v1325 = vadd.f32 %v1299, %v1317
    %s1326 = sld [smem:[#allocation4]]
    %v1327 = vstv %s1326
    %v1328 = vadd.f32 %v1318, %v1327
    %v1329 = vadd.f32 %v1319, %v1327
    %v1330 = vadd.f32 %v1320, %v1327
    %v1331 = vadd.f32 %v1321, %v1327
    %v1332 = vadd.f32 %v1322, %v1327
    %v1333 = vadd.f32 %v1323, %v1327
    %v1334 = vadd.f32 %v1324, %v1327
    %v1335 = vadd.f32 %v1325, %v1327
    %v1336 = vld [vmem:[%s9] sm:$0xff]
    %v1337 = vld [vmem:[%s9 + $0x8] sm:$0xff]
    %v1338 = vld [vmem:[%s9 + $0x10] sm:$0xff]
    %v1339 = vld [vmem:[%s9 + $0x18] sm:$0xff]
    %v1340 = vld [vmem:[%s9 + $0x20] sm:$0xff]
    %v1341 = vld [vmem:[%s9 + $0x28] sm:$0xff]
    %v1342 = vld [vmem:[%s9 + $0x30] sm:$0xff]
    %v1343 = vld [vmem:[%s9 + $0x38] sm:$0xff]
    %v1344 = vld [vmem:[%s9 + $0x40] sm:$0xff]
    %v1345 = vld [vmem:[%s9 + $0x48] sm:$0xff]
    %v1346 = vld [vmem:[%s9 + $0x50] sm:$0xff]
    %v1347 = vld [vmem:[%s9 + $0x58] sm:$0xff]
    %v1348 = vld [vmem:[%s9 + $0x60] sm:$0xff]
    %v1349 = vld [vmem:[%s9 + $0x68] sm:$0xff]
    %v1350 = vld [vmem:[%s9 + $0x70] sm:$0xff]
    %v1351 = vld [vmem:[%s9 + $0x78] sm:$0xff]
    %v1352 = vld [vmem:[%s9 + $0x80] sm:$0xff]
    %v1353 = vld [vmem:[%s9 + $0x88] sm:$0xff]
    %v1354 = vld [vmem:[%s9 + $0x90] sm:$0xff]
    %v1355 = vld [vmem:[%s9 + $0x98] sm:$0xff]
    %v1356 = vld [vmem:[%s9 + $0xa0] sm:$0xff]
    %v1357 = vld [vmem:[%s9 + $0xa8] sm:$0xff]
    %v1358 = vld [vmem:[%s9 + $0xb0] sm:$0xff]
    %v1359 = vld [vmem:[%s9 + $0xb8] sm:$0xff]
    %v1360 = vld [vmem:[%s9 + $0xc0] sm:$0xff]
    %v1361 = vld [vmem:[%s9 + $0xc8] sm:$0xff]
    %v1362 = vld [vmem:[%s9 + $0xd0] sm:$0xff]
    %v1363 = vld [vmem:[%s9 + $0xd8] sm:$0xff]
    %v1364 = vld [vmem:[%s9 + $0xe0] sm:$0xff]
    %v1365 = vld [vmem:[%s9 + $0xe8] sm:$0xff]
    %v1366 = vld [vmem:[%s9 + $0xf0] sm:$0xff]
    %v1367 = vld [vmem:[%s9 + $0xf8] sm:$0xff]
    %v1368 = vld [vmem:[%s9 + $0x100] sm:$0xff]
    %v1369 = vld [vmem:[%s9 + $0x108] sm:$0xff]
    %v1370 = vld [vmem:[%s9 + $0x110] sm:$0xff]
    %v1371 = vld [vmem:[%s9 + $0x118] sm:$0xff]
    %v1372 = vld [vmem:[%s9 + $0x120] sm:$0xff]
    %v1373 = vld [vmem:[%s9 + $0x128] sm:$0xff]
    %v1374 = vld [vmem:[%s9 + $0x130] sm:$0xff]
    %v1375 = vld [vmem:[%s9 + $0x138] sm:$0xff]
    %v1376 = vld [vmem:[%s9 + $0x140] sm:$0xff]
    %v1377 = vld [vmem:[%s9 + $0x148] sm:$0xff]
    %v1378 = vld [vmem:[%s9 + $0x150] sm:$0xff]
    %v1379 = vld [vmem:[%s9 + $0x158] sm:$0xff]
    %v1380 = vld [vmem:[%s9 + $0x160] sm:$0xff]
    %v1381 = vld [vmem:[%s9 + $0x168] sm:$0xff]
    %v1382 = vld [vmem:[%s9 + $0x170] sm:$0xff]
    %v1383 = vld [vmem:[%s9 + $0x178] sm:$0xff]
    %v1384 = vld [vmem:[%s9 + $0x180] sm:$0xff]
    %v1385 = vld [vmem:[%s9 + $0x188] sm:$0xff]
    %v1386 = vld [vmem:[%s9 + $0x190] sm:$0xff]
    %v1387 = vld [vmem:[%s9 + $0x198] sm:$0xff]
    %v1388 = vld [vmem:[%s9 + $0x1a0] sm:$0xff]
    %v1389 = vld [vmem:[%s9 + $0x1a8] sm:$0xff]
    %v1390 = vld [vmem:[%s9 + $0x1b0] sm:$0xff]
    %v1391 = vld [vmem:[%s9 + $0x1b8] sm:$0xff]
    %v1392 = vld [vmem:[%s9 + $0x1c0] sm:$0xff]
    %v1393 = vld [vmem:[%s9 + $0x1c8] sm:$0xff]
    %v1394 = vld [vmem:[%s9 + $0x1d0] sm:$0xff]
    %v1395 = vld [vmem:[%s9 + $0x1d8] sm:$0xff]
    %v1396 = vld [vmem:[%s9 + $0x1e0] sm:$0xff]
    %v1397 = vld [vmem:[%s9 + $0x1e8] sm:$0xff]
    %v1398 = vld [vmem:[%s9 + $0x1f0] sm:$0xff]
    %v1399 = vld [vmem:[%s9 + $0x1f8] sm:$0xff]
    %v1400 = vld [vmem:[%s9 + $0x200] sm:$0xff]
    %v1401 = vld [vmem:[%s9 + $0x208] sm:$0xff]
    %v1402 = vld [vmem:[%s9 + $0x210] sm:$0xff]
    %v1403 = vld [vmem:[%s9 + $0x218] sm:$0xff]
    %v1404 = vld [vmem:[%s9 + $0x220] sm:$0xff]
    %v1405 = vld [vmem:[%s9 + $0x228] sm:$0xff]
    %v1406 = vld [vmem:[%s9 + $0x230] sm:$0xff]
    %v1407 = vld [vmem:[%s9 + $0x238] sm:$0xff]
    %v1408 = vld [vmem:[%s9 + $0x240] sm:$0xff]
    %v1409 = vld [vmem:[%s9 + $0x248] sm:$0xff]
    %v1410 = vld [vmem:[%s9 + $0x250] sm:$0xff]
    %v1411 = vld [vmem:[%s9 + $0x258] sm:$0xff]
    %v1412 = vld [vmem:[%s9 + $0x260] sm:$0xff]
    %v1413 = vld [vmem:[%s9 + $0x268] sm:$0xff]
    %v1414 = vld [vmem:[%s9 + $0x270] sm:$0xff]
    %v1415 = vld [vmem:[%s9 + $0x278] sm:$0xff]
    %v1416 = vld [vmem:[%s9 + $0x280] sm:$0xff]
    %v1417 = vld [vmem:[%s9 + $0x288] sm:$0xff]
    %v1418 = vld [vmem:[%s9 + $0x290] sm:$0xff]
    %v1419 = vld [vmem:[%s9 + $0x298] sm:$0xff]
    %v1420 = vld [vmem:[%s9 + $0x2a0] sm:$0xff]
    %v1421 = vld [vmem:[%s9 + $0x2a8] sm:$0xff]
    %v1422 = vld [vmem:[%s9 + $0x2b0] sm:$0xff]
    %v1423 = vld [vmem:[%s9 + $0x2b8] sm:$0xff]
    %v1424 = vld [vmem:[%s9 + $0x2c0] sm:$0xff]
    %v1425 = vld [vmem:[%s9 + $0x2c8] sm:$0xff]
    %v1426 = vld [vmem:[%s9 + $0x2d0] sm:$0xff]
    %v1427 = vld [vmem:[%s9 + $0x2d8] sm:$0xff]
    %v1428 = vld [vmem:[%s9 + $0x2e0] sm:$0xff]
    %v1429 = vld [vmem:[%s9 + $0x2e8] sm:$0xff]
    %v1430 = vld [vmem:[%s9 + $0x2f0] sm:$0xff]
    %v1431 = vld [vmem:[%s9 + $0x2f8] sm:$0xff]
    %v1432 = vld [vmem:[%s9 + $0x300] sm:$0xff]
    %v1433 = vld [vmem:[%s9 + $0x308] sm:$0xff]
    %v1434 = vld [vmem:[%s9 + $0x310] sm:$0xff]
    %v1435 = vld [vmem:[%s9 + $0x318] sm:$0xff]
    %v1436 = vld [vmem:[%s9 + $0x320] sm:$0xff]
    %v1437 = vld [vmem:[%s9 + $0x328] sm:$0xff]
    %v1438 = vld [vmem:[%s9 + $0x330] sm:$0xff]
    %v1439 = vld [vmem:[%s9 + $0x338] sm:$0xff]
    %v1440 = vld [vmem:[%s9 + $0x340] sm:$0xff]
    %v1441 = vld [vmem:[%s9 + $0x348] sm:$0xff]
    %v1442 = vld [vmem:[%s9 + $0x350] sm:$0xff]
    %v1443 = vld [vmem:[%s9 + $0x358] sm:$0xff]
    %v1444 = vld [vmem:[%s9 + $0x360] sm:$0xff]
    %v1445 = vld [vmem:[%s9 + $0x368] sm:$0xff]
    %v1446 = vld [vmem:[%s9 + $0x370] sm:$0xff]
    %v1447 = vld [vmem:[%s9 + $0x378] sm:$0xff]
    %v1448 = vld [vmem:[%s9 + $0x380] sm:$0xff]
    %v1449 = vld [vmem:[%s9 + $0x388] sm:$0xff]
    %v1450 = vld [vmem:[%s9 + $0x390] sm:$0xff]
    %v1451 = vld [vmem:[%s9 + $0x398] sm:$0xff]
    %v1452 = vld [vmem:[%s9 + $0x3a0] sm:$0xff]
    %v1453 = vld [vmem:[%s9 + $0x3a8] sm:$0xff]
    %v1454 = vld [vmem:[%s9 + $0x3b0] sm:$0xff]
    %v1455 = vld [vmem:[%s9 + $0x3b8] sm:$0xff]
    %v1456 = vld [vmem:[%s9 + $0x3c0] sm:$0xff]
    %v1457 = vld [vmem:[%s9 + $0x3c8] sm:$0xff]
    %v1458 = vld [vmem:[%s9 + $0x3d0] sm:$0xff]
    %v1459 = vld [vmem:[%s9 + $0x3d8] sm:$0xff]
    %v1460 = vld [vmem:[%s9 + $0x3e0] sm:$0xff]
    %v1461 = vld [vmem:[%s9 + $0x3e8] sm:$0xff]
    %v1462 = vld [vmem:[%s9 + $0x3f0] sm:$0xff]
    %v1463 = vld [vmem:[%s9 + $0x3f8] sm:$0xff]
    %v1464 = vld [vmem:[%s10] sm:$0x3]
    %v1466 = vlaneseq
    %v1467 = vshrl.u32 %v1466, 7
    %v1468 = vsub.s32 0, %v1467
    %v1469 = vrot.slane %v1464, %v1468
    %v1470 = vlaneseq
    %v1471 = vshrl.u32 %v1470, 7
    %v1472 = vsub.s32 1, %v1471
    %v1473 = vrot.slane %v1464, %v1472
    %1476 = vmatprep.subr.mxu0 %v1367
    %1477 = vmatpush1.msra.mxu0 %v1366
    %1478 = vmatprep.subr.mxu0 %v1365
    %1479 = vmatpush1.msra.mxu0 %v1364
    %1480 = vmatprep.subr.mxu0 %v1363
    %1481 = vmatpush1.msra.mxu0 %v1362
    %1482 = vmatprep.subr.mxu0 %v1361
    %1483 = vmatpush1.msra.mxu0 %v1360
    %1484 = vmatprep.subr.mxu0 %v1359
    %1485 = vmatpush1.msra.mxu0 %v1358
    %1486 = vmatprep.subr.mxu0 %v1357
    %1487 = vmatpush1.msra.mxu0 %v1356
    %1488 = vmatprep.subr.mxu0 %v1355
    %1489 = vmatpush1.msra.mxu0 %v1354
    %1490 = vmatprep.subr.mxu0 %v1353
    %1491 = vmatpush1.msra.mxu0 %v1352
    %1492 = vmatprep.subr.mxu0 %v1351
    %1493 = vmatpush1.msra.mxu0 %v1350
    %1494 = vmatprep.subr.mxu0 %v1349
    %1495 = vmatpush1.msra.mxu0 %v1348
    %1496 = vmatprep.subr.mxu0 %v1347
    %1497 = vmatpush1.msra.mxu0 %v1346
    %1498 = vmatprep.subr.mxu0 %v1345
    %1499 = vmatpush1.msra.mxu0 %v1344
    %1500 = vmatprep.subr.mxu0 %v1343
    %1501 = vmatpush1.msra.mxu0 %v1342
    %1502 = vmatprep.subr.mxu0 %v1341
    %1503 = vmatpush1.msra.mxu0 %v1340
    %1504 = vmatprep.subr.mxu0 %v1339
    %1505 = vmatpush1.msra.mxu0 %v1338
    %1506 = vmatprep.subr.mxu0 %v1337
    %1507 = vmatpush1.msra.mxu0 %v1336
    %1508 = vmatprep.subr.mxu0 %v1399
    %1509 = vmatpush2.msra.mxu0 %v1398
    %1510 = vmatprep.subr.mxu0 %v1397
    %1511 = vmatpush2.msra.mxu0 %v1396
    %1512 = vmatprep.subr.mxu0 %v1395
    %1513 = vmatpush2.msra.mxu0 %v1394
    %1514 = vmatprep.subr.mxu0 %v1393
    %1515 = vmatpush2.msra.mxu0 %v1392
    %1516 = vmatprep.subr.mxu0 %v1391
    %1517 = vmatpush2.msra.mxu0 %v1390
    %1518 = vmatprep.subr.mxu0 %v1389
    %1519 = vmatpush2.msra.mxu0 %v1388
    %1520 = vmatprep.subr.mxu0 %v1387
    %1521 = vmatpush2.msra.mxu0 %v1386
    %1522 = vmatprep.subr.mxu0 %v1385
    %1523 = vmatpush2.msra.mxu0 %v1384
    %1524 = vmatprep.subr.mxu0 %v1383
    %1525 = vmatpush2.msra.mxu0 %v1382
    %1526 = vmatprep.subr.mxu0 %v1381
    %1527 = vmatpush2.msra.mxu0 %v1380
    %1528 = vmatprep.subr.mxu0 %v1379
    %1529 = vmatpush2.msra.mxu0 %v1378
    %1530 = vmatprep.subr.mxu0 %v1377
    %1531 = vmatpush2.msra.mxu0 %v1376
    %1532 = vmatprep.subr.mxu0 %v1375
    %1533 = vmatpush2.msra.mxu0 %v1374
    %1534 = vmatprep.subr.mxu0 %v1373
    %1535 = vmatpush2.msra.mxu0 %v1372
    %1536 = vmatprep.subr.mxu0 %v1371
    %1537 = vmatpush2.msra.mxu0 %v1370
    %1538 = vmatprep.subr.mxu0 %v1369
    %1539 = vmatpush2.msra.mxu0 %v1368
    %1540 = vmatprep.mubr.f32.mxu0 %v1329
    %1541 = vmatmul.mubr.f32.gmra.mxu0 %v1328
    %v1542 = vpop.f32.mrf.mxu0
    %v1543 = vadd.f32 %v1469, %v1542
    %v1544 = vpop.f32.mrf.mxu0
    %v1545 = vadd.f32 %v1473, %v1544
    %1546 = vmatprep.mubr.f32.mxu0 %v1333
    %1547 = vmatmul.mubr.f32.gmra.mxu0 %v1332
    %v1548 = vpop.f32.mrf.mxu0
    %v1549 = vadd.f32 %v1469, %v1548
    %v1550 = vpop.f32.mrf.mxu0
    %v1551 = vadd.f32 %v1473, %v1550
    %1552 = vdwg.mxu0
    %1553 = vmatprep.subr.mxu0 %v1431
    %1554 = vmatpush1.msra.mxu0 %v1430
    %1555 = vmatprep.subr.mxu0 %v1429
    %1556 = vmatpush1.msra.mxu0 %v1428
    %1557 = vmatprep.subr.mxu0 %v1427
    %1558 = vmatpush1.msra.mxu0 %v1426
    %1559 = vmatprep.subr.mxu0 %v1425
    %1560 = vmatpush1.msra.mxu0 %v1424
    %1561 = vmatprep.subr.mxu0 %v1423
    %1562 = vmatpush1.msra.mxu0 %v1422
    %1563 = vmatprep.subr.mxu0 %v1421
    %1564 = vmatpush1.msra.mxu0 %v1420
    %1565 = vmatprep.subr.mxu0 %v1419
    %1566 = vmatpush1.msra.mxu0 %v1418
    %1567 = vmatprep.subr.mxu0 %v1417
    %1568 = vmatpush1.msra.mxu0 %v1416
    %1569 = vmatprep.subr.mxu0 %v1415
    %1570 = vmatpush1.msra.mxu0 %v1414
    %1571 = vmatprep.subr.mxu0 %v1413
    %1572 = vmatpush1.msra.mxu0 %v1412
    %1573 = vmatprep.subr.mxu0 %v1411
    %1574 = vmatpush1.msra.mxu0 %v1410
    %1575 = vmatprep.subr.mxu0 %v1409
    %1576 = vmatpush1.msra.mxu0 %v1408
    %1577 = vmatprep.subr.mxu0 %v1407
    %1578 = vmatpush1.msra.mxu0 %v1406
    %1579 = vmatprep.subr.mxu0 %v1405
    %1580 = vmatpush1.msra.mxu0 %v1404
    %1581 = vmatprep.subr.mxu0 %v1403
    %1582 = vmatpush1.msra.mxu0 %v1402
    %1583 = vmatprep.subr.mxu0 %v1401
    %1584 = vmatpush1.msra.mxu0 %v1400
    %1585 = vmatprep.subr.mxu0 %v1463
    %1586 = vmatpush2.msra.mxu0 %v1462
    %1587 = vmatprep.subr.mxu0 %v1461
    %1588 = vmatpush2.msra.mxu0 %v1460
    %1589 = vmatprep.subr.mxu0 %v1459
    %1590 = vmatpush2.msra.mxu0 %v1458
    %1591 = vmatprep.subr.mxu0 %v1457
    %1592 = vmatpush2.msra.mxu0 %v1456
    %1593 = vmatprep.subr.mxu0 %v1455
    %1594 = vmatpush2.msra.mxu0 %v1454
    %1595 = vmatprep.subr.mxu0 %v1453
    %1596 = vmatpush2.msra.mxu0 %v1452
    %1597 = vmatprep.subr.mxu0 %v1451
    %1598 = vmatpush2.msra.mxu0 %v1450
    %1599 = vmatprep.subr.mxu0 %v1449
    %1600 = vmatpush2.msra.mxu0 %v1448
    %1601 = vmatprep.subr.mxu0 %v1447
    %1602 = vmatpush2.msra.mxu0 %v1446
    %1603 = vmatprep.subr.mxu0 %v1445
    %1604 = vmatpush2.msra.mxu0 %v1444
    %1605 = vmatprep.subr.mxu0 %v1443
    %1606 = vmatpush2.msra.mxu0 %v1442
    %1607 = vmatprep.subr.mxu0 %v1441
    %1608 = vmatpush2.msra.mxu0 %v1440
    %1609 = vmatprep.subr.mxu0 %v1439
    %1610 = vmatpush2.msra.mxu0 %v1438
    %1611 = vmatprep.subr.mxu0 %v1437
    %1612 = vmatpush2.msra.mxu0 %v1436
    %1613 = vmatprep.subr.mxu0 %v1435
    %1614 = vmatpush2.msra.mxu0 %v1434
    %1615 = vmatprep.subr.mxu0 %v1433
    %1616 = vmatpush2.msra.mxu0 %v1432
    %1617 = vmatprep.mubr.f32.mxu0 %v1331
    %1618 = vmatmul.mubr.f32.gmra.mxu0 %v1330
    %v1619 = vpop.f32.mrf.mxu0
    %v1620 = vadd.f32 %v1543, %v1619
    %v1621 = vpop.f32.mrf.mxu0
    %v1622 = vadd.f32 %v1545, %v1621
    %1623 = vmatprep.mubr.f32.mxu0 %v1335
    %1624 = vmatmul.mubr.f32.gmra.mxu0 %v1334
    %v1625 = vpop.f32.mrf.mxu0
    %v1626 = vadd.f32 %v1549, %v1625
    %v1627 = vpop.f32.mrf.mxu0
    %v1628 = vadd.f32 %v1551, %v1627
    %1629 = vdwg.mxu0
    %v1630 = vld [vmem:[#allocation10] sm:$0xff]
    %v1631 = vld [vmem:[#allocation10 + $0x8] sm:$0xff]
    %v1632 = vld [vmem:[#allocation10 + $0x10] sm:$0xff]
    %v1633 = vld [vmem:[#allocation10 + $0x18] sm:$0xff]
    %v1634 = vld [vmem:[#allocation10 + $0x20] sm:$0xff]
    %v1635 = vld [vmem:[#allocation10 + $0x28] sm:$0xff]
    %v1636 = vld [vmem:[#allocation10 + $0x30] sm:$0xff]
    %v1637 = vld [vmem:[#allocation10 + $0x38] sm:$0xff]
    %v1638 = vld [vmem:[#allocation10 + $0x40] sm:$0xff]
    %v1639 = vld [vmem:[#allocation10 + $0x48] sm:$0xff]
    %v1640 = vld [vmem:[#allocation10 + $0x50] sm:$0xff]
    %v1641 = vld [vmem:[#allocation10 + $0x58] sm:$0xff]
    %v1642 = vld [vmem:[#allocation10 + $0x60] sm:$0xff]
    %v1643 = vld [vmem:[#allocation10 + $0x68] sm:$0xff]
    %v1644 = vld [vmem:[#allocation10 + $0x70] sm:$0xff]
    %v1645 = vld [vmem:[#allocation10 + $0x78] sm:$0xff]
    %v1646 = vld [vmem:[#allocation3] sm:$0xff]
    %v1647 = vld [vmem:[#allocation3 + $0x8] sm:$0xff]
    %v1648 = vld [vmem:[#allocation3 + $0x10] sm:$0xff]
    %v1649 = vld [vmem:[#allocation3 + $0x18] sm:$0xff]
    %v1651 = vsel %vm233, 0.0, 0
    %1653 = vmatprep.subr.mxu0 0.0
    %1654 = vmatpush1.msra.mxu0 0.0
    %1655 = vmatprep.subr.mxu0 0.0
    %1656 = vmatpush1.msra.mxu0 0.0
    %1657 = vmatprep.subr.mxu0 0.0
    %1658 = vmatpush1.msra.mxu0 0.0
    %1659 = vmatprep.subr.mxu0 0.0
    %1660 = vmatpush1.msra.mxu0 0.0
    %1661 = vmatprep.subr.mxu0 0.0
    %1662 = vmatpush1.msra.mxu0 0.0
    %1663 = vmatprep.subr.mxu0 0.0
    %1664 = vmatpush1.msra.mxu0 0.0
    %1665 = vmatprep.subr.mxu0 0.0
    %1666 = vmatpush1.msra.mxu0 0.0
    %1667 = vmatprep.subr.mxu0 0.0
    %1668 = vmatpush1.msra.mxu0 0.0
    %1669 = vmatprep.subr.mxu0 %v1645
    %1670 = vmatpush1.msra.mxu0 %v1644
    %1671 = vmatprep.subr.mxu0 %v1643
    %1672 = vmatpush1.msra.mxu0 %v1642
    %1673 = vmatprep.subr.mxu0 %v1641
    %1674 = vmatpush1.msra.mxu0 %v1640
    %1675 = vmatprep.subr.mxu0 %v1639
    %1676 = vmatpush1.msra.mxu0 %v1638
    %1677 = vmatprep.subr.mxu0 %v1637
    %1678 = vmatpush1.msra.mxu0 %v1636
    %1679 = vmatprep.subr.mxu0 %v1635
    %1680 = vmatpush1.msra.mxu0 %v1634
    %1681 = vmatprep.subr.mxu0 %v1633
    %1682 = vmatpush1.msra.mxu0 %v1632
    %1683 = vmatprep.subr.mxu0 %v1631
    %1684 = vmatpush1.msra.mxu0 %v1630
    %1685 = vmatprep.subr.mxu0 0.0
    %1686 = vmatpush2.msra.mxu0 0.0
    %1687 = vmatprep.subr.mxu0 0.0
    %1688 = vmatpush2.msra.mxu0 0.0
    %1689 = vmatprep.subr.mxu0 0.0
    %1690 = vmatpush2.msra.mxu0 0.0
    %1691 = vmatprep.subr.mxu0 0.0
    %1692 = vmatpush2.msra.mxu0 0.0
    %1693 = vmatprep.subr.mxu0 0.0
    %1694 = vmatpush2.msra.mxu0 0.0
    %1695 = vmatprep.subr.mxu0 0.0
    %1696 = vmatpush2.msra.mxu0 0.0
    %1697 = vmatprep.subr.mxu0 0.0
    %1698 = vmatpush2.msra.mxu0 0.0
    %1699 = vmatprep.subr.mxu0 0.0
    %1700 = vmatpush2.msra.mxu0 0.0
    %1701 = vmatprep.subr.mxu0 0.0
    %1702 = vmatpush2.msra.mxu0 0.0
    %1703 = vmatprep.subr.mxu0 0.0
    %1704 = vmatpush2.msra.mxu0 0.0
    %1705 = vmatprep.subr.mxu0 0.0
    %1706 = vmatpush2.msra.mxu0 0.0
    %1707 = vmatprep.subr.mxu0 0.0
    %1708 = vmatpush2.msra.mxu0 0.0
    %1709 = vmatprep.subr.mxu0 0.0
    %1710 = vmatpush2.msra.mxu0 0.0
    %1711 = vmatprep.subr.mxu0 0.0
    %1712 = vmatpush2.msra.mxu0 0.0
    %1713 = vmatprep.subr.mxu0 0.0
    %1714 = vmatpush2.msra.mxu0 0.0
    %1715 = vmatprep.subr.mxu0 0.0
    %1716 = vmatpush2.msra.mxu0 0.0
    %1717 = vmatprep.mubr.f32.mxu0 0.0
    %1718 = vmatmul.mubr.f32.gmra.mxu0 %v1651
    %v1719 = vpop.f32.mrf.mxu0
    %v1720 = vadd.f32 0.0, %v1719
    %v1721 = vpop.f32.mrf.mxu0
    %v1722 = vadd.f32 0.0, %v1721
    %1723 = vmatprep.mubr.f32.mxu0 0.0
    %1724 = vmatmul.mubr.f32.gmra.mxu0 %v1651
    %v1725 = vpop.f32.mrf.mxu0
    %v1726 = vadd.f32 0.0, %v1725
    %v1727 = vpop.f32.mrf.mxu0
    %v1728 = vadd.f32 0.0, %v1727
    %1729 = vdwg.mxu0
    %v1730 = vadd.f32 %v1646, %v1720
    %v1731 = vadd.f32 %v1647, %v1722
    %v1732 = vadd.f32 %v1648, %v1726
    %v1733 = vadd.f32 %v1649, %v1728
    %v1734 = vxor.u32 %v1730, 2147483648
    %v1735 = vxor.u32 %v1731, 2147483648
    %v1736 = vxor.u32 %v1732, 2147483648
    %v1737 = vxor.u32 %v1733, 2147483648
    %v1738 = vmul.f32 %v1734, 1.442695
    %v1739 = vpow.pop %v1738
    %v1740 = vmul.f32 %v1735, 1.442695
    %v1741 = vpow.pop %v1740
    %v1742 = vmul.f32 %v1736, 1.442695
    %v1743 = vpow.pop %v1742
    %v1744 = vmul.f32 %v1737, 1.442695
    %v1745 = vpow.pop %v1744
    %v1746 = vadd.f32 %v1739, 1.0
    %v1747 = vadd.f32 %v1741, 1.0
    %v1748 = vadd.f32 %v1743, 1.0
    %v1749 = vadd.f32 %v1745, 1.0
    %v1750 = vrcp.pop %v1746
    %v1751 = vmul.f32 1.0, %v1750
    %v1752 = vrcp.pop %v1747
    %v1753 = vmul.f32 1.0, %v1752
    %v1754 = vrcp.pop %v1748
    %v1755 = vmul.f32 1.0, %v1754
    %v1756 = vrcp.pop %v1749
    %v1757 = vmul.f32 1.0, %v1756
    %v1758 = vtanh.pop %v1731
    %v1759 = vtanh.pop %v1733
    %v1760 = vmul.f32 %v1751, 0.0
    %v1761 = vmul.f32 %v1755, 0.0
    %v1762 = vmul.f32 %v1751, %v1758
    %v1763 = vmul.f32 %v1755, %v1759
    %1766 = vrot.lane.b32.xlu0 %v1762, 64
    %v1767 = vpop.permute.xlu0 %1766
    %1768 = vrot.lane.b32.xlu0 %v1763, 64
    %v1769 = vpop.permute.xlu0 %1768
    %v1772 = vadd.f32 %v1760, %v1767
    %v1773 = vadd.f32 %v1761, %v1769
    %v1774 = vtanh.pop %v1772
    %v1775 = vtanh.pop %v1773
    %v1776 = vmul.f32 %v1753, %v1774
    %v1777 = vmul.f32 %v1757, %v1775
    %v1778 = vld [vmem:[%s8] sm:$0xff]
    %v1779 = vld [vmem:[%s8 + $0x8] sm:$0xff]
    %v1780 = vld [vmem:[%s8 + $0x10] sm:$0xff]
    %v1781 = vld [vmem:[%s8 + $0x18] sm:$0xff]
    %v1782 = vld [vmem:[%s8 + $0x20] sm:$0xff]
    %v1783 = vld [vmem:[%s8 + $0x28] sm:$0xff]
    %v1784 = vld [vmem:[%s8 + $0x30] sm:$0xff]
    %v1785 = vld [vmem:[%s8 + $0x38] sm:$0xff]
    %v1786 = vld [vmem:[%s8 + $0x40] sm:$0xff]
    %v1787 = vld [vmem:[%s8 + $0x48] sm:$0xff]
    %v1788 = vld [vmem:[%s8 + $0x50] sm:$0xff]
    %v1789 = vld [vmem:[%s8 + $0x58] sm:$0xff]
    %v1790 = vld [vmem:[%s8 + $0x60] sm:$0xff]
    %v1791 = vld [vmem:[%s8 + $0x68] sm:$0xff]
    %v1792 = vld [vmem:[%s8 + $0x70] sm:$0xff]
    %v1793 = vld [vmem:[%s8 + $0x78] sm:$0xff]
    %1796 = vrot.lane.b32.xlu0 %v1776, 64
    %v1797 = vpop.permute.xlu0 %1796
    %1798 = vrot.lane.b32.xlu0 %v1777, 64
    %v1799 = vpop.permute.xlu0 %1798
    %v1800 = vsel %vm233, %v1797, 0
    %v1802 = vsel %vm233, %v1799, 0
    %1804 = vmatprep.subr.mxu0 0.0
    %1805 = vmatpush1.msra.mxu0 0.0
    %1806 = vmatprep.subr.mxu0 0.0
    %1807 = vmatpush1.msra.mxu0 0.0
    %1808 = vmatprep.subr.mxu0 0.0
    %1809 = vmatpush1.msra.mxu0 0.0
    %1810 = vmatprep.subr.mxu0 0.0
    %1811 = vmatpush1.msra.mxu0 0.0
    %1812 = vmatprep.subr.mxu0 0.0
    %1813 = vmatpush1.msra.mxu0 0.0
    %1814 = vmatprep.subr.mxu0 0.0
    %1815 = vmatpush1.msra.mxu0 0.0
    %1816 = vmatprep.subr.mxu0 0.0
    %1817 = vmatpush1.msra.mxu0 0.0
    %1818 = vmatprep.subr.mxu0 0.0
    %1819 = vmatpush1.msra.mxu0 0.0
    %1820 = vmatprep.subr.mxu0 %v1793
    %1821 = vmatpush1.msra.mxu0 %v1792
    %1822 = vmatprep.subr.mxu0 %v1791
    %1823 = vmatpush1.msra.mxu0 %v1790
    %1824 = vmatprep.subr.mxu0 %v1789
    %1825 = vmatpush1.msra.mxu0 %v1788
    %1826 = vmatprep.subr.mxu0 %v1787
    %1827 = vmatpush1.msra.mxu0 %v1786
    %1828 = vmatprep.subr.mxu0 %v1785
    %1829 = vmatpush1.msra.mxu0 %v1784
    %1830 = vmatprep.subr.mxu0 %v1783
    %1831 = vmatpush1.msra.mxu0 %v1782
    %1832 = vmatprep.subr.mxu0 %v1781
    %1833 = vmatpush1.msra.mxu0 %v1780
    %1834 = vmatprep.subr.mxu0 %v1779
    %1835 = vmatpush1.msra.mxu0 %v1778
    %1836 = vmatprep.subr.mxu0 0.0
    %1837 = vmatpush2.msra.mxu0 0.0
    %1838 = vmatprep.subr.mxu0 0.0
    %1839 = vmatpush2.msra.mxu0 0.0
    %1840 = vmatprep.subr.mxu0 0.0
    %1841 = vmatpush2.msra.mxu0 0.0
    %1842 = vmatprep.subr.mxu0 0.0
    %1843 = vmatpush2.msra.mxu0 0.0
    %1844 = vmatprep.subr.mxu0 0.0
    %1845 = vmatpush2.msra.mxu0 0.0
    %1846 = vmatprep.subr.mxu0 0.0
    %1847 = vmatpush2.msra.mxu0 0.0
    %1848 = vmatprep.subr.mxu0 0.0
    %1849 = vmatpush2.msra.mxu0 0.0
    %1850 = vmatprep.subr.mxu0 0.0
    %1851 = vmatpush2.msra.mxu0 0.0
    %1852 = vmatprep.subr.mxu0 0.0
    %1853 = vmatpush2.msra.mxu0 0.0
    %1854 = vmatprep.subr.mxu0 0.0
    %1855 = vmatpush2.msra.mxu0 0.0
    %1856 = vmatprep.subr.mxu0 0.0
    %1857 = vmatpush2.msra.mxu0 0.0
    %1858 = vmatprep.subr.mxu0 0.0
    %1859 = vmatpush2.msra.mxu0 0.0
    %1860 = vmatprep.subr.mxu0 0.0
    %1861 = vmatpush2.msra.mxu0 0.0
    %1862 = vmatprep.subr.mxu0 0.0
    %1863 = vmatpush2.msra.mxu0 0.0
    %1864 = vmatprep.subr.mxu0 0.0
    %1865 = vmatpush2.msra.mxu0 0.0
    %1866 = vmatprep.subr.mxu0 0.0
    %1867 = vmatpush2.msra.mxu0 0.0
    %1868 = vmatprep.mubr.f32.mxu0 0.0
    %1869 = vmatmul.mubr.f32.gmra.mxu0 %v1800
    %v1870 = vpop.f32.mrf.mxu0
    %v1871 = vadd.f32 0.0, %v1870
    %v1872 = vpop.f32.mrf.mxu0
    %v1873 = vadd.f32 0.0, %v1872
    %1874 = vmatprep.mubr.f32.mxu0 0.0
    %1875 = vmatmul.mubr.f32.gmra.mxu0 %v1802
    %v1876 = vpop.f32.mrf.mxu0
    %v1877 = vadd.f32 0.0, %v1876
    %v1878 = vpop.f32.mrf.mxu0
    %v1879 = vadd.f32 0.0, %v1878
    %1880 = vdwg.mxu0
    %v1881 = vadd.f32 %v1620, %v1871
    %v1882 = vadd.f32 %v1622, %v1873
    %v1883 = vadd.f32 %v1626, %v1877
    %v1884 = vadd.f32 %v1628, %v1879
    %v1885 = vld [vmem:[#allocation3 + $0x20] sm:$0xff]
    %v1886 = vld [vmem:[#allocation3 + $0x28] sm:$0xff]
    %v1887 = vld [vmem:[#allocation3 + $0x30] sm:$0xff]
    %v1888 = vld [vmem:[#allocation3 + $0x38] sm:$0xff]
    %1889 = vmatprep.subr.mxu0 0.0
    %1890 = vmatpush1.msra.mxu0 0.0
    %1891 = vmatprep.subr.mxu0 0.0
    %1892 = vmatpush1.msra.mxu0 0.0
    %1893 = vmatprep.subr.mxu0 0.0
    %1894 = vmatpush1.msra.mxu0 0.0
    %1895 = vmatprep.subr.mxu0 0.0
    %1896 = vmatpush1.msra.mxu0 0.0
    %1897 = vmatprep.subr.mxu0 0.0
    %1898 = vmatpush1.msra.mxu0 0.0
    %1899 = vmatprep.subr.mxu0 0.0
    %1900 = vmatpush1.msra.mxu0 0.0
    %1901 = vmatprep.subr.mxu0 0.0
    %1902 = vmatpush1.msra.mxu0 0.0
    %1903 = vmatprep.subr.mxu0 0.0
    %1904 = vmatpush1.msra.mxu0 0.0
    %1905 = vmatprep.subr.mxu0 %v1645
    %1906 = vmatpush1.msra.mxu0 %v1644
    %1907 = vmatprep.subr.mxu0 %v1643
    %1908 = vmatpush1.msra.mxu0 %v1642
    %1909 = vmatprep.subr.mxu0 %v1641
    %1910 = vmatpush1.msra.mxu0 %v1640
    %1911 = vmatprep.subr.mxu0 %v1639
    %1912 = vmatpush1.msra.mxu0 %v1638
    %1913 = vmatprep.subr.mxu0 %v1637
    %1914 = vmatpush1.msra.mxu0 %v1636
    %1915 = vmatprep.subr.mxu0 %v1635
    %1916 = vmatpush1.msra.mxu0 %v1634
    %1917 = vmatprep.subr.mxu0 %v1633
    %1918 = vmatpush1.msra.mxu0 %v1632
    %1919 = vmatprep.subr.mxu0 %v1631
    %1920 = vmatpush1.msra.mxu0 %v1630
    %1921 = vmatprep.subr.mxu0 0.0
    %1922 = vmatpush2.msra.mxu0 0.0
    %1923 = vmatprep.subr.mxu0 0.0
    %1924 = vmatpush2.msra.mxu0 0.0
    %1925 = vmatprep.subr.mxu0 0.0
    %1926 = vmatpush2.msra.mxu0 0.0
    %1927 = vmatprep.subr.mxu0 0.0
    %1928 = vmatpush2.msra.mxu0 0.0
    %1929 = vmatprep.subr.mxu0 0.0
    %1930 = vmatpush2.msra.mxu0 0.0
    %1931 = vmatprep.subr.mxu0 0.0
    %1932 = vmatpush2.msra.mxu0 0.0
    %1933 = vmatprep.subr.mxu0 0.0
    %1934 = vmatpush2.msra.mxu0 0.0
    %1935 = vmatprep.subr.mxu0 0.0
    %1936 = vmatpush2.msra.mxu0 0.0
    %1937 = vmatprep.subr.mxu0 0.0
    %1938 = vmatpush2.msra.mxu0 0.0
    %1939 = vmatprep.subr.mxu0 0.0
    %1940 = vmatpush2.msra.mxu0 0.0
    %1941 = vmatprep.subr.mxu0 0.0
    %1942 = vmatpush2.msra.mxu0 0.0
    %1943 = vmatprep.subr.mxu0 0.0
    %1944 = vmatpush2.msra.mxu0 0.0
    %1945 = vmatprep.subr.mxu0 0.0
    %1946 = vmatpush2.msra.mxu0 0.0
    %1947 = vmatprep.subr.mxu0 0.0
    %1948 = vmatpush2.msra.mxu0 0.0
    %1949 = vmatprep.subr.mxu0 0.0
    %1950 = vmatpush2.msra.mxu0 0.0
    %1951 = vmatprep.subr.mxu0 0.0
    %1952 = vmatpush2.msra.mxu0 0.0
    %1953 = vmatprep.mubr.f32.mxu0 0.0
    %1954 = vmatmul.mubr.f32.gmra.mxu0 %v1800
    %v1955 = vpop.f32.mrf.mxu0
    %v1956 = vadd.f32 0.0, %v1955
    %v1957 = vpop.f32.mrf.mxu0
    %v1958 = vadd.f32 0.0, %v1957
    %1959 = vmatprep.mubr.f32.mxu0 0.0
    %1960 = vmatmul.mubr.f32.gmra.mxu0 %v1802
    %v1961 = vpop.f32.mrf.mxu0
    %v1962 = vadd.f32 0.0, %v1961
    %v1963 = vpop.f32.mrf.mxu0
    %v1964 = vadd.f32 0.0, %v1963
    %1965 = vdwg.mxu0
    %v1966 = vadd.f32 %v1885, %v1956
    %v1967 = vadd.f32 %v1886, %v1958
    %v1968 = vadd.f32 %v1887, %v1962
    %v1969 = vadd.f32 %v1888, %v1964
    %v1970 = vxor.u32 %v1966, 2147483648
    %v1971 = vxor.u32 %v1967, 2147483648
    %v1972 = vxor.u32 %v1968, 2147483648
    %v1973 = vxor.u32 %v1969, 2147483648
    %v1974 = vmul.f32 %v1970, 1.442695
    %v1975 = vpow.pop %v1974
    %v1976 = vmul.f32 %v1971, 1.442695
    %v1977 = vpow.pop %v1976
    %v1978 = vmul.f32 %v1972, 1.442695
    %v1979 = vpow.pop %v1978
    %v1980 = vmul.f32 %v1973, 1.442695
    %v1981 = vpow.pop %v1980
    %v1982 = vadd.f32 %v1975, 1.0
    %v1983 = vadd.f32 %v1977, 1.0
    %v1984 = vadd.f32 %v1979, 1.0
    %v1985 = vadd.f32 %v1981, 1.0
    %v1986 = vrcp.pop %v1982
    %v1987 = vmul.f32 1.0, %v1986
    %v1988 = vrcp.pop %v1983
    %v1989 = vmul.f32 1.0, %v1988
    %v1990 = vrcp.pop %v1984
    %v1991 = vmul.f32 1.0, %v1990
    %v1992 = vrcp.pop %v1985
    %v1993 = vmul.f32 1.0, %v1992
    %v1994 = vtanh.pop %v1967
    %v1995 = vtanh.pop %v1969
    %v1996 = vmul.f32 %v1987, %v1772
    %v1997 = vmul.f32 %v1991, %v1773
    %v1998 = vmul.f32 %v1987, %v1994
    %v1999 = vmul.f32 %v1991, %v1995
    %2002 = vrot.lane.b32.xlu0 %v1998, 64
    %v2003 = vpop.permute.xlu0 %2002
    %2004 = vrot.lane.b32.xlu0 %v1999, 64
    %v2005 = vpop.permute.xlu0 %2004
    %v2008 = vadd.f32 %v1996, %v2003
    %v2009 = vadd.f32 %v1997, %v2005
    %v2010 = vtanh.pop %v2008
    %v2011 = vtanh.pop %v2009
    %v2012 = vmul.f32 %v1989, %v2010
    %v2013 = vmul.f32 %v1993, %v2011
    %s2014 = scalar_lea.vmem %s8, 128
    %v2015 = vld [vmem:[%s2014] sm:$0xff]
    %v2016 = vld [vmem:[%s2014 + $0x8] sm:$0xff]
    %v2017 = vld [vmem:[%s2014 + $0x10] sm:$0xff]
    %v2018 = vld [vmem:[%s2014 + $0x18] sm:$0xff]
    %v2019 = vld [vmem:[%s2014 + $0x20] sm:$0xff]
    %v2020 = vld [vmem:[%s2014 + $0x28] sm:$0xff]
    %v2021 = vld [vmem:[%s2014 + $0x30] sm:$0xff]
    %v2022 = vld [vmem:[%s2014 + $0x38] sm:$0xff]
    %v2023 = vld [vmem:[%s2014 + $0x40] sm:$0xff]
    %v2024 = vld [vmem:[%s2014 + $0x48] sm:$0xff]
    %v2025 = vld [vmem:[%s2014 + $0x50] sm:$0xff]
    %v2026 = vld [vmem:[%s2014 + $0x58] sm:$0xff]
    %v2027 = vld [vmem:[%s2014 + $0x60] sm:$0xff]
    %v2028 = vld [vmem:[%s2014 + $0x68] sm:$0xff]
    %v2029 = vld [vmem:[%s2014 + $0x70] sm:$0xff]
    %v2030 = vld [vmem:[%s2014 + $0x78] sm:$0xff]
    %2033 = vrot.lane.b32.xlu0 %v2012, 64
    %v2034 = vpop.permute.xlu0 %2033
    %2035 = vrot.lane.b32.xlu0 %v2013, 64
    %v2036 = vpop.permute.xlu0 %2035
    %v2037 = vsel %vm233, %v2034, 0
    %v2039 = vsel %vm233, %v2036, 0
    %2041 = vmatprep.subr.mxu0 0.0
    %2042 = vmatpush1.msra.mxu0 0.0
    %2043 = vmatprep.subr.mxu0 0.0
    %2044 = vmatpush1.msra.mxu0 0.0
    %2045 = vmatprep.subr.mxu0 0.0
    %2046 = vmatpush1.msra.mxu0 0.0
    %2047 = vmatprep.subr.mxu0 0.0
    %2048 = vmatpush1.msra.mxu0 0.0
    %2049 = vmatprep.subr.mxu0 0.0
    %2050 = vmatpush1.msra.mxu0 0.0
    %2051 = vmatprep.subr.mxu0 0.0
    %2052 = vmatpush1.msra.mxu0 0.0
    %2053 = vmatprep.subr.mxu0 0.0
    %2054 = vmatpush1.msra.mxu0 0.0
    %2055 = vmatprep.subr.mxu0 0.0
    %2056 = vmatpush1.msra.mxu0 0.0
    %2057 = vmatprep.subr.mxu0 %v2030
    %2058 = vmatpush1.msra.mxu0 %v2029
    %2059 = vmatprep.subr.mxu0 %v2028
    %2060 = vmatpush1.msra.mxu0 %v2027
    %2061 = vmatprep.subr.mxu0 %v2026
    %2062 = vmatpush1.msra.mxu0 %v2025
    %2063 = vmatprep.subr.mxu0 %v2024
    %2064 = vmatpush1.msra.mxu0 %v2023
    %2065 = vmatprep.subr.mxu0 %v2022
    %2066 = vmatpush1.msra.mxu0 %v2021
    %2067 = vmatprep.subr.mxu0 %v2020
    %2068 = vmatpush1.msra.mxu0 %v2019
    %2069 = vmatprep.subr.mxu0 %v2018
    %2070 = vmatpush1.msra.mxu0 %v2017
    %2071 = vmatprep.subr.mxu0 %v2016
    %2072 = vmatpush1.msra.mxu0 %v2015
    %2073 = vmatprep.subr.mxu0 0.0
    %2074 = vmatpush2.msra.mxu0 0.0
    %2075 = vmatprep.subr.mxu0 0.0
    %2076 = vmatpush2.msra.mxu0 0.0
    %2077 = vmatprep.subr.mxu0 0.0
    %2078 = vmatpush2.msra.mxu0 0.0
    %2079 = vmatprep.subr.mxu0 0.0
    %2080 = vmatpush2.msra.mxu0 0.0
    %2081 = vmatprep.subr.mxu0 0.0
    %2082 = vmatpush2.msra.mxu0 0.0
    %2083 = vmatprep.subr.mxu0 0.0
    %2084 = vmatpush2.msra.mxu0 0.0
    %2085 = vmatprep.subr.mxu0 0.0
    %2086 = vmatpush2.msra.mxu0 0.0
    %2087 = vmatprep.subr.mxu0 0.0
    %2088 = vmatpush2.msra.mxu0 0.0
    %2089 = vmatprep.subr.mxu0 0.0
    %2090 = vmatpush2.msra.mxu0 0.0
    %2091 = vmatprep.subr.mxu0 0.0
    %2092 = vmatpush2.msra.mxu0 0.0
    %2093 = vmatprep.subr.mxu0 0.0
    %2094 = vmatpush2.msra.mxu0 0.0
    %2095 = vmatprep.subr.mxu0 0.0
    %2096 = vmatpush2.msra.mxu0 0.0
    %2097 = vmatprep.subr.mxu0 0.0
    %2098 = vmatpush2.msra.mxu0 0.0
    %2099 = vmatprep.subr.mxu0 0.0
    %2100 = vmatpush2.msra.mxu0 0.0
    %2101 = vmatprep.subr.mxu0 0.0
    %2102 = vmatpush2.msra.mxu0 0.0
    %2103 = vmatprep.subr.mxu0 0.0
    %2104 = vmatpush2.msra.mxu0 0.0
    %2105 = vmatprep.mubr.f32.mxu0 0.0
    %2106 = vmatmul.mubr.f32.gmra.mxu0 %v2037
    %v2107 = vpop.f32.mrf.mxu0
    %v2108 = vadd.f32 0.0, %v2107
    %v2109 = vpop.f32.mrf.mxu0
    %v2110 = vadd.f32 0.0, %v2109
    %2111 = vmatprep.mubr.f32.mxu0 0.0
    %2112 = vmatmul.mubr.f32.gmra.mxu0 %v2039
    %v2113 = vpop.f32.mrf.mxu0
    %v2114 = vadd.f32 0.0, %v2113
    %v2115 = vpop.f32.mrf.mxu0
    %v2116 = vadd.f32 0.0, %v2115
    %2117 = vdwg.mxu0
    %v2118 = vadd.f32 %v1881, %v2108
    %v2119 = vadd.f32 %v1882, %v2110
    %v2120 = vadd.f32 %v1883, %v2114
    %v2121 = vadd.f32 %v1884, %v2116
    %v2122 = vld [vmem:[#allocation3 + $0x40] sm:$0xff]
    %v2123 = vld [vmem:[#allocation3 + $0x48] sm:$0xff]
    %v2124 = vld [vmem:[#allocation3 + $0x50] sm:$0xff]
    %v2125 = vld [vmem:[#allocation3 + $0x58] sm:$0xff]
    %2126 = vmatprep.subr.mxu0 0.0
    %2127 = vmatpush1.msra.mxu0 0.0
    %2128 = vmatprep.subr.mxu0 0.0
    %2129 = vmatpush1.msra.mxu0 0.0
    %2130 = vmatprep.subr.mxu0 0.0
    %2131 = vmatpush1.msra.mxu0 0.0
    %2132 = vmatprep.subr.mxu0 0.0
    %2133 = vmatpush1.msra.mxu0 0.0
    %2134 = vmatprep.subr.mxu0 0.0
    %2135 = vmatpush1.msra.mxu0 0.0
    %2136 = vmatprep.subr.mxu0 0.0
    %2137 = vmatpush1.msra.mxu0 0.0
    %2138 = vmatprep.subr.mxu0 0.0
    %2139 = vmatpush1.msra.mxu0 0.0
    %2140 = vmatprep.subr.mxu0 0.0
    %2141 = vmatpush1.msra.mxu0 0.0
    %2142 = vmatprep.subr.mxu0 %v1645
    %2143 = vmatpush1.msra.mxu0 %v1644
    %2144 = vmatprep.subr.mxu0 %v1643
    %2145 = vmatpush1.msra.mxu0 %v1642
    %2146 = vmatprep.subr.mxu0 %v1641
    %2147 = vmatpush1.msra.mxu0 %v1640
    %2148 = vmatprep.subr.mxu0 %v1639
    %2149 = vmatpush1.msra.mxu0 %v1638
    %2150 = vmatprep.subr.mxu0 %v1637
    %2151 = vmatpush1.msra.mxu0 %v1636
    %2152 = vmatprep.subr.mxu0 %v1635
    %2153 = vmatpush1.msra.mxu0 %v1634
    %2154 = vmatprep.subr.mxu0 %v1633
    %2155 = vmatpush1.msra.mxu0 %v1632
    %2156 = vmatprep.subr.mxu0 %v1631
    %2157 = vmatpush1.msra.mxu0 %v1630
    %2158 = vmatprep.subr.mxu0 0.0
    %2159 = vmatpush2.msra.mxu0 0.0
    %2160 = vmatprep.subr.mxu0 0.0
    %2161 = vmatpush2.msra.mxu0 0.0
    %2162 = vmatprep.subr.mxu0 0.0
    %2163 = vmatpush2.msra.mxu0 0.0
    %2164 = vmatprep.subr.mxu0 0.0
    %2165 = vmatpush2.msra.mxu0 0.0
    %2166 = vmatprep.subr.mxu0 0.0
    %2167 = vmatpush2.msra.mxu0 0.0
    %2168 = vmatprep.subr.mxu0 0.0
    %2169 = vmatpush2.msra.mxu0 0.0
    %2170 = vmatprep.subr.mxu0 0.0
    %2171 = vmatpush2.msra.mxu0 0.0
    %2172 = vmatprep.subr.mxu0 0.0
    %2173 = vmatpush2.msra.mxu0 0.0
    %2174 = vmatprep.subr.mxu0 0.0
    %2175 = vmatpush2.msra.mxu0 0.0
    %2176 = vmatprep.subr.mxu0 0.0
    %2177 = vmatpush2.msra.mxu0 0.0
    %2178 = vmatprep.subr.mxu0 0.0
    %2179 = vmatpush2.msra.mxu0 0.0
    %2180 = vmatprep.subr.mxu0 0.0
    %2181 = vmatpush2.msra.mxu0 0.0
    %2182 = vmatprep.subr.mxu0 0.0
    %2183 = vmatpush2.msra.mxu0 0.0
    %2184 = vmatprep.subr.mxu0 0.0
    %2185 = vmatpush2.msra.mxu0 0.0
    %2186 = vmatprep.subr.mxu0 0.0
    %2187 = vmatpush2.msra.mxu0 0.0
    %2188 = vmatprep.subr.mxu0 0.0
    %2189 = vmatpush2.msra.mxu0 0.0
    %2190 = vmatprep.mubr.f32.mxu0 0.0
    %2191 = vmatmul.mubr.f32.gmra.mxu0 %v2037
    %v2192 = vpop.f32.mrf.mxu0
    %v2193 = vadd.f32 0.0, %v2192
    %v2194 = vpop.f32.mrf.mxu0
    %v2195 = vadd.f32 0.0, %v2194
    %2196 = vmatprep.mubr.f32.mxu0 0.0
    %2197 = vmatmul.mubr.f32.gmra.mxu0 %v2039
    %v2198 = vpop.f32.mrf.mxu0
    %v2199 = vadd.f32 0.0, %v2198
    %v2200 = vpop.f32.mrf.mxu0
    %v2201 = vadd.f32 0.0, %v2200
    %2202 = vdwg.mxu0
    %v2203 = vadd.f32 %v2122, %v2193
    %v2204 = vadd.f32 %v2123, %v2195
    %v2205 = vadd.f32 %v2124, %v2199
    %v2206 = vadd.f32 %v2125, %v2201
    %v2207 = vxor.u32 %v2203, 2147483648
    %v2208 = vxor.u32 %v2204, 2147483648
    %v2209 = vxor.u32 %v2205, 2147483648
    %v2210 = vxor.u32 %v2206, 2147483648
    %v2211 = vmul.f32 %v2207, 1.442695
    %v2212 = vpow.pop %v2211
    %v2213 = vmul.f32 %v2208, 1.442695
    %v2214 = vpow.pop %v2213
    %v2215 = vmul.f32 %v2209, 1.442695
    %v2216 = vpow.pop %v2215
    %v2217 = vmul.f32 %v2210, 1.442695
    %v2218 = vpow.pop %v2217
    %v2219 = vadd.f32 %v2212, 1.0
    %v2220 = vadd.f32 %v2214, 1.0
    %v2221 = vadd.f32 %v2216, 1.0
    %v2222 = vadd.f32 %v2218, 1.0
    %v2223 = vrcp.pop %v2219
    %v2224 = vmul.f32 1.0, %v2223
    %v2225 = vrcp.pop %v2220
    %v2226 = vmul.f32 1.0, %v2225
    %v2227 = vrcp.pop %v2221
    %v2228 = vmul.f32 1.0, %v2227
    %v2229 = vrcp.pop %v2222
    %v2230 = vmul.f32 1.0, %v2229
    %v2231 = vtanh.pop %v2204
    %v2232 = vtanh.pop %v2206
    %v2233 = vmul.f32 %v2224, %v2008
    %v2234 = vmul.f32 %v2228, %v2009
    %v2235 = vmul.f32 %v2224, %v2231
    %v2236 = vmul.f32 %v2228, %v2232
    %2239 = vrot.lane.b32.xlu0 %v2235, 64
    %v2240 = vpop.permute.xlu0 %2239
    %2241 = vrot.lane.b32.xlu0 %v2236, 64
    %v2242 = vpop.permute.xlu0 %2241
    %v2245 = vadd.f32 %v2233, %v2240
    %v2246 = vadd.f32 %v2234, %v2242
    %v2247 = vtanh.pop %v2245
    %v2248 = vtanh.pop %v2246
    %v2249 = vmul.f32 %v2226, %v2247
    %v2250 = vmul.f32 %v2230, %v2248
    %s2251 = scalar_lea.vmem %s8, 256
    %v2252 = vld [vmem:[%s2251] sm:$0xff]
    %v2253 = vld [vmem:[%s2251 + $0x8] sm:$0xff]
    %v2254 = vld [vmem:[%s2251 + $0x10] sm:$0xff]
    %v2255 = vld [vmem:[%s2251 + $0x18] sm:$0xff]
    %v2256 = vld [vmem:[%s2251 + $0x20] sm:$0xff]
    %v2257 = vld [vmem:[%s2251 + $0x28] sm:$0xff]
    %v2258 = vld [vmem:[%s2251 + $0x30] sm:$0xff]
    %v2259 = vld [vmem:[%s2251 + $0x38] sm:$0xff]
    %v2260 = vld [vmem:[%s2251 + $0x40] sm:$0xff]
    %v2261 = vld [vmem:[%s2251 + $0x48] sm:$0xff]
    %v2262 = vld [vmem:[%s2251 + $0x50] sm:$0xff]
    %v2263 = vld [vmem:[%s2251 + $0x58] sm:$0xff]
    %v2264 = vld [vmem:[%s2251 + $0x60] sm:$0xff]
    %v2265 = vld [vmem:[%s2251 + $0x68] sm:$0xff]
    %v2266 = vld [vmem:[%s2251 + $0x70] sm:$0xff]
    %v2267 = vld [vmem:[%s2251 + $0x78] sm:$0xff]
    %2270 = vrot.lane.b32.xlu0 %v2249, 64
    %v2271 = vpop.permute.xlu0 %2270
    %2272 = vrot.lane.b32.xlu0 %v2250, 64
    %v2273 = vpop.permute.xlu0 %2272
    %v2274 = vsel %vm233, %v2271, 0
    %v2276 = vsel %vm233, %v2273, 0
    %2278 = vmatprep.subr.mxu0 0.0
    %2279 = vmatpush1.msra.mxu0 0.0
    %2280 = vmatprep.subr.mxu0 0.0
    %2281 = vmatpush1.msra.mxu0 0.0
    %2282 = vmatprep.subr.mxu0 0.0
    %2283 = vmatpush1.msra.mxu0 0.0
    %2284 = vmatprep.subr.mxu0 0.0
    %2285 = vmatpush1.msra.mxu0 0.0
    %2286 = vmatprep.subr.mxu0 0.0
    %2287 = vmatpush1.msra.mxu0 0.0
    %2288 = vmatprep.subr.mxu0 0.0
    %2289 = vmatpush1.msra.mxu0 0.0
    %2290 = vmatprep.subr.mxu0 0.0
    %2291 = vmatpush1.msra.mxu0 0.0
    %2292 = vmatprep.subr.mxu0 0.0
    %2293 = vmatpush1.msra.mxu0 0.0
    %2294 = vmatprep.subr.mxu0 %v2267
    %2295 = vmatpush1.msra.mxu0 %v2266
    %2296 = vmatprep.subr.mxu0 %v2265
    %2297 = vmatpush1.msra.mxu0 %v2264
    %2298 = vmatprep.subr.mxu0 %v2263
    %2299 = vmatpush1.msra.mxu0 %v2262
    %2300 = vmatprep.subr.mxu0 %v2261
    %2301 = vmatpush1.msra.mxu0 %v2260
    %2302 = vmatprep.subr.mxu0 %v2259
    %2303 = vmatpush1.msra.mxu0 %v2258
    %2304 = vmatprep.subr.mxu0 %v2257
    %2305 = vmatpush1.msra.mxu0 %v2256
    %2306 = vmatprep.subr.mxu0 %v2255
    %2307 = vmatpush1.msra.mxu0 %v2254
    %2308 = vmatprep.subr.mxu0 %v2253
    %2309 = vmatpush1.msra.mxu0 %v2252
    %2310 = vmatprep.subr.mxu0 0.0
    %2311 = vmatpush2.msra.mxu0 0.0
    %2312 = vmatprep.subr.mxu0 0.0
    %2313 = vmatpush2.msra.mxu0 0.0
    %2314 = vmatprep.subr.mxu0 0.0
    %2315 = vmatpush2.msra.mxu0 0.0
    %2316 = vmatprep.subr.mxu0 0.0
    %2317 = vmatpush2.msra.mxu0 0.0
    %2318 = vmatprep.subr.mxu0 0.0
    %2319 = vmatpush2.msra.mxu0 0.0
    %2320 = vmatprep.subr.mxu0 0.0
    %2321 = vmatpush2.msra.mxu0 0.0
    %2322 = vmatprep.subr.mxu0 0.0
    %2323 = vmatpush2.msra.mxu0 0.0
    %2324 = vmatprep.subr.mxu0 0.0
    %2325 = vmatpush2.msra.mxu0 0.0
    %2326 = vmatprep.subr.mxu0 0.0
    %2327 = vmatpush2.msra.mxu0 0.0
    %2328 = vmatprep.subr.mxu0 0.0
    %2329 = vmatpush2.msra.mxu0 0.0
    %2330 = vmatprep.subr.mxu0 0.0
    %2331 = vmatpush2.msra.mxu0 0.0
    %2332 = vmatprep.subr.mxu0 0.0
    %2333 = vmatpush2.msra.mxu0 0.0
    %2334 = vmatprep.subr.mxu0 0.0
    %2335 = vmatpush2.msra.mxu0 0.0
    %2336 = vmatprep.subr.mxu0 0.0
    %2337 = vmatpush2.msra.mxu0 0.0
    %2338 = vmatprep.subr.mxu0 0.0
    %2339 = vmatpush2.msra.mxu0 0.0
    %2340 = vmatprep.subr.mxu0 0.0
    %2341 = vmatpush2.msra.mxu0 0.0
    %2342 = vmatprep.mubr.f32.mxu0 0.0
    %2343 = vmatmul.mubr.f32.gmra.mxu0 %v2274
    %v2344 = vpop.f32.mrf.mxu0
    %v2345 = vadd.f32 0.0, %v2344
    %v2346 = vpop.f32.mrf.mxu0
    %v2347 = vadd.f32 0.0, %v2346
    %2348 = vmatprep.mubr.f32.mxu0 0.0
    %2349 = vmatmul.mubr.f32.gmra.mxu0 %v2276
    %v2350 = vpop.f32.mrf.mxu0
    %v2351 = vadd.f32 0.0, %v2350
    %v2352 = vpop.f32.mrf.mxu0
    %v2353 = vadd.f32 0.0, %v2352
    %2354 = vdwg.mxu0
    %v2355 = vadd.f32 %v2118, %v2345
    %v2356 = vadd.f32 %v2119, %v2347
    %v2357 = vadd.f32 %v2120, %v2351
    %v2358 = vadd.f32 %v2121, %v2353
    %v2359 = vld [vmem:[#allocation3 + $0x60] sm:$0xff]
    %v2360 = vld [vmem:[#allocation3 + $0x68] sm:$0xff]
    %v2361 = vld [vmem:[#allocation3 + $0x70] sm:$0xff]
    %v2362 = vld [vmem:[#allocation3 + $0x78] sm:$0xff]
    %2363 = vmatprep.subr.mxu0 0.0
    %2364 = vmatpush1.msra.mxu0 0.0
    %2365 = vmatprep.subr.mxu0 0.0
    %2366 = vmatpush1.msra.mxu0 0.0
    %2367 = vmatprep.subr.mxu0 0.0
    %2368 = vmatpush1.msra.mxu0 0.0
    %2369 = vmatprep.subr.mxu0 0.0
    %2370 = vmatpush1.msra.mxu0 0.0
    %2371 = vmatprep.subr.mxu0 0.0
    %2372 = vmatpush1.msra.mxu0 0.0
    %2373 = vmatprep.subr.mxu0 0.0
    %2374 = vmatpush1.msra.mxu0 0.0
    %2375 = vmatprep.subr.mxu0 0.0
    %2376 = vmatpush1.msra.mxu0 0.0
    %2377 = vmatprep.subr.mxu0 0.0
    %2378 = vmatpush1.msra.mxu0 0.0
    %2379 = vmatprep.subr.mxu0 %v1645
    %2380 = vmatpush1.msra.mxu0 %v1644
    %2381 = vmatprep.subr.mxu0 %v1643
    %2382 = vmatpush1.msra.mxu0 %v1642
    %2383 = vmatprep.subr.mxu0 %v1641
    %2384 = vmatpush1.msra.mxu0 %v1640
    %2385 = vmatprep.subr.mxu0 %v1639
    %2386 = vmatpush1.msra.mxu0 %v1638
    %2387 = vmatprep.subr.mxu0 %v1637
    %2388 = vmatpush1.msra.mxu0 %v1636
    %2389 = vmatprep.subr.mxu0 %v1635
    %2390 = vmatpush1.msra.mxu0 %v1634
    %2391 = vmatprep.subr.mxu0 %v1633
    %2392 = vmatpush1.msra.mxu0 %v1632
    %2393 = vmatprep.subr.mxu0 %v1631
    %2394 = vmatpush1.msra.mxu0 %v1630
    %2395 = vmatprep.subr.mxu0 0.0
    %2396 = vmatpush2.msra.mxu0 0.0
    %2397 = vmatprep.subr.mxu0 0.0
    %2398 = vmatpush2.msra.mxu0 0.0
    %2399 = vmatprep.subr.mxu0 0.0
    %2400 = vmatpush2.msra.mxu0 0.0
    %2401 = vmatprep.subr.mxu0 0.0
    %2402 = vmatpush2.msra.mxu0 0.0
    %2403 = vmatprep.subr.mxu0 0.0
    %2404 = vmatpush2.msra.mxu0 0.0
    %2405 = vmatprep.subr.mxu0 0.0
    %2406 = vmatpush2.msra.mxu0 0.0
    %2407 = vmatprep.subr.mxu0 0.0
    %2408 = vmatpush2.msra.mxu0 0.0
    %2409 = vmatprep.subr.mxu0 0.0
    %2410 = vmatpush2.msra.mxu0 0.0
    %2411 = vmatprep.subr.mxu0 0.0
    %2412 = vmatpush2.msra.mxu0 0.0
    %2413 = vmatprep.subr.mxu0 0.0
    %2414 = vmatpush2.msra.mxu0 0.0
    %2415 = vmatprep.subr.mxu0 0.0
    %2416 = vmatpush2.msra.mxu0 0.0
    %2417 = vmatprep.subr.mxu0 0.0
    %2418 = vmatpush2.msra.mxu0 0.0
    %2419 = vmatprep.subr.mxu0 0.0
    %2420 = vmatpush2.msra.mxu0 0.0
    %2421 = vmatprep.subr.mxu0 0.0
    %2422 = vmatpush2.msra.mxu0 0.0
    %2423 = vmatprep.subr.mxu0 0.0
    %2424 = vmatpush2.msra.mxu0 0.0
    %2425 = vmatprep.subr.mxu0 0.0
    %2426 = vmatpush2.msra.mxu0 0.0
    %2427 = vmatprep.mubr.f32.mxu0 0.0
    %2428 = vmatmul.mubr.f32.gmra.mxu0 %v2274
    %v2429 = vpop.f32.mrf.mxu0
    %v2430 = vadd.f32 0.0, %v2429
    %v2431 = vpop.f32.mrf.mxu0
    %v2432 = vadd.f32 0.0, %v2431
    %2433 = vmatprep.mubr.f32.mxu0 0.0
    %2434 = vmatmul.mubr.f32.gmra.mxu0 %v2276
    %v2435 = vpop.f32.mrf.mxu0
    %v2436 = vadd.f32 0.0, %v2435
    %v2437 = vpop.f32.mrf.mxu0
    %v2438 = vadd.f32 0.0, %v2437
    %2439 = vdwg.mxu0
    %v2440 = vadd.f32 %v2359, %v2430
    %v2441 = vadd.f32 %v2360, %v2432
    %v2442 = vadd.f32 %v2361, %v2436
    %v2443 = vadd.f32 %v2362, %v2438
    %v2444 = vxor.u32 %v2440, 2147483648
    %v2445 = vxor.u32 %v2441, 2147483648
    %v2446 = vxor.u32 %v2442, 2147483648
    %v2447 = vxor.u32 %v2443, 2147483648
    %v2448 = vmul.f32 %v2444, 1.442695
    %v2449 = vpow.pop %v2448
    %v2450 = vmul.f32 %v2445, 1.442695
    %v2451 = vpow.pop %v2450
    %v2452 = vmul.f32 %v2446, 1.442695
    %v2453 = vpow.pop %v2452
    %v2454 = vmul.f32 %v2447, 1.442695
    %v2455 = vpow.pop %v2454
    %v2456 = vadd.f32 %v2449, 1.0
    %v2457 = vadd.f32 %v2451, 1.0
    %v2458 = vadd.f32 %v2453, 1.0
    %v2459 = vadd.f32 %v2455, 1.0
    %v2460 = vrcp.pop %v2456
    %v2461 = vmul.f32 1.0, %v2460
    %v2462 = vrcp.pop %v2457
    %v2463 = vmul.f32 1.0, %v2462
    %v2464 = vrcp.pop %v2458
    %v2465 = vmul.f32 1.0, %v2464
    %v2466 = vrcp.pop %v2459
    %v2467 = vmul.f32 1.0, %v2466
    %v2468 = vtanh.pop %v2441
    %v2469 = vtanh.pop %v2443
    %v2470 = vmul.f32 %v2461, %v2245
    %v2471 = vmul.f32 %v2465, %v2246
    %v2472 = vmul.f32 %v2461, %v2468
    %v2473 = vmul.f32 %v2465, %v2469
    %2476 = vrot.lane.b32.xlu0 %v2472, 64
    %v2477 = vpop.permute.xlu0 %2476
    %2478 = vrot.lane.b32.xlu0 %v2473, 64
    %v2479 = vpop.permute.xlu0 %2478
    %v2482 = vadd.f32 %v2470, %v2477
    %v2483 = vadd.f32 %v2471, %v2479
    %v2484 = vtanh.pop %v2482
    %v2485 = vtanh.pop %v2483
    %v2486 = vmul.f32 %v2463, %v2484
    %v2487 = vmul.f32 %v2467, %v2485
    %s2488 = scalar_lea.vmem %s8, 384
    %v2489 = vld [vmem:[%s2488] sm:$0xff]
    %v2490 = vld [vmem:[%s2488 + $0x8] sm:$0xff]
    %v2491 = vld [vmem:[%s2488 + $0x10] sm:$0xff]
    %v2492 = vld [vmem:[%s2488 + $0x18] sm:$0xff]
    %v2493 = vld [vmem:[%s2488 + $0x20] sm:$0xff]
    %v2494 = vld [vmem:[%s2488 + $0x28] sm:$0xff]
    %v2495 = vld [vmem:[%s2488 + $0x30] sm:$0xff]
    %v2496 = vld [vmem:[%s2488 + $0x38] sm:$0xff]
    %v2497 = vld [vmem:[%s2488 + $0x40] sm:$0xff]
    %v2498 = vld [vmem:[%s2488 + $0x48] sm:$0xff]
    %v2499 = vld [vmem:[%s2488 + $0x50] sm:$0xff]
    %v2500 = vld [vmem:[%s2488 + $0x58] sm:$0xff]
    %v2501 = vld [vmem:[%s2488 + $0x60] sm:$0xff]
    %v2502 = vld [vmem:[%s2488 + $0x68] sm:$0xff]
    %v2503 = vld [vmem:[%s2488 + $0x70] sm:$0xff]
    %v2504 = vld [vmem:[%s2488 + $0x78] sm:$0xff]
    %2507 = vrot.lane.b32.xlu0 %v2486, 64
    %v2508 = vpop.permute.xlu0 %2507
    %2509 = vrot.lane.b32.xlu0 %v2487, 64
    %v2510 = vpop.permute.xlu0 %2509
    %v2511 = vsel %vm233, %v2508, 0
    %v2513 = vsel %vm233, %v2510, 0
    %2515 = vmatprep.subr.mxu0 0.0
    %2516 = vmatpush1.msra.mxu0 0.0
    %2517 = vmatprep.subr.mxu0 0.0
    %2518 = vmatpush1.msra.mxu0 0.0
    %2519 = vmatprep.subr.mxu0 0.0
    %2520 = vmatpush1.msra.mxu0 0.0
    %2521 = vmatprep.subr.mxu0 0.0
    %2522 = vmatpush1.msra.mxu0 0.0
    %2523 = vmatprep.subr.mxu0 0.0
    %2524 = vmatpush1.msra.mxu0 0.0
    %2525 = vmatprep.subr.mxu0 0.0
    %2526 = vmatpush1.msra.mxu0 0.0
    %2527 = vmatprep.subr.mxu0 0.0
    %2528 = vmatpush1.msra.mxu0 0.0
    %2529 = vmatprep.subr.mxu0 0.0
    %2530 = vmatpush1.msra.mxu0 0.0
    %2531 = vmatprep.subr.mxu0 %v2504
    %2532 = vmatpush1.msra.mxu0 %v2503
    %2533 = vmatprep.subr.mxu0 %v2502
    %2534 = vmatpush1.msra.mxu0 %v2501
    %2535 = vmatprep.subr.mxu0 %v2500
    %2536 = vmatpush1.msra.mxu0 %v2499
    %2537 = vmatprep.subr.mxu0 %v2498
    %2538 = vmatpush1.msra.mxu0 %v2497
    %2539 = vmatprep.subr.mxu0 %v2496
    %2540 = vmatpush1.msra.mxu0 %v2495
    %2541 = vmatprep.subr.mxu0 %v2494
    %2542 = vmatpush1.msra.mxu0 %v2493
    %2543 = vmatprep.subr.mxu0 %v2492
    %2544 = vmatpush1.msra.mxu0 %v2491
    %2545 = vmatprep.subr.mxu0 %v2490
    %2546 = vmatpush1.msra.mxu0 %v2489
    %2547 = vmatprep.subr.mxu0 0.0
    %2548 = vmatpush2.msra.mxu0 0.0
    %2549 = vmatprep.subr.mxu0 0.0
    %2550 = vmatpush2.msra.mxu0 0.0
    %2551 = vmatprep.subr.mxu0 0.0
    %2552 = vmatpush2.msra.mxu0 0.0
    %2553 = vmatprep.subr.mxu0 0.0
    %2554 = vmatpush2.msra.mxu0 0.0
    %2555 = vmatprep.subr.mxu0 0.0
    %2556 = vmatpush2.msra.mxu0 0.0
    %2557 = vmatprep.subr.mxu0 0.0
    %2558 = vmatpush2.msra.mxu0 0.0
    %2559 = vmatprep.subr.mxu0 0.0
    %2560 = vmatpush2.msra.mxu0 0.0
    %2561 = vmatprep.subr.mxu0 0.0
    %2562 = vmatpush2.msra.mxu0 0.0
    %2563 = vmatprep.subr.mxu0 0.0
    %2564 = vmatpush2.msra.mxu0 0.0
    %2565 = vmatprep.subr.mxu0 0.0
    %2566 = vmatpush2.msra.mxu0 0.0
    %2567 = vmatprep.subr.mxu0 0.0
    %2568 = vmatpush2.msra.mxu0 0.0
    %2569 = vmatprep.subr.mxu0 0.0
    %2570 = vmatpush2.msra.mxu0 0.0
    %2571 = vmatprep.subr.mxu0 0.0
    %2572 = vmatpush2.msra.mxu0 0.0
    %2573 = vmatprep.subr.mxu0 0.0
    %2574 = vmatpush2.msra.mxu0 0.0
    %2575 = vmatprep.subr.mxu0 0.0
    %2576 = vmatpush2.msra.mxu0 0.0
    %2577 = vmatprep.subr.mxu0 0.0
    %2578 = vmatpush2.msra.mxu0 0.0
    %2579 = vmatprep.mubr.f32.mxu0 0.0
    %2580 = vmatmul.mubr.f32.gmra.mxu0 %v2511
    %v2581 = vpop.f32.mrf.mxu0
    %v2582 = vadd.f32 0.0, %v2581
    %v2583 = vpop.f32.mrf.mxu0
    %v2584 = vadd.f32 0.0, %v2583
    %2585 = vmatprep.mubr.f32.mxu0 0.0
    %2586 = vmatmul.mubr.f32.gmra.mxu0 %v2513
    %v2587 = vpop.f32.mrf.mxu0
    %v2588 = vadd.f32 0.0, %v2587
    %v2589 = vpop.f32.mrf.mxu0
    %v2590 = vadd.f32 0.0, %v2589
    %2591 = vdwg.mxu0
    %v2592 = vadd.f32 %v2355, %v2582
    %v2593 = vadd.f32 %v2356, %v2584
    %v2594 = vadd.f32 %v2357, %v2588
    %v2595 = vadd.f32 %v2358, %v2590
    %v2596 = vld [vmem:[#allocation3 + $0x80] sm:$0xff]
    %v2597 = vld [vmem:[#allocation3 + $0x88] sm:$0xff]
    %v2598 = vld [vmem:[#allocation3 + $0x90] sm:$0xff]
    %v2599 = vld [vmem:[#allocation3 + $0x98] sm:$0xff]
    %2600 = vmatprep.subr.mxu0 0.0
    %2601 = vmatpush1.msra.mxu0 0.0
    %2602 = vmatprep.subr.mxu0 0.0
    %2603 = vmatpush1.msra.mxu0 0.0
    %2604 = vmatprep.subr.mxu0 0.0
    %2605 = vmatpush1.msra.mxu0 0.0
    %2606 = vmatprep.subr.mxu0 0.0
    %2607 = vmatpush1.msra.mxu0 0.0
    %2608 = vmatprep.subr.mxu0 0.0
    %2609 = vmatpush1.msra.mxu0 0.0
    %2610 = vmatprep.subr.mxu0 0.0
    %2611 = vmatpush1.msra.mxu0 0.0
    %2612 = vmatprep.subr.mxu0 0.0
    %2613 = vmatpush1.msra.mxu0 0.0
    %2614 = vmatprep.subr.mxu0 0.0
    %2615 = vmatpush1.msra.mxu0 0.0
    %2616 = vmatprep.subr.mxu0 %v1645
    %2617 = vmatpush1.msra.mxu0 %v1644
    %2618 = vmatprep.subr.mxu0 %v1643
    %2619 = vmatpush1.msra.mxu0 %v1642
    %2620 = vmatprep.subr.mxu0 %v1641
    %2621 = vmatpush1.msra.mxu0 %v1640
    %2622 = vmatprep.subr.mxu0 %v1639
    %2623 = vmatpush1.msra.mxu0 %v1638
    %2624 = vmatprep.subr.mxu0 %v1637
    %2625 = vmatpush1.msra.mxu0 %v1636
    %2626 = vmatprep.subr.mxu0 %v1635
    %2627 = vmatpush1.msra.mxu0 %v1634
    %2628 = vmatprep.subr.mxu0 %v1633
    %2629 = vmatpush1.msra.mxu0 %v1632
    %2630 = vmatprep.subr.mxu0 %v1631
    %2631 = vmatpush1.msra.mxu0 %v1630
    %2632 = vmatprep.subr.mxu0 0.0
    %2633 = vmatpush2.msra.mxu0 0.0
    %2634 = vmatprep.subr.mxu0 0.0
    %2635 = vmatpush2.msra.mxu0 0.0
    %2636 = vmatprep.subr.mxu0 0.0
    %2637 = vmatpush2.msra.mxu0 0.0
    %2638 = vmatprep.subr.mxu0 0.0
    %2639 = vmatpush2.msra.mxu0 0.0
    %2640 = vmatprep.subr.mxu0 0.0
    %2641 = vmatpush2.msra.mxu0 0.0
    %2642 = vmatprep.subr.mxu0 0.0
    %2643 = vmatpush2.msra.mxu0 0.0
    %2644 = vmatprep.subr.mxu0 0.0
    %2645 = vmatpush2.msra.mxu0 0.0
    %2646 = vmatprep.subr.mxu0 0.0
    %2647 = vmatpush2.msra.mxu0 0.0
    %2648 = vmatprep.subr.mxu0 0.0
    %2649 = vmatpush2.msra.mxu0 0.0
    %2650 = vmatprep.subr.mxu0 0.0
    %2651 = vmatpush2.msra.mxu0 0.0
    %2652 = vmatprep.subr.mxu0 0.0
    %2653 = vmatpush2.msra.mxu0 0.0
    %2654 = vmatprep.subr.mxu0 0.0
    %2655 = vmatpush2.msra.mxu0 0.0
    %2656 = vmatprep.subr.mxu0 0.0
    %2657 = vmatpush2.msra.mxu0 0.0
    %2658 = vmatprep.subr.mxu0 0.0
    %2659 = vmatpush2.msra.mxu0 0.0
    %2660 = vmatprep.subr.mxu0 0.0
    %2661 = vmatpush2.msra.mxu0 0.0
    %2662 = vmatprep.subr.mxu0 0.0
    %2663 = vmatpush2.msra.mxu0 0.0
    %2664 = vmatprep.mubr.f32.mxu0 0.0
    %2665 = vmatmul.mubr.f32.gmra.mxu0 %v2511
    %v2666 = vpop.f32.mrf.mxu0
    %v2667 = vadd.f32 0.0, %v2666
    %v2668 = vpop.f32.mrf.mxu0
    %v2669 = vadd.f32 0.0, %v2668
    %2670 = vmatprep.mubr.f32.mxu0 0.0
    %2671 = vmatmul.mubr.f32.gmra.mxu0 %v2513
    %v2672 = vpop.f32.mrf.mxu0
    %v2673 = vadd.f32 0.0, %v2672
    %v2674 = vpop.f32.mrf.mxu0
    %v2675 = vadd.f32 0.0, %v2674
    %2676 = vdwg.mxu0
    %v2677 = vadd.f32 %v2596, %v2667
    %v2678 = vadd.f32 %v2597, %v2669
    %v2679 = vadd.f32 %v2598, %v2673
    %v2680 = vadd.f32 %v2599, %v2675
    %v2681 = vxor.u32 %v2677, 2147483648
    %v2682 = vxor.u32 %v2678, 2147483648
    %v2683 = vxor.u32 %v2679, 2147483648
    %v2684 = vxor.u32 %v2680, 2147483648
    %v2685 = vmul.f32 %v2681, 1.442695
    %v2686 = vpow.pop %v2685
    %v2687 = vmul.f32 %v2682, 1.442695
    %v2688 = vpow.pop %v2687
    %v2689 = vmul.f32 %v2683, 1.442695
    %v2690 = vpow.pop %v2689
    %v2691 = vmul.f32 %v2684, 1.442695
    %v2692 = vpow.pop %v2691
    %v2693 = vadd.f32 %v2686, 1.0
    %v2694 = vadd.f32 %v2688, 1.0
    %v2695 = vadd.f32 %v2690, 1.0
    %v2696 = vadd.f32 %v2692, 1.0
    %v2697 = vrcp.pop %v2693
    %v2698 = vmul.f32 1.0, %v2697
    %v2699 = vrcp.pop %v2694
    %v2700 = vmul.f32 1.0, %v2699
    %v2701 = vrcp.pop %v2695
    %v2702 = vmul.f32 1.0, %v2701
    %v2703 = vrcp.pop %v2696
    %v2704 = vmul.f32 1.0, %v2703
    %v2705 = vtanh.pop %v2678
    %v2706 = vtanh.pop %v2680
    %v2707 = vmul.f32 %v2698, %v2482
    %v2708 = vmul.f32 %v2702, %v2483
    %v2709 = vmul.f32 %v2698, %v2705
    %v2710 = vmul.f32 %v2702, %v2706
    %2713 = vrot.lane.b32.xlu0 %v2709, 64
    %v2714 = vpop.permute.xlu0 %2713
    %2715 = vrot.lane.b32.xlu0 %v2710, 64
    %v2716 = vpop.permute.xlu0 %2715
    %v2719 = vadd.f32 %v2707, %v2714
    %v2720 = vadd.f32 %v2708, %v2716
    %v2721 = vtanh.pop %v2719
    %v2722 = vtanh.pop %v2720
    %v2723 = vmul.f32 %v2700, %v2721
    %v2724 = vmul.f32 %v2704, %v2722
    %s2725 = scalar_lea.vmem %s8, 512
    %v2726 = vld [vmem:[%s2725] sm:$0xff]
    %v2727 = vld [vmem:[%s2725 + $0x8] sm:$0xff]
    %v2728 = vld [vmem:[%s2725 + $0x10] sm:$0xff]
    %v2729 = vld [vmem:[%s2725 + $0x18] sm:$0xff]
    %v2730 = vld [vmem:[%s2725 + $0x20] sm:$0xff]
    %v2731 = vld [vmem:[%s2725 + $0x28] sm:$0xff]
    %v2732 = vld [vmem:[%s2725 + $0x30] sm:$0xff]
    %v2733 = vld [vmem:[%s2725 + $0x38] sm:$0xff]
    %v2734 = vld [vmem:[%s2725 + $0x40] sm:$0xff]
    %v2735 = vld [vmem:[%s2725 + $0x48] sm:$0xff]
    %v2736 = vld [vmem:[%s2725 + $0x50] sm:$0xff]
    %v2737 = vld [vmem:[%s2725 + $0x58] sm:$0xff]
    %v2738 = vld [vmem:[%s2725 + $0x60] sm:$0xff]
    %v2739 = vld [vmem:[%s2725 + $0x68] sm:$0xff]
    %v2740 = vld [vmem:[%s2725 + $0x70] sm:$0xff]
    %v2741 = vld [vmem:[%s2725 + $0x78] sm:$0xff]
    %2744 = vrot.lane.b32.xlu0 %v2723, 64
    %v2745 = vpop.permute.xlu0 %2744
    %2746 = vrot.lane.b32.xlu0 %v2724, 64
    %v2747 = vpop.permute.xlu0 %2746
    %v2748 = vsel %vm233, %v2745, 0
    %v2750 = vsel %vm233, %v2747, 0
    %2752 = vmatprep.subr.mxu0 0.0
    %2753 = vmatpush1.msra.mxu0 0.0
    %2754 = vmatprep.subr.mxu0 0.0
    %2755 = vmatpush1.msra.mxu0 0.0
    %2756 = vmatprep.subr.mxu0 0.0
    %2757 = vmatpush1.msra.mxu0 0.0
    %2758 = vmatprep.subr.mxu0 0.0
    %2759 = vmatpush1.msra.mxu0 0.0
    %2760 = vmatprep.subr.mxu0 0.0
    %2761 = vmatpush1.msra.mxu0 0.0
    %2762 = vmatprep.subr.mxu0 0.0
    %2763 = vmatpush1.msra.mxu0 0.0
    %2764 = vmatprep.subr.mxu0 0.0
    %2765 = vmatpush1.msra.mxu0 0.0
    %2766 = vmatprep.subr.mxu0 0.0
    %2767 = vmatpush1.msra.mxu0 0.0
    %2768 = vmatprep.subr.mxu0 %v2741
    %2769 = vmatpush1.msra.mxu0 %v2740
    %2770 = vmatprep.subr.mxu0 %v2739
    %2771 = vmatpush1.msra.mxu0 %v2738
    %2772 = vmatprep.subr.mxu0 %v2737
    %2773 = vmatpush1.msra.mxu0 %v2736
    %2774 = vmatprep.subr.mxu0 %v2735
    %2775 = vmatpush1.msra.mxu0 %v2734
    %2776 = vmatprep.subr.mxu0 %v2733
    %2777 = vmatpush1.msra.mxu0 %v2732
    %2778 = vmatprep.subr.mxu0 %v2731
    %2779 = vmatpush1.msra.mxu0 %v2730
    %2780 = vmatprep.subr.mxu0 %v2729
    %2781 = vmatpush1.msra.mxu0 %v2728
    %2782 = vmatprep.subr.mxu0 %v2727
    %2783 = vmatpush1.msra.mxu0 %v2726
    %2784 = vmatprep.subr.mxu0 0.0
    %2785 = vmatpush2.msra.mxu0 0.0
    %2786 = vmatprep.subr.mxu0 0.0
    %2787 = vmatpush2.msra.mxu0 0.0
    %2788 = vmatprep.subr.mxu0 0.0
    %2789 = vmatpush2.msra.mxu0 0.0
    %2790 = vmatprep.subr.mxu0 0.0
    %2791 = vmatpush2.msra.mxu0 0.0
    %2792 = vmatprep.subr.mxu0 0.0
    %2793 = vmatpush2.msra.mxu0 0.0
    %2794 = vmatprep.subr.mxu0 0.0
    %2795 = vmatpush2.msra.mxu0 0.0
    %2796 = vmatprep.subr.mxu0 0.0
    %2797 = vmatpush2.msra.mxu0 0.0
    %2798 = vmatprep.subr.mxu0 0.0
    %2799 = vmatpush2.msra.mxu0 0.0
    %2800 = vmatprep.subr.mxu0 0.0
    %2801 = vmatpush2.msra.mxu0 0.0
    %2802 = vmatprep.subr.mxu0 0.0
    %2803 = vmatpush2.msra.mxu0 0.0
    %2804 = vmatprep.subr.mxu0 0.0
    %2805 = vmatpush2.msra.mxu0 0.0
    %2806 = vmatprep.subr.mxu0 0.0
    %2807 = vmatpush2.msra.mxu0 0.0
    %2808 = vmatprep.subr.mxu0 0.0
    %2809 = vmatpush2.msra.mxu0 0.0
    %2810 = vmatprep.subr.mxu0 0.0
    %2811 = vmatpush2.msra.mxu0 0.0
    %2812 = vmatprep.subr.mxu0 0.0
    %2813 = vmatpush2.msra.mxu0 0.0
    %2814 = vmatprep.subr.mxu0 0.0
    %2815 = vmatpush2.msra.mxu0 0.0
    %2816 = vmatprep.mubr.f32.mxu0 0.0
    %2817 = vmatmul.mubr.f32.gmra.mxu0 %v2748
    %v2818 = vpop.f32.mrf.mxu0
    %v2819 = vadd.f32 0.0, %v2818
    %v2820 = vpop.f32.mrf.mxu0
    %v2821 = vadd.f32 0.0, %v2820
    %2822 = vmatprep.mubr.f32.mxu0 0.0
    %2823 = vmatmul.mubr.f32.gmra.mxu0 %v2750
    %v2824 = vpop.f32.mrf.mxu0
    %v2825 = vadd.f32 0.0, %v2824
    %v2826 = vpop.f32.mrf.mxu0
    %v2827 = vadd.f32 0.0, %v2826
    %2828 = vdwg.mxu0
    %v2829 = vadd.f32 %v2592, %v2819
    %v2830 = vadd.f32 %v2593, %v2821
    %v2831 = vadd.f32 %v2594, %v2825
    %v2832 = vadd.f32 %v2595, %v2827
    %v2833 = vld [vmem:[#allocation3 + $0xa0] sm:$0xff]
    %v2834 = vld [vmem:[#allocation3 + $0xa8] sm:$0xff]
    %v2835 = vld [vmem:[#allocation3 + $0xb0] sm:$0xff]
    %v2836 = vld [vmem:[#allocation3 + $0xb8] sm:$0xff]
    %2837 = vmatprep.subr.mxu0 0.0
    %2838 = vmatpush1.msra.mxu0 0.0
    %2839 = vmatprep.subr.mxu0 0.0
    %2840 = vmatpush1.msra.mxu0 0.0
    %2841 = vmatprep.subr.mxu0 0.0
    %2842 = vmatpush1.msra.mxu0 0.0
    %2843 = vmatprep.subr.mxu0 0.0
    %2844 = vmatpush1.msra.mxu0 0.0
    %2845 = vmatprep.subr.mxu0 0.0
    %2846 = vmatpush1.msra.mxu0 0.0
    %2847 = vmatprep.subr.mxu0 0.0
    %2848 = vmatpush1.msra.mxu0 0.0
    %2849 = vmatprep.subr.mxu0 0.0
    %2850 = vmatpush1.msra.mxu0 0.0
    %2851 = vmatprep.subr.mxu0 0.0
    %2852 = vmatpush1.msra.mxu0 0.0
    %2853 = vmatprep.subr.mxu0 %v1645
    %2854 = vmatpush1.msra.mxu0 %v1644
    %2855 = vmatprep.subr.mxu0 %v1643
    %2856 = vmatpush1.msra.mxu0 %v1642
    %2857 = vmatprep.subr.mxu0 %v1641
    %2858 = vmatpush1.msra.mxu0 %v1640
    %2859 = vmatprep.subr.mxu0 %v1639
    %2860 = vmatpush1.msra.mxu0 %v1638
    %2861 = vmatprep.subr.mxu0 %v1637
    %2862 = vmatpush1.msra.mxu0 %v1636
    %2863 = vmatprep.subr.mxu0 %v1635
    %2864 = vmatpush1.msra.mxu0 %v1634
    %2865 = vmatprep.subr.mxu0 %v1633
    %2866 = vmatpush1.msra.mxu0 %v1632
    %2867 = vmatprep.subr.mxu0 %v1631
    %2868 = vmatpush1.msra.mxu0 %v1630
    %2869 = vmatprep.subr.mxu0 0.0
    %2870 = vmatpush2.msra.mxu0 0.0
    %2871 = vmatprep.subr.mxu0 0.0
    %2872 = vmatpush2.msra.mxu0 0.0
    %2873 = vmatprep.subr.mxu0 0.0
    %2874 = vmatpush2.msra.mxu0 0.0
    %2875 = vmatprep.subr.mxu0 0.0
    %2876 = vmatpush2.msra.mxu0 0.0
    %2877 = vmatprep.subr.mxu0 0.0
    %2878 = vmatpush2.msra.mxu0 0.0
    %2879 = vmatprep.subr.mxu0 0.0
    %2880 = vmatpush2.msra.mxu0 0.0
    %2881 = vmatprep.subr.mxu0 0.0
    %2882 = vmatpush2.msra.mxu0 0.0
    %2883 = vmatprep.subr.mxu0 0.0
    %2884 = vmatpush2.msra.mxu0 0.0
    %2885 = vmatprep.subr.mxu0 0.0
    %2886 = vmatpush2.msra.mxu0 0.0
    %2887 = vmatprep.subr.mxu0 0.0
    %2888 = vmatpush2.msra.mxu0 0.0
    %2889 = vmatprep.subr.mxu0 0.0
    %2890 = vmatpush2.msra.mxu0 0.0
    %2891 = vmatprep.subr.mxu0 0.0
    %2892 = vmatpush2.msra.mxu0 0.0
    %2893 = vmatprep.subr.mxu0 0.0
    %2894 = vmatpush2.msra.mxu0 0.0
    %2895 = vmatprep.subr.mxu0 0.0
    %2896 = vmatpush2.msra.mxu0 0.0
    %2897 = vmatprep.subr.mxu0 0.0
    %2898 = vmatpush2.msra.mxu0 0.0
    %2899 = vmatprep.subr.mxu0 0.0
    %2900 = vmatpush2.msra.mxu0 0.0
    %2901 = vmatprep.mubr.f32.mxu0 0.0
    %2902 = vmatmul.mubr.f32.gmra.mxu0 %v2748
    %v2903 = vpop.f32.mrf.mxu0
    %v2904 = vadd.f32 0.0, %v2903
    %v2905 = vpop.f32.mrf.mxu0
    %v2906 = vadd.f32 0.0, %v2905
    %2907 = vmatprep.mubr.f32.mxu0 0.0
    %2908 = vmatmul.mubr.f32.gmra.mxu0 %v2750
    %v2909 = vpop.f32.mrf.mxu0
    %v2910 = vadd.f32 0.0, %v2909
    %v2911 = vpop.f32.mrf.mxu0
    %v2912 = vadd.f32 0.0, %v2911
    %2913 = vdwg.mxu0
    %v2914 = vadd.f32 %v2833, %v2904
    %v2915 = vadd.f32 %v2834, %v2906
    %v2916 = vadd.f32 %v2835, %v2910
    %v2917 = vadd.f32 %v2836, %v2912
    %v2918 = vxor.u32 %v2914, 2147483648
    %v2919 = vxor.u32 %v2915, 2147483648
    %v2920 = vxor.u32 %v2916, 2147483648
    %v2921 = vxor.u32 %v2917, 2147483648
    %v2922 = vmul.f32 %v2918, 1.442695
    %v2923 = vpow.pop %v2922
    %v2924 = vmul.f32 %v2919, 1.442695
    %v2925 = vpow.pop %v2924
    %v2926 = vmul.f32 %v2920, 1.442695
    %v2927 = vpow.pop %v2926
    %v2928 = vmul.f32 %v2921, 1.442695
    %v2929 = vpow.pop %v2928
    %v2930 = vadd.f32 %v2923, 1.0
    %v2931 = vadd.f32 %v2925, 1.0
    %v2932 = vadd.f32 %v2927, 1.0
    %v2933 = vadd.f32 %v2929, 1.0
    %v2934 = vrcp.pop %v2930
    %v2935 = vmul.f32 1.0, %v2934
    %v2936 = vrcp.pop %v2931
    %v2937 = vmul.f32 1.0, %v2936
    %v2938 = vrcp.pop %v2932
    %v2939 = vmul.f32 1.0, %v2938
    %v2940 = vrcp.pop %v2933
    %v2941 = vmul.f32 1.0, %v2940
    %v2942 = vtanh.pop %v2915
    %v2943 = vtanh.pop %v2917
    %v2944 = vmul.f32 %v2935, %v2719
    %v2945 = vmul.f32 %v2939, %v2720
    %v2946 = vmul.f32 %v2935, %v2942
    %v2947 = vmul.f32 %v2939, %v2943
    %2950 = vrot.lane.b32.xlu0 %v2946, 64
    %v2951 = vpop.permute.xlu0 %2950
    %2952 = vrot.lane.b32.xlu0 %v2947, 64
    %v2953 = vpop.permute.xlu0 %2952
    %v2956 = vadd.f32 %v2944, %v2951
    %v2957 = vadd.f32 %v2945, %v2953
    %v2958 = vtanh.pop %v2956
    %v2959 = vtanh.pop %v2957
    %v2960 = vmul.f32 %v2937, %v2958
    %v2961 = vmul.f32 %v2941, %v2959
    %s2962 = scalar_lea.vmem %s8, 640
    %v2963 = vld [vmem:[%s2962] sm:$0xff]
    %v2964 = vld [vmem:[%s2962 + $0x8] sm:$0xff]
    %v2965 = vld [vmem:[%s2962 + $0x10] sm:$0xff]
    %v2966 = vld [vmem:[%s2962 + $0x18] sm:$0xff]
    %v2967 = vld [vmem:[%s2962 + $0x20] sm:$0xff]
    %v2968 = vld [vmem:[%s2962 + $0x28] sm:$0xff]
    %v2969 = vld [vmem:[%s2962 + $0x30] sm:$0xff]
    %v2970 = vld [vmem:[%s2962 + $0x38] sm:$0xff]
    %v2971 = vld [vmem:[%s2962 + $0x40] sm:$0xff]
    %v2972 = vld [vmem:[%s2962 + $0x48] sm:$0xff]
    %v2973 = vld [vmem:[%s2962 + $0x50] sm:$0xff]
    %v2974 = vld [vmem:[%s2962 + $0x58] sm:$0xff]
    %v2975 = vld [vmem:[%s2962 + $0x60] sm:$0xff]
    %v2976 = vld [vmem:[%s2962 + $0x68] sm:$0xff]
    %v2977 = vld [vmem:[%s2962 + $0x70] sm:$0xff]
    %v2978 = vld [vmem:[%s2962 + $0x78] sm:$0xff]
    %2981 = vrot.lane.b32.xlu0 %v2960, 64
    %v2982 = vpop.permute.xlu0 %2981
    %2983 = vrot.lane.b32.xlu0 %v2961, 64
    %v2984 = vpop.permute.xlu0 %2983
    %v2985 = vsel %vm233, %v2982, 0
    %v2987 = vsel %vm233, %v2984, 0
    %2989 = vmatprep.subr.mxu0 0.0
    %2990 = vmatpush1.msra.mxu0 0.0
    %2991 = vmatprep.subr.mxu0 0.0
    %2992 = vmatpush1.msra.mxu0 0.0
    %2993 = vmatprep.subr.mxu0 0.0
    %2994 = vmatpush1.msra.mxu0 0.0
    %2995 = vmatprep.subr.mxu0 0.0
    %2996 = vmatpush1.msra.mxu0 0.0
    %2997 = vmatprep.subr.mxu0 0.0
    %2998 = vmatpush1.msra.mxu0 0.0
    %2999 = vmatprep.subr.mxu0 0.0
    %3000 = vmatpush1.msra.mxu0 0.0
    %3001 = vmatprep.subr.mxu0 0.0
    %3002 = vmatpush1.msra.mxu0 0.0
    %3003 = vmatprep.subr.mxu0 0.0
    %3004 = vmatpush1.msra.mxu0 0.0
    %3005 = vmatprep.subr.mxu0 %v2978
    %3006 = vmatpush1.msra.mxu0 %v2977
    %3007 = vmatprep.subr.mxu0 %v2976
    %3008 = vmatpush1.msra.mxu0 %v2975
    %3009 = vmatprep.subr.mxu0 %v2974
    %3010 = vmatpush1.msra.mxu0 %v2973
    %3011 = vmatprep.subr.mxu0 %v2972
    %3012 = vmatpush1.msra.mxu0 %v2971
    %3013 = vmatprep.subr.mxu0 %v2970
    %3014 = vmatpush1.msra.mxu0 %v2969
    %3015 = vmatprep.subr.mxu0 %v2968
    %3016 = vmatpush1.msra.mxu0 %v2967
    %3017 = vmatprep.subr.mxu0 %v2966
    %3018 = vmatpush1.msra.mxu0 %v2965
    %3019 = vmatprep.subr.mxu0 %v2964
    %3020 = vmatpush1.msra.mxu0 %v2963
    %3021 = vmatprep.subr.mxu0 0.0
    %3022 = vmatpush2.msra.mxu0 0.0
    %3023 = vmatprep.subr.mxu0 0.0
    %3024 = vmatpush2.msra.mxu0 0.0
    %3025 = vmatprep.subr.mxu0 0.0
    %3026 = vmatpush2.msra.mxu0 0.0
    %3027 = vmatprep.subr.mxu0 0.0
    %3028 = vmatpush2.msra.mxu0 0.0
    %3029 = vmatprep.subr.mxu0 0.0
    %3030 = vmatpush2.msra.mxu0 0.0
    %3031 = vmatprep.subr.mxu0 0.0
    %3032 = vmatpush2.msra.mxu0 0.0
    %3033 = vmatprep.subr.mxu0 0.0
    %3034 = vmatpush2.msra.mxu0 0.0
    %3035 = vmatprep.subr.mxu0 0.0
    %3036 = vmatpush2.msra.mxu0 0.0
    %3037 = vmatprep.subr.mxu0 0.0
    %3038 = vmatpush2.msra.mxu0 0.0
    %3039 = vmatprep.subr.mxu0 0.0
    %3040 = vmatpush2.msra.mxu0 0.0
    %3041 = vmatprep.subr.mxu0 0.0
    %3042 = vmatpush2.msra.mxu0 0.0
    %3043 = vmatprep.subr.mxu0 0.0
    %3044 = vmatpush2.msra.mxu0 0.0
    %3045 = vmatprep.subr.mxu0 0.0
    %3046 = vmatpush2.msra.mxu0 0.0
    %3047 = vmatprep.subr.mxu0 0.0
    %3048 = vmatpush2.msra.mxu0 0.0
    %3049 = vmatprep.subr.mxu0 0.0
    %3050 = vmatpush2.msra.mxu0 0.0
    %3051 = vmatprep.subr.mxu0 0.0
    %3052 = vmatpush2.msra.mxu0 0.0
    %3053 = vmatprep.mubr.f32.mxu0 0.0
    %3054 = vmatmul.mubr.f32.gmra.mxu0 %v2985
    %v3055 = vpop.f32.mrf.mxu0
    %v3056 = vadd.f32 0.0, %v3055
    %v3057 = vpop.f32.mrf.mxu0
    %v3058 = vadd.f32 0.0, %v3057
    %3059 = vmatprep.mubr.f32.mxu0 0.0
    %3060 = vmatmul.mubr.f32.gmra.mxu0 %v2987
    %v3061 = vpop.f32.mrf.mxu0
    %v3062 = vadd.f32 0.0, %v3061
    %v3063 = vpop.f32.mrf.mxu0
    %v3064 = vadd.f32 0.0, %v3063
    %3065 = vdwg.mxu0
    %v3066 = vadd.f32 %v2829, %v3056
    %v3067 = vadd.f32 %v2830, %v3058
    %v3068 = vadd.f32 %v2831, %v3062
    %v3069 = vadd.f32 %v2832, %v3064
    %v3070 = vld [vmem:[#allocation3 + $0xc0] sm:$0xff]
    %v3071 = vld [vmem:[#allocation3 + $0xc8] sm:$0xff]
    %v3072 = vld [vmem:[#allocation3 + $0xd0] sm:$0xff]
    %v3073 = vld [vmem:[#allocation3 + $0xd8] sm:$0xff]
    %3074 = vmatprep.subr.mxu0 0.0
    %3075 = vmatpush1.msra.mxu0 0.0
    %3076 = vmatprep.subr.mxu0 0.0
    %3077 = vmatpush1.msra.mxu0 0.0
    %3078 = vmatprep.subr.mxu0 0.0
    %3079 = vmatpush1.msra.mxu0 0.0
    %3080 = vmatprep.subr.mxu0 0.0
    %3081 = vmatpush1.msra.mxu0 0.0
    %3082 = vmatprep.subr.mxu0 0.0
    %3083 = vmatpush1.msra.mxu0 0.0
    %3084 = vmatprep.subr.mxu0 0.0
    %3085 = vmatpush1.msra.mxu0 0.0
    %3086 = vmatprep.subr.mxu0 0.0
    %3087 = vmatpush1.msra.mxu0 0.0
    %3088 = vmatprep.subr.mxu0 0.0
    %3089 = vmatpush1.msra.mxu0 0.0
    %3090 = vmatprep.subr.mxu0 %v1645
    %3091 = vmatpush1.msra.mxu0 %v1644
    %3092 = vmatprep.subr.mxu0 %v1643
    %3093 = vmatpush1.msra.mxu0 %v1642
    %3094 = vmatprep.subr.mxu0 %v1641
    %3095 = vmatpush1.msra.mxu0 %v1640
    %3096 = vmatprep.subr.mxu0 %v1639
    %3097 = vmatpush1.msra.mxu0 %v1638
    %3098 = vmatprep.subr.mxu0 %v1637
    %3099 = vmatpush1.msra.mxu0 %v1636
    %3100 = vmatprep.subr.mxu0 %v1635
    %3101 = vmatpush1.msra.mxu0 %v1634
    %3102 = vmatprep.subr.mxu0 %v1633
    %3103 = vmatpush1.msra.mxu0 %v1632
    %3104 = vmatprep.subr.mxu0 %v1631
    %3105 = vmatpush1.msra.mxu0 %v1630
    %3106 = vmatprep.subr.mxu0 0.0
    %3107 = vmatpush2.msra.mxu0 0.0
    %3108 = vmatprep.subr.mxu0 0.0
    %3109 = vmatpush2.msra.mxu0 0.0
    %3110 = vmatprep.subr.mxu0 0.0
    %3111 = vmatpush2.msra.mxu0 0.0
    %3112 = vmatprep.subr.mxu0 0.0
    %3113 = vmatpush2.msra.mxu0 0.0
    %3114 = vmatprep.subr.mxu0 0.0
    %3115 = vmatpush2.msra.mxu0 0.0
    %3116 = vmatprep.subr.mxu0 0.0
    %3117 = vmatpush2.msra.mxu0 0.0
    %3118 = vmatprep.subr.mxu0 0.0
    %3119 = vmatpush2.msra.mxu0 0.0
    %3120 = vmatprep.subr.mxu0 0.0
    %3121 = vmatpush2.msra.mxu0 0.0
    %3122 = vmatprep.subr.mxu0 0.0
    %3123 = vmatpush2.msra.mxu0 0.0
    %3124 = vmatprep.subr.mxu0 0.0
    %3125 = vmatpush2.msra.mxu0 0.0
    %3126 = vmatprep.subr.mxu0 0.0
    %3127 = vmatpush2.msra.mxu0 0.0
    %3128 = vmatprep.subr.mxu0 0.0
    %3129 = vmatpush2.msra.mxu0 0.0
    %3130 = vmatprep.subr.mxu0 0.0
    %3131 = vmatpush2.msra.mxu0 0.0
    %3132 = vmatprep.subr.mxu0 0.0
    %3133 = vmatpush2.msra.mxu0 0.0
    %3134 = vmatprep.subr.mxu0 0.0
    %3135 = vmatpush2.msra.mxu0 0.0
    %3136 = vmatprep.subr.mxu0 0.0
    %3137 = vmatpush2.msra.mxu0 0.0
    %3138 = vmatprep.mubr.f32.mxu0 0.0
    %3139 = vmatmul.mubr.f32.gmra.mxu0 %v2985
    %v3140 = vpop.f32.mrf.mxu0
    %v3141 = vadd.f32 0.0, %v3140
    %v3142 = vpop.f32.mrf.mxu0
    %v3143 = vadd.f32 0.0, %v3142
    %3144 = vmatprep.mubr.f32.mxu0 0.0
    %3145 = vmatmul.mubr.f32.gmra.mxu0 %v2987
    %v3146 = vpop.f32.mrf.mxu0
    %v3147 = vadd.f32 0.0, %v3146
    %v3148 = vpop.f32.mrf.mxu0
    %v3149 = vadd.f32 0.0, %v3148
    %3150 = vdwg.mxu0
    %v3151 = vadd.f32 %v3070, %v3141
    %v3152 = vadd.f32 %v3071, %v3143
    %v3153 = vadd.f32 %v3072, %v3147
    %v3154 = vadd.f32 %v3073, %v3149
    %v3155 = vxor.u32 %v3151, 2147483648
    %v3156 = vxor.u32 %v3152, 2147483648
    %v3157 = vxor.u32 %v3153, 2147483648
    %v3158 = vxor.u32 %v3154, 2147483648
    %v3159 = vmul.f32 %v3155, 1.442695
    %v3160 = vpow.pop %v3159
    %v3161 = vmul.f32 %v3156, 1.442695
    %v3162 = vpow.pop %v3161
    %v3163 = vmul.f32 %v3157, 1.442695
    %v3164 = vpow.pop %v3163
    %v3165 = vmul.f32 %v3158, 1.442695
    %v3166 = vpow.pop %v3165
    %v3167 = vadd.f32 %v3160, 1.0
    %v3168 = vadd.f32 %v3162, 1.0
    %v3169 = vadd.f32 %v3164, 1.0
    %v3170 = vadd.f32 %v3166, 1.0
    %v3171 = vrcp.pop %v3167
    %v3172 = vmul.f32 1.0, %v3171
    %v3173 = vrcp.pop %v3168
    %v3174 = vmul.f32 1.0, %v3173
    %v3175 = vrcp.pop %v3169
    %v3176 = vmul.f32 1.0, %v3175
    %v3177 = vrcp.pop %v3170
    %v3178 = vmul.f32 1.0, %v3177
    %v3179 = vtanh.pop %v3152
    %v3180 = vtanh.pop %v3154
    %v3181 = vmul.f32 %v3172, %v2956
    %v3182 = vmul.f32 %v3176, %v2957
    %v3183 = vmul.f32 %v3172, %v3179
    %v3184 = vmul.f32 %v3176, %v3180
    %3187 = vrot.lane.b32.xlu0 %v3183, 64
    %v3188 = vpop.permute.xlu0 %3187
    %3189 = vrot.lane.b32.xlu0 %v3184, 64
    %v3190 = vpop.permute.xlu0 %3189
    %v3193 = vadd.f32 %v3181, %v3188
    %v3194 = vadd.f32 %v3182, %v3190
    %v3195 = vtanh.pop %v3193
    %v3196 = vtanh.pop %v3194
    %v3197 = vmul.f32 %v3174, %v3195
    %v3198 = vmul.f32 %v3178, %v3196
    %s3199 = scalar_lea.vmem %s8, 768
    %v3200 = vld [vmem:[%s3199] sm:$0xff]
    %v3201 = vld [vmem:[%s3199 + $0x8] sm:$0xff]
    %v3202 = vld [vmem:[%s3199 + $0x10] sm:$0xff]
    %v3203 = vld [vmem:[%s3199 + $0x18] sm:$0xff]
    %v3204 = vld [vmem:[%s3199 + $0x20] sm:$0xff]
    %v3205 = vld [vmem:[%s3199 + $0x28] sm:$0xff]
    %v3206 = vld [vmem:[%s3199 + $0x30] sm:$0xff]
    %v3207 = vld [vmem:[%s3199 + $0x38] sm:$0xff]
    %v3208 = vld [vmem:[%s3199 + $0x40] sm:$0xff]
    %v3209 = vld [vmem:[%s3199 + $0x48] sm:$0xff]
    %v3210 = vld [vmem:[%s3199 + $0x50] sm:$0xff]
    %v3211 = vld [vmem:[%s3199 + $0x58] sm:$0xff]
    %v3212 = vld [vmem:[%s3199 + $0x60] sm:$0xff]
    %v3213 = vld [vmem:[%s3199 + $0x68] sm:$0xff]
    %v3214 = vld [vmem:[%s3199 + $0x70] sm:$0xff]
    %v3215 = vld [vmem:[%s3199 + $0x78] sm:$0xff]
    %3218 = vrot.lane.b32.xlu0 %v3197, 64
    %v3219 = vpop.permute.xlu0 %3218
    %3220 = vrot.lane.b32.xlu0 %v3198, 64
    %v3221 = vpop.permute.xlu0 %3220
    %v3222 = vsel %vm233, %v3219, 0
    %v3224 = vsel %vm233, %v3221, 0
    %3226 = vmatprep.subr.mxu0 0.0
    %3227 = vmatpush1.msra.mxu0 0.0
    %3228 = vmatprep.subr.mxu0 0.0
    %3229 = vmatpush1.msra.mxu0 0.0
    %3230 = vmatprep.subr.mxu0 0.0
    %3231 = vmatpush1.msra.mxu0 0.0
    %3232 = vmatprep.subr.mxu0 0.0
    %3233 = vmatpush1.msra.mxu0 0.0
    %3234 = vmatprep.subr.mxu0 0.0
    %3235 = vmatpush1.msra.mxu0 0.0
    %3236 = vmatprep.subr.mxu0 0.0
    %3237 = vmatpush1.msra.mxu0 0.0
    %3238 = vmatprep.subr.mxu0 0.0
    %3239 = vmatpush1.msra.mxu0 0.0
    %3240 = vmatprep.subr.mxu0 0.0
    %3241 = vmatpush1.msra.mxu0 0.0
    %3242 = vmatprep.subr.mxu0 %v3215
    %3243 = vmatpush1.msra.mxu0 %v3214
    %3244 = vmatprep.subr.mxu0 %v3213
    %3245 = vmatpush1.msra.mxu0 %v3212
    %3246 = vmatprep.subr.mxu0 %v3211
    %3247 = vmatpush1.msra.mxu0 %v3210
    %3248 = vmatprep.subr.mxu0 %v3209
    %3249 = vmatpush1.msra.mxu0 %v3208
    %3250 = vmatprep.subr.mxu0 %v3207
    %3251 = vmatpush1.msra.mxu0 %v3206
    %3252 = vmatprep.subr.mxu0 %v3205
    %3253 = vmatpush1.msra.mxu0 %v3204
    %3254 = vmatprep.subr.mxu0 %v3203
    %3255 = vmatpush1.msra.mxu0 %v3202
    %3256 = vmatprep.subr.mxu0 %v3201
    %3257 = vmatpush1.msra.mxu0 %v3200
    %3258 = vmatprep.subr.mxu0 0.0
    %3259 = vmatpush2.msra.mxu0 0.0
    %3260 = vmatprep.subr.mxu0 0.0
    %3261 = vmatpush2.msra.mxu0 0.0
    %3262 = vmatprep.subr.mxu0 0.0
    %3263 = vmatpush2.msra.mxu0 0.0
    %3264 = vmatprep.subr.mxu0 0.0
    %3265 = vmatpush2.msra.mxu0 0.0
    %3266 = vmatprep.subr.mxu0 0.0
    %3267 = vmatpush2.msra.mxu0 0.0
    %3268 = vmatprep.subr.mxu0 0.0
    %3269 = vmatpush2.msra.mxu0 0.0
    %3270 = vmatprep.subr.mxu0 0.0
    %3271 = vmatpush2.msra.mxu0 0.0
    %3272 = vmatprep.subr.mxu0 0.0
    %3273 = vmatpush2.msra.mxu0 0.0
    %3274 = vmatprep.subr.mxu0 0.0
    %3275 = vmatpush2.msra.mxu0 0.0
    %3276 = vmatprep.subr.mxu0 0.0
    %3277 = vmatpush2.msra.mxu0 0.0
    %3278 = vmatprep.subr.mxu0 0.0
    %3279 = vmatpush2.msra.mxu0 0.0
    %3280 = vmatprep.subr.mxu0 0.0
    %3281 = vmatpush2.msra.mxu0 0.0
    %3282 = vmatprep.subr.mxu0 0.0
    %3283 = vmatpush2.msra.mxu0 0.0
    %3284 = vmatprep.subr.mxu0 0.0
    %3285 = vmatpush2.msra.mxu0 0.0
    %3286 = vmatprep.subr.mxu0 0.0
    %3287 = vmatpush2.msra.mxu0 0.0
    %3288 = vmatprep.subr.mxu0 0.0
    %3289 = vmatpush2.msra.mxu0 0.0
    %3290 = vmatprep.mubr.f32.mxu0 0.0
    %3291 = vmatmul.mubr.f32.gmra.mxu0 %v3222
    %v3292 = vpop.f32.mrf.mxu0
    %v3293 = vadd.f32 0.0, %v3292
    %v3294 = vpop.f32.mrf.mxu0
    %v3295 = vadd.f32 0.0, %v3294
    %3296 = vmatprep.mubr.f32.mxu0 0.0
    %3297 = vmatmul.mubr.f32.gmra.mxu0 %v3224
    %v3298 = vpop.f32.mrf.mxu0
    %v3299 = vadd.f32 0.0, %v3298
    %v3300 = vpop.f32.mrf.mxu0
    %v3301 = vadd.f32 0.0, %v3300
    %3302 = vdwg.mxu0
    %v3303 = vadd.f32 %v3066, %v3293
    %v3304 = vadd.f32 %v3067, %v3295
    %v3305 = vadd.f32 %v3068, %v3299
    %v3306 = vadd.f32 %v3069, %v3301
    %v3307 = vld [vmem:[%s11] sm:$0xff]
    %v3308 = vld [vmem:[%s11 + $0x8] sm:$0xff]
    %v3309 = vld [vmem:[%s11 + $0x10] sm:$0xff]
    %v3310 = vld [vmem:[%s11 + $0x18] sm:$0xff]
    %v3311 = vld [vmem:[%s11 + $0x20] sm:$0xff]
    %v3312 = vld [vmem:[%s11 + $0x28] sm:$0xff]
    %v3313 = vld [vmem:[%s11 + $0x30] sm:$0xff]
    %v3314 = vld [vmem:[%s11 + $0x38] sm:$0xff]
    %v3315 = vld [vmem:[%s11 + $0x40] sm:$0xff]
    %v3316 = vld [vmem:[%s11 + $0x48] sm:$0xff]
    %v3317 = vld [vmem:[%s11 + $0x50] sm:$0xff]
    %v3318 = vld [vmem:[%s11 + $0x58] sm:$0xff]
    %v3319 = vld [vmem:[%s11 + $0x60] sm:$0xff]
    %v3320 = vld [vmem:[%s11 + $0x68] sm:$0xff]
    %v3321 = vld [vmem:[%s11 + $0x70] sm:$0xff]
    %v3322 = vld [vmem:[%s11 + $0x78] sm:$0xff]
    %v3323 = vld [vmem:[%s11 + $0x80] sm:$0xff]
    %v3324 = vld [vmem:[%s11 + $0x88] sm:$0xff]
    %v3325 = vld [vmem:[%s11 + $0x90] sm:$0xff]
    %v3326 = vld [vmem:[%s11 + $0x98] sm:$0xff]
    %v3327 = vld [vmem:[%s11 + $0xa0] sm:$0xff]
    %v3328 = vld [vmem:[%s11 + $0xa8] sm:$0xff]
    %v3329 = vld [vmem:[%s11 + $0xb0] sm:$0xff]
    %v3330 = vld [vmem:[%s11 + $0xb8] sm:$0xff]
    %v3331 = vld [vmem:[%s11 + $0xc0] sm:$0xff]
    %v3332 = vld [vmem:[%s12] sm:$0x1]
    %v3334 = vlaneseq
    %v3335 = vshrl.u32 %v3334, 7
    %v3336 = vsub.s32 0, %v3335
    %v3337 = vrot.slane %v3332, %v3336
    %vm3339 = vcmask 588800
    %v3341 = vsel %vm3339, %v3304, 0
    %v3344 = vsel %vm3339, %v3306, 0
    %3346 = vmatprep.subr.mxu0 0.0
    %3347 = vmatpush1.msra.mxu0 %v3322
    %3348 = vmatprep.subr.mxu0 0.0
    %3349 = vmatpush1.msra.mxu0 %v3321
    %3350 = vmatprep.subr.mxu0 0.0
    %3351 = vmatpush1.msra.mxu0 %v3320
    %3352 = vmatprep.subr.mxu0 0.0
    %3353 = vmatpush1.msra.mxu0 %v3319
    %3354 = vmatprep.subr.mxu0 0.0
    %3355 = vmatpush1.msra.mxu0 %v3318
    %3356 = vmatprep.subr.mxu0 0.0
    %3357 = vmatpush1.msra.mxu0 %v3317
    %3358 = vmatprep.subr.mxu0 0.0
    %3359 = vmatpush1.msra.mxu0 %v3316
    %3360 = vmatprep.subr.mxu0 0.0
    %3361 = vmatpush1.msra.mxu0 %v3315
    %3362 = vmatprep.subr.mxu0 0.0
    %3363 = vmatpush1.msra.mxu0 %v3314
    %3364 = vmatprep.subr.mxu0 0.0
    %3365 = vmatpush1.msra.mxu0 %v3313
    %3366 = vmatprep.subr.mxu0 0.0
    %3367 = vmatpush1.msra.mxu0 %v3312
    %3368 = vmatprep.subr.mxu0 0.0
    %3369 = vmatpush1.msra.mxu0 %v3311
    %3370 = vmatprep.subr.mxu0 0.0
    %3371 = vmatpush1.msra.mxu0 %v3310
    %3372 = vmatprep.subr.mxu0 0.0
    %3373 = vmatpush1.msra.mxu0 %v3309
    %3374 = vmatprep.subr.mxu0 0.0
    %3375 = vmatpush1.msra.mxu0 %v3308
    %3376 = vmatprep.subr.mxu0 0.0
    %3377 = vmatpush1.msra.mxu0 %v3307
    %3378 = vmatprep.subr.mxu0 0.0
    %3379 = vmatpush2.msra.mxu0 0.0
    %3380 = vmatprep.subr.mxu0 0.0
    %3381 = vmatpush2.msra.mxu0 0.0
    %3382 = vmatprep.subr.mxu0 0.0
    %3383 = vmatpush2.msra.mxu0 0.0
    %3384 = vmatprep.subr.mxu0 0.0
    %3385 = vmatpush2.msra.mxu0 0.0
    %3386 = vmatprep.subr.mxu0 0.0
    %3387 = vmatpush2.msra.mxu0 0.0
    %3388 = vmatprep.subr.mxu0 0.0
    %3389 = vmatpush2.msra.mxu0 0.0
    %3390 = vmatprep.subr.mxu0 0.0
    %3391 = vmatpush2.msra.mxu0 0.0
    %3392 = vmatprep.subr.mxu0 0.0
    %3393 = vmatpush2.msra.mxu0 %v3331
    %3394 = vmatprep.subr.mxu0 0.0
    %3395 = vmatpush2.msra.mxu0 %v3330
    %3396 = vmatprep.subr.mxu0 0.0
    %3397 = vmatpush2.msra.mxu0 %v3329
    %3398 = vmatprep.subr.mxu0 0.0
    %3399 = vmatpush2.msra.mxu0 %v3328
    %3400 = vmatprep.subr.mxu0 0.0
    %3401 = vmatpush2.msra.mxu0 %v3327
    %3402 = vmatprep.subr.mxu0 0.0
    %3403 = vmatpush2.msra.mxu0 %v3326
    %3404 = vmatprep.subr.mxu0 0.0
    %3405 = vmatpush2.msra.mxu0 %v3325
    %3406 = vmatprep.subr.mxu0 0.0
    %3407 = vmatpush2.msra.mxu0 %v3324
    %3408 = vmatprep.subr.mxu0 0.0
    %3409 = vmatpush2.msra.mxu0 %v3323
    %3410 = vmatprep.mubr.f32.mxu0 %v3341
    %3411 = vmatmul.mubr.f32.gmra.mxu0 %v3303
    %v3412 = vpop.f32.mrf.mxu0
    %v3413 = vadd.f32 %v3337, %v3412
    %v3414 = vpop.f32.mrf.mxu0
    %3415 = vmatprep.mubr.f32.mxu0 %v3344
    %3416 = vmatmul.mubr.f32.gmra.mxu0 %v3305
    %v3417 = vpop.f32.mrf.mxu0
    %v3418 = vadd.f32 %v3337, %v3417
    %v3419 = vpop.f32.mrf.mxu0
    %3420 = vdwg.mxu0
    %3421 = vst [vmem:[#allocation12] sm:$0xff] %v3413
    %3422 = vst [vmem:[#allocation12 + $0x8] sm:$0xff] %v3418
    // Predicated region
    $region66: #{tpu_custom_call.1} parent=1 // pred_check
      _
    $region67: #{tpu_custom_call.1} parent=1 // pred_check_branch
      %3424 = sbr.rel (0) target = $region69
    $region68: #{tpu_custom_call.1} parent=1 // pred_region
      %s3426 = ssub.s32 256, 256
      %3427 = vsyncadd [#allocation7], %s3426
      %s3428 = sshll.u32 [#allocation12], 4
      %s3429 = int_to_ptr.vmem [resolvable:$true] %s3428
      %3434 = dma.vmem_to_hbm [thread:$0]  %s3429, 256, %s13, [#allocation7], 128, 128, 8
    $region69: #{tpu_custom_call.1} parent=1 // pred_fallthru
      _
    // Predicated region
    $region70: #{tpu_custom_call.1} parent=1 // pred_check
      _
    $region71: #{tpu_custom_call.1} parent=1 // pred_check_branch
      %3436 = sbr.rel (0) target = $region73
    $region72: #{tpu_custom_call.1} parent=1 // pred_region
      %3437 = dma.done [#allocation7], 256
    $region73: #{tpu_custom_call.1} parent=1 // pred_fallthru
      _
    %3438 = vsyncpa [#allocation6], 1
    %3439 = vsyncpa [#allocation11], 1
    %3440 = vsyncpa [#allocation7], 1
    %3441 = vsyncpa [#allocation8], 1

</llo_original>
